<compile_context>
chip_gen: v5e
topology: v5e:2x2
jax: 0.10.0
libtpu: 0.0.40
codegen_flags: <defaults>
</compile_context>

<pallas_src>
import functools
from math import log2

import jax
import jax.numpy as jnp
from jax.experimental import pallas as pl
from jax.experimental.pallas import tpu as pltpu

LANE = 128


def _round_up(n, m):
    return ((n + m - 1) // m) * m


def _pad_last(a, target):
    pad = target - a.shape[-1]
    if pad == 0:
        return a
    cfg = [(0, 0)] * (a.ndim - 1) + [(0, pad)]
    return jnp.pad(a, cfg)


# -----------------------------------------------------------------------------
# In-kernel patch extraction (shared by both conv kernels)
# -----------------------------------------------------------------------------
def _extract_patches(xs, img_w, rtw):
    """xs: (RtW + 2*W + 2, Cp) flattened rows (zero rows act as top/bottom pad).

    Returns the (RtW, 9*Cp) im2col matrix, built entirely in VMEM.
    Tap (kh, kw) of output flat-row r lives at xs[r + kh*W + kw]; the left /
    right image borders (which alias the previous / next image row in the
    flat layout) are zeroed with a column mask.
    """
    col = jax.lax.broadcasted_iota(jnp.int32, (rtw, 1), 0) % img_w
    not_left = col != 0
    not_right = col != (img_w - 1)
    zero = jnp.zeros((), xs.dtype)
    pieces = []
    for kh in range(3):
        for kw in range(3):
            off = kh * img_w + kw
            p = xs[off:off + rtw, :]
            if kw == 0:
                p = jnp.where(not_left, p, zero)
            elif kw == 2:
                p = jnp.where(not_right, p, zero)
            pieces.append(p)
    return jnp.concatenate(pieces, axis=-1)          # (RtW, 9*Cp)


# -----------------------------------------------------------------------------
# Pallas kernels
# -----------------------------------------------------------------------------
def _conv3x3_plain_kernel(img_w, x_ref, w_ref, b_ref, o_ref):
    """Plain 3x3 same-conv + bias for one (batch, row-tile) grid cell.

    x_ref: (1, 1, L, Cp) f32, L = RtW + 2*W + 2
    w_ref: (9*Cp, Coutp) bf16, K ordered (kh, kw, ci)
    b_ref: (1, Coutp) f32
    o_ref: (1, RtW, Coutp) f32
    """
    rtw = o_ref.shape[1]
    xs = x_ref[0, 0].astype(jnp.bfloat16)
    patches = _extract_patches(xs, img_w, rtw)
    acc = jnp.dot(patches, w_ref[...], preferred_element_type=jnp.float32)
    o_ref[0] = acc + b_ref[...]


def _conv3x3_mod_kernel(img_w, x_ref, w_ref, s_ref, d_ref, n_ref, o_ref):
    """Style-modulated/demodulated 3x3 conv, fused noise add + LeakyReLU(0.2).

    Modulation = per-Cin scale of activations; demodulation = per-Cout scale
    of the accumulator (d precomputed outside the grid), so the base weights
    stay shared and the MXU does all the heavy lifting.
    x_ref: (1, 1, L, Cp) f32 ; w_ref: (9*Cp, Coutp) bf16
    s_ref: (1, 1, Cp) f32    (style + 1)
    d_ref: (1, 1, Coutp) f32 (demod scale)
    n_ref, o_ref: (1, RtW, Coutp) f32
    """
    rtw = o_ref.shape[1]
    xs = (x_ref[0, 0] * s_ref[0]).astype(jnp.bfloat16)     # modulate inputs
    patches = _extract_patches(xs, img_w, rtw)
    acc = jnp.dot(patches, w_ref[...], preferred_element_type=jnp.float32)
    y = acc * d_ref[0] + n_ref[0]
    o_ref[0] = jnp.where(y >= 0.0, y, 0.2 * y)             # LeakyReLU(0.2)


# -----------------------------------------------------------------------------
# Wrappers (row-tiling glue + pallas_call)
# -----------------------------------------------------------------------------
def _choose_row_tile(h, w, cp, budget_bytes=4 << 20):
    """Largest row tile (divisor of H, lane/sublane friendly) under a VMEM budget."""
    for rt in range(h, 0, -1):
        if h % rt:
            continue
        if rt < h and (rt * w) % 8:
            continue
        if (rt * w + 2 * w + 2) * cp * 4 <= budget_bytes:
            return rt
    return h


def _flatten_pad_tiles(x, row_tile):
    """x: (B, H, W, Cp) -> (B, nT, L, Cp) flattened row tiles with zero halos."""
    b, h, w, cp = x.shape
    hw = h * w
    halo = w + 1
    xf = x.reshape(b, hw, cp)
    xp = jnp.pad(xf, ((0, 0), (halo, halo), (0, 0)))
    nt = h // row_tile
    rtw = row_tile * w
    tile_len = rtw + 2 * halo
    if nt == 1:
        return xp.reshape(b, 1, tile_len, cp), nt, rtw
    tiles = [xp[:, t * rtw:t * rtw + tile_len, :] for t in range(nt)]
    return jnp.stack(tiles, axis=1), nt, rtw


def conv3x3_plain(x, w4, bias, row_tile=None):
    """x: (B,H,W,Cp) channel-padded NHWC; w4: (3,3,Cp,Coutp); bias: (Coutp,)."""
    b, h, wd, cp = x.shape
    coutp = w4.shape[-1]
    if row_tile is None:
        row_tile = _choose_row_tile(h, wd, cp)
    x_tiles, nt, rtw = _flatten_pad_tiles(x, row_tile)
    tile_len = x_tiles.shape[2]
    wflat = w4.reshape(9 * cp, coutp).astype(jnp.bfloat16)
    hw = h * wd
    out = pl.pallas_call(
        functools.partial(_conv3x3_plain_kernel, wd),
        out_shape=jax.ShapeDtypeStruct((b, hw, coutp), jnp.float32),
        grid=(b, nt),
        in_specs=[
            pl.BlockSpec((1, 1, tile_len, cp), lambda i, t: (i, t, 0, 0)),
            pl.BlockSpec((9 * cp, coutp), lambda i, t: (0, 0)),
            pl.BlockSpec((1, coutp), lambda i, t: (0, 0)),
        ],
        out_specs=pl.BlockSpec((1, rtw, coutp), lambda i, t: (i, t, 0)),
        compiler_params=pltpu.CompilerParams(
            dimension_semantics=("parallel", "parallel")),
    )(x_tiles, wflat, bias.reshape(1, coutp))
    return out.reshape(b, h, wd, coutp)


def conv3x3_mod(x, w4, style, noise, eps=1e-8, row_tile=None):
    """Per-sample modulated/demodulated 3x3 conv + noise + LeakyReLU(0.2).

    x: (B,H,W,Cp); w4: (3,3,Cp,Coutp) f32; style: (B,Cp); noise: (B,H,W,Coutp).
    """
    b, h, wd, cp = x.shape
    coutp = w4.shape[-1]
    if row_tile is None:
        row_tile = _choose_row_tile(h, wd, cp)
    x_tiles, nt, rtw = _flatten_pad_tiles(x, row_tile)
    tile_len = x_tiles.shape[2]
    wflat = w4.reshape(9 * cp, coutp).astype(jnp.bfloat16)

    # Demodulation factor, once per sample (outside the grid, f32):
    #   d[co] = rsqrt(sum_{k,ci} (w*(s+1))^2 + eps) = rsqrt((s+1)^2 @ sum_k w^2 + eps)
    s1 = style + 1.0                                        # (B, Cp)
    wsq = jnp.sum(w4 * w4, axis=(0, 1))                     # (Cp, Coutp)
    d = jax.lax.rsqrt((s1 * s1) @ wsq + eps)                # (B, Coutp)

    hw = h * wd
    noise_flat = noise.reshape(b, hw, coutp)
    out = pl.pallas_call(
        functools.partial(_conv3x3_mod_kernel, wd),
        out_shape=jax.ShapeDtypeStruct((b, hw, coutp), jnp.float32),
        grid=(b, nt),
        in_specs=[
            pl.BlockSpec((1, 1, tile_len, cp), lambda i, t: (i, t, 0, 0)),
            pl.BlockSpec((9 * cp, coutp), lambda i, t: (0, 0)),
            pl.BlockSpec((1, 1, cp), lambda i, t: (i, 0, 0)),
            pl.BlockSpec((1, 1, coutp), lambda i, t: (i, 0, 0)),
            pl.BlockSpec((1, rtw, coutp), lambda i, t: (i, t, 0)),
        ],
        out_specs=pl.BlockSpec((1, rtw, coutp), lambda i, t: (i, t, 0)),
        compiler_params=pltpu.CompilerParams(
            dimension_semantics=("parallel", "parallel")),
    )(x_tiles, wflat, s1.reshape(b, 1, cp), d.reshape(b, 1, coutp), noise_flat)
    return out.reshape(b, h, wd, coutp)


# -----------------------------------------------------------------------------
# Plain-JAX glue: exact 2x bilinear upsample (align_corners=False)
# -----------------------------------------------------------------------------
def upsample2x_bilinear(x):
    """nn.Upsample(scale_factor=2, mode='bilinear', align_corners=False), NHWC."""
    def up_axis(a, axis):
        n = a.shape[axis]
        idx = jnp.arange(n)
        prev = jnp.take(a, jnp.maximum(idx - 1, 0), axis=axis)
        nxt = jnp.take(a, jnp.minimum(idx + 1, n - 1), axis=axis)
        even = 0.75 * a + 0.25 * prev
        odd = 0.75 * a + 0.25 * nxt
        stacked = jnp.stack([even, odd], axis=axis + 1)
        shp = list(a.shape)
        shp[axis] = 2 * n
        return stacked.reshape(shp)
    return up_axis(up_axis(x, 1), 2)


# -----------------------------------------------------------------------------
# Parameter init (matches the PyTorch shapes / init scheme; conv weights are
# stored channel-padded to multiples of 128 with zero rows/cols)
# -----------------------------------------------------------------------------
def _kaiming_normal(key, shape, fan_in):
    std = (2.0 / fan_in) ** 0.5
    return std * jax.random.normal(key, shape, jnp.float32)


def _bias_uniform(key, shape, fan_in):
    bound = 1.0 / (fan_in ** 0.5)
    return jax.random.uniform(key, shape, jnp.float32, -bound, bound)


def _pad_conv_w(w4, cinp, coutp):
    return jnp.pad(w4, ((0, 0), (0, 0),
                        (0, cinp - w4.shape[2]), (0, coutp - w4.shape[3])))


def init_generator_params(key, image_size, latent_dim, network_capacity=16,
                          fmap_max=512):
    num_layers = int(log2(image_size) - 1)
    filters = [network_capacity * 2 ** (i + 1) for i in range(num_layers)][::-1]
    filters = [min(f, fmap_max) for f in filters]
    init_channels = filters[0]
    filters = [init_channels] + filters
    in_out = list(zip(filters[:-1], filters[1:]))

    keys = iter(jax.random.split(key, 16 + 16 * num_layers))
    p = {"num_layers": num_layers, "init_channels": init_channels}

    c0 = init_channels
    c0p = _round_up(c0, LANE)
    p["initial_block"] = jax.random.normal(next(keys), (1, c0, 4, 4), jnp.float32)
    w0 = _kaiming_normal(next(keys), (3, 3, c0, c0), fan_in=c0 * 9)
    p["initial_conv_w"] = _pad_conv_w(w0, c0p, c0p)
    p["initial_conv_b"] = _pad_last(_bias_uniform(next(keys), (c0,), c0 * 9), c0p)

    blocks = []
    for ind, (cin, cout) in enumerate(in_out):
        cinp, coutp = _round_up(cin, LANE), _round_up(cout, LANE)
        blk = {"upsample": ind != 0, "cin": cin, "cout": cout}
        blk["style1_w"] = _kaiming_normal(next(keys), (latent_dim, cin), latent_dim)
        blk["style1_b"] = _bias_uniform(next(keys), (cin,), latent_dim)
        blk["style2_w"] = _kaiming_normal(next(keys), (latent_dim, cout), latent_dim)
        blk["style2_b"] = _bias_uniform(next(keys), (cout,), latent_dim)
        # to_noise1 / to_noise2 are zero-initialized in the PyTorch module.
        blk["noise1_w"] = jnp.zeros((1, cout), jnp.float32)
        blk["noise1_b"] = jnp.zeros((cout,), jnp.float32)
        blk["noise2_w"] = jnp.zeros((1, cout), jnp.float32)
        blk["noise2_b"] = jnp.zeros((cout,), jnp.float32)
        blk["conv1_w"] = _pad_conv_w(
            _kaiming_normal(next(keys), (3, 3, cin, cout), cin * 9), cinp, coutp)
        blk["conv2_w"] = _pad_conv_w(
            _kaiming_normal(next(keys), (3, 3, cout, cout), cout * 9), coutp, coutp)
        blk["tofeat_w"] = _pad_conv_w(
            _kaiming_normal(next(keys), (3, 3, cout, 18), cout * 9), coutp, LANE)
        blk["tofeat_b"] = _pad_last(_bias_uniform(next(keys), (18,), cout * 9), LANE)
        blocks.append(blk)
    p["blocks"] = blocks
    return p


# -----------------------------------------------------------------------------
# Generator forward (Pallas path)
# -----------------------------------------------------------------------------
def generator_forward(params, styles, input_noise):
    """styles: (B, num_layers, latent_dim); input_noise: (B, S, S, 1).
    Returns a list of (B, 18, H, W) feature maps (NCHW) — one per block."""
    b = styles.shape[0]
    c0 = params["init_channels"]
    c0p = _round_up(c0, LANE)

    x = jnp.broadcast_to(params["initial_block"], (b, c0, 4, 4))
    x = _pad_last(jnp.transpose(x, (0, 2, 3, 1)), c0p)       # NCHW -> NHWC, pad C
    x = conv3x3_plain(x, params["initial_conv_w"], params["initial_conv_b"])

    rgb_list = []
    for ind, blk in enumerate(params["blocks"]):
        style = styles[:, ind, :]
        cin, cout = blk["cin"], blk["cout"]
        cinp, coutp = _round_up(cin, LANE), _round_up(cout, LANE)
        if blk["upsample"]:
            x = upsample2x_bilinear(x)
        h, w = x.shape[1], x.shape[2]

        inz = input_noise[:, :h, :w, :]                       # (B, H, W, 1)
        # to_noise Linear then permute(0,3,2,1) == spatial transpose in NHWC
        noise1 = _pad_last(jnp.transpose(inz @ blk["noise1_w"] + blk["noise1_b"],
                                         (0, 2, 1, 3)), coutp)
        noise2 = _pad_last(jnp.transpose(inz @ blk["noise2_w"] + blk["noise2_b"],
                                         (0, 2, 1, 3)), coutp)

        style1 = _pad_last(style @ blk["style1_w"] + blk["style1_b"], cinp)
        x = conv3x3_mod(x, blk["conv1_w"], style1, noise1)
        style2 = _pad_last(style @ blk["style2_w"] + blk["style2_b"], coutp)
        x = conv3x3_mod(x, blk["conv2_w"], style2, noise2)

        feat = conv3x3_plain(x, blk["tofeat_w"], blk["tofeat_b"])[..., :18]
        rgb_list.append(jnp.transpose(feat, (0, 3, 1, 2)))    # NHWC -> NCHW
    return rgb_list


# -----------------------------------------------------------------------------
# Pure-JAX references (for correctness checks only)
# -----------------------------------------------------------------------------
def _ref_conv3x3(x, w4, bias):
    y = jax.lax.conv_general_dilated(
        x, w4, window_strides=(1, 1), padding="SAME",
        dimension_numbers=("NHWC", "HWIO", "NHWC"))
    return y + bias


def _ref_conv3x3_mod(x, w4, style, noise, eps=1e-8):
    def one(xb, sb, nb):
        wmod = w4 * (sb + 1.0)[None, None, :, None]
        d = jax.lax.rsqrt(jnp.sum(wmod * wmod, axis=(0, 1, 2)) + eps)
        wmod = wmod * d
        y = jax.lax.conv_general_dilated(
            xb[None], wmod, window_strides=(1, 1), padding="SAME",
            dimension_numbers=("NHWC", "HWIO", "NHWC"))[0]
        y = y + nb
        return jnp.where(y >= 0.0, y, 0.2 * y)
    return jax.vmap(one)(x, style, noise)


def generator_forward_ref(params, styles, input_noise):
    b = styles.shape[0]
    c0 = params["init_channels"]
    x = jnp.broadcast_to(params["initial_block"], (b, c0, 4, 4))
    x = jnp.transpose(x, (0, 2, 3, 1))
    x = _ref_conv3x3(x, params["initial_conv_w"][:, :, :c0, :c0],
                     params["initial_conv_b"][:c0])
    outs = []
    for ind, blk in enumerate(params["blocks"]):
        style = styles[:, ind, :]
        cin, cout = blk["cin"], blk["cout"]
        if blk["upsample"]:
            x = upsample2x_bilinear(x)
        h, w = x.shape[1], x.shape[2]
        inz = input_noise[:, :h, :w, :]
        noise1 = jnp.transpose(inz @ blk["noise1_w"] + blk["noise1_b"], (0, 2, 1, 3))
        noise2 = jnp.transpose(inz @ blk["noise2_w"] + blk["noise2_b"], (0, 2, 1, 3))
        s1 = style @ blk["style1_w"] + blk["style1_b"]
        x = _ref_conv3x3_mod(x, blk["conv1_w"][:, :, :cin, :cout], s1, noise1)
        s2 = style @ blk["style2_w"] + blk["style2_b"]
        x = _ref_conv3x3_mod(x, blk["conv2_w"][:, :, :cout, :cout], s2, noise2)
        feat = _ref_conv3x3(x, blk["tofeat_w"][:, :, :cout, :18], blk["tofeat_b"][:18])
        outs.append(jnp.transpose(feat, (0, 3, 1, 2)))
    return outs


def _relerr(a, b):
    a = a.astype(jnp.float32)
    b = b.astype(jnp.float32)
    num = jnp.sqrt(jnp.sum((a - b) ** 2))
    den = jnp.sqrt(jnp.sum(b ** 2)) + 1e-12
    return float(num / den)


# -----------------------------------------------------------------------------
if __name__ == "__main__":
    image_size = 16
    latent_dim = 32
    network_capacity = 4
    batch = 2

    key = jax.random.PRNGKey(0)
    kp, ks, kn, kx, kw1, kw2, ksy, knz = jax.random.split(key, 8)

    # --- unit checks of the two conv kernels (incl. forced row tiling) -------
    h = wd = 16
    cp = coutp = LANE
    x_t = jax.random.normal(kx, (batch, h, wd, cp), jnp.float32)
    w_plain = 0.05 * jax.random.normal(kw1, (3, 3, cp, coutp), jnp.float32)
    b_plain = 0.1 * jax.random.normal(kw2, (coutp,), jnp.float32)
    ref_p = _ref_conv3x3(x_t, w_plain, b_plain)
    for rt in (16, 4):                      # rt=4 exercises the row-tile grid axis
        got = jax.block_until_ready(
            jax.jit(functools.partial(conv3x3_plain, row_tile=rt))(x_t, w_plain, b_plain))
        err = _relerr(got, ref_p)
        assert err < 2e-2, ("plain conv mismatch", rt, err)

    w_mod = 0.05 * jax.random.normal(kw1, (3, 3, cp, coutp), jnp.float32)
    sty = jax.random.normal(ksy, (batch, cp), jnp.float32)
    nz = 0.1 * jax.random.normal(knz, (batch, h, wd, coutp), jnp.float32)
    ref_m = _ref_conv3x3_mod(x_t, w_mod, sty, nz)
    for rt in (16, 8):
        got = jax.block_until_ready(
            jax.jit(functools.partial(conv3x3_mod, row_tile=rt))(x_t, w_mod, sty, nz))
        err = _relerr(got, ref_m)
        assert err < 2e-2, ("mod conv mismatch", rt, err)

    # --- full generator forward ----------------------------------------------
    params = init_generator_params(kp, image_size, latent_dim, network_capacity)
    num_layers = params["num_layers"]                 # 3 for image_size=16

    styles = jax.random.normal(ks, (batch, num_layers, latent_dim), jnp.float32)
    input_noise = jax.random.uniform(kn, (batch, image_size, image_size, 1),
                                     jnp.float32)

    fwd = jax.jit(lambda s, n: generator_forward(params, s, n))
    outs = jax.block_until_ready(fwd(styles, input_noise))

    expected = [(batch, 18, 4, 4), (batch, 18, 8, 8), (batch, 18, 16, 16)]
    got_shapes = [tuple(o.shape) for o in outs]
    assert got_shapes == expected, (got_shapes, expected)

    refs = generator_forward_ref(params, styles, input_noise)
    for o, r in zip(outs, refs):
        assert bool(jnp.all(jnp.isfinite(o)))
        err = _relerr(o, r)
        assert err < 5e-2, ("generator output mismatch", err)

    print("KERNEL_OK")
</pallas_src>

<mosaic_0001>
module attributes {stable_mosaic.version = 11 : i64} {
  func.func @_conv3x3_plain_kernel(%arg0: i32, %arg1: i32, %arg2: memref<1x1x290x128xf32, #tpu.memory_space<vmem>>, %arg3: memref<1152x128xbf16, #tpu.memory_space<vmem>>, %arg4: memref<1x128xf32, #tpu.memory_space<vmem>>, %arg5: memref<1x256x128xf32, #tpu.memory_space<vmem>>) attributes {dimension_semantics = [#tpu.dimension_semantics<parallel>, #tpu.dimension_semantics<parallel>], iteration_bounds = array<i64: 2, 1>, scalar_prefetch = 0 : i64, scratch_operands = 0 : i64, tpu.core_type = #tpu.core_type<tc>, window_params = [{transform_indices = @transform_0, window_bounds = array<i64: 1, 1, 290, 128>}, {pipeline_mode = #tpu.pipeline_mode<synchronous>, transform_indices = @transform_1, window_bounds = array<i64: 1152, 128>}, {pipeline_mode = #tpu.pipeline_mode<synchronous>, transform_indices = @transform_2, window_bounds = array<i64: 1, 128>}, {transform_indices = @transform_3, window_bounds = array<i64: 1, 256, 128>}]} {
    %c0 = arith.constant 0 : index
    %c0_0 = arith.constant 0 : index
    %c0_1 = arith.constant 0 : index
    %c0_2 = arith.constant 0 : index
    %0 = vector.load %arg2[%c0, %c0_0, %c0_1, %c0_2] : memref<1x1x290x128xf32, #tpu.memory_space<vmem>>, vector<1x1x290x128xf32>
    %1 = vector.shape_cast %0 : vector<1x1x290x128xf32> to vector<290x128xf32>
    %2 = arith.truncf %1 : vector<290x128xf32> to vector<290x128xbf16>
    %3 = tpu.iota {dimensions = array<i32: 0>} : vector<256x1xi32>
    %c16_i32 = arith.constant 16 : i32
    %c0_i32 = arith.constant 0 : i32
    %4 = arith.cmpi eq, %c16_i32, %c0_i32 : i32
    %c1_i32 = arith.constant 1 : i32
    %5 = arith.select %4, %c1_i32, %c16_i32 : i32
    %6 = vector.broadcast %5 : i32 to vector<256x1xi32>
    %7 = arith.remsi %3, %6 : vector<256x1xi32>
    %c0_i32_3 = arith.constant 0 : i32
    %8 = vector.broadcast %c0_i32_3 : i32 to vector<256x1xi32>
    %9 = arith.cmpi ne, %7, %8 : vector<256x1xi32>
    %c0_i32_4 = arith.constant 0 : i32
    %10 = vector.broadcast %c0_i32_4 : i32 to vector<256x1xi32>
    %11 = arith.cmpi slt, %7, %10 : vector<256x1xi32>
    %c0_i32_5 = arith.constant 0 : i32
    %12 = arith.cmpi slt, %5, %c0_i32_5 : i32
    %13 = vector.broadcast %12 : i1 to vector<256x1xi1>
    %14 = vector.broadcast %13 : vector<256x1xi1> to vector<256x1xi1>
    %15 = arith.xori %11, %14 : vector<256x1xi1>
    %16 = arith.andi %15, %9 : vector<256x1xi1>
    %17 = vector.broadcast %5 : i32 to vector<256x1xi32>
    %18 = arith.addi %7, %17 : vector<256x1xi32>
    %19 = arith.select %16, %18, %7 : vector<256x1xi1>, vector<256x1xi32>
    %c0_i32_6 = arith.constant 0 : i32
    %20 = vector.broadcast %c0_i32_6 : i32 to vector<256x1xi32>
    %21 = arith.cmpi ne, %19, %20 : vector<256x1xi32>
    %c15_i32 = arith.constant 15 : i32
    %22 = vector.broadcast %c15_i32 : i32 to vector<256x1xi32>
    %23 = arith.cmpi ne, %19, %22 : vector<256x1xi32>
    %24 = vector.extract_strided_slice %2 {offsets = [0, 0], sizes = [256, 128], strides = [1, 1]} : vector<290x128xbf16> to vector<256x128xbf16>
    %cst = arith.constant 0.000000e+00 : bf16
    %25 = vector.shape_cast %21 : vector<256x1xi1> to vector<256x1xi1>
    %26 = vector.broadcast %25 : vector<256x1xi1> to vector<256x128xi1>
    %27 = vector.broadcast %cst : bf16 to vector<256x128xbf16>
    %28 = arith.select %26, %24, %27 : vector<256x128xi1>, vector<256x128xbf16>
    %29 = vector.extract_strided_slice %2 {offsets = [1, 0], sizes = [256, 128], strides = [1, 1]} : vector<290x128xbf16> to vector<256x128xbf16>
    %30 = vector.extract_strided_slice %2 {offsets = [2, 0], sizes = [256, 128], strides = [1, 1]} : vector<290x128xbf16> to vector<256x128xbf16>
    %cst_7 = arith.constant 0.000000e+00 : bf16
    %31 = vector.shape_cast %23 : vector<256x1xi1> to vector<256x1xi1>
    %32 = vector.broadcast %31 : vector<256x1xi1> to vector<256x128xi1>
    %33 = vector.broadcast %cst_7 : bf16 to vector<256x128xbf16>
    %34 = arith.select %32, %30, %33 : vector<256x128xi1>, vector<256x128xbf16>
    %35 = vector.extract_strided_slice %2 {offsets = [16, 0], sizes = [256, 128], strides = [1, 1]} : vector<290x128xbf16> to vector<256x128xbf16>
    %cst_8 = arith.constant 0.000000e+00 : bf16
    %36 = vector.shape_cast %21 : vector<256x1xi1> to vector<256x1xi1>
    %37 = vector.broadcast %36 : vector<256x1xi1> to vector<256x128xi1>
    %38 = vector.broadcast %cst_8 : bf16 to vector<256x128xbf16>
    %39 = arith.select %37, %35, %38 : vector<256x128xi1>, vector<256x128xbf16>
    %40 = vector.extract_strided_slice %2 {offsets = [17, 0], sizes = [256, 128], strides = [1, 1]} : vector<290x128xbf16> to vector<256x128xbf16>
    %41 = vector.extract_strided_slice %2 {offsets = [18, 0], sizes = [256, 128], strides = [1, 1]} : vector<290x128xbf16> to vector<256x128xbf16>
    %cst_9 = arith.constant 0.000000e+00 : bf16
    %42 = vector.shape_cast %23 : vector<256x1xi1> to vector<256x1xi1>
    %43 = vector.broadcast %42 : vector<256x1xi1> to vector<256x128xi1>
    %44 = vector.broadcast %cst_9 : bf16 to vector<256x128xbf16>
    %45 = arith.select %43, %41, %44 : vector<256x128xi1>, vector<256x128xbf16>
    %46 = vector.extract_strided_slice %2 {offsets = [32, 0], sizes = [256, 128], strides = [1, 1]} : vector<290x128xbf16> to vector<256x128xbf16>
    %cst_10 = arith.constant 0.000000e+00 : bf16
    %47 = vector.shape_cast %21 : vector<256x1xi1> to vector<256x1xi1>
    %48 = vector.broadcast %47 : vector<256x1xi1> to vector<256x128xi1>
    %49 = vector.broadcast %cst_10 : bf16 to vector<256x128xbf16>
    %50 = arith.select %48, %46, %49 : vector<256x128xi1>, vector<256x128xbf16>
    %51 = vector.extract_strided_slice %2 {offsets = [33, 0], sizes = [256, 128], strides = [1, 1]} : vector<290x128xbf16> to vector<256x128xbf16>
    %52 = vector.extract_strided_slice %2 {offsets = [34, 0], sizes = [256, 128], strides = [1, 1]} : vector<290x128xbf16> to vector<256x128xbf16>
    %cst_11 = arith.constant 0.000000e+00 : bf16
    %53 = vector.shape_cast %23 : vector<256x1xi1> to vector<256x1xi1>
    %54 = vector.broadcast %53 : vector<256x1xi1> to vector<256x128xi1>
    %55 = vector.broadcast %cst_11 : bf16 to vector<256x128xbf16>
    %56 = arith.select %54, %52, %55 : vector<256x128xi1>, vector<256x128xbf16>
    %57 = tpu.concatenate %28, %29, %34, %39, %40, %45, %50, %51, %56 in 1 : vector<256x128xbf16>, vector<256x128xbf16>, vector<256x128xbf16>, vector<256x128xbf16>, vector<256x128xbf16>, vector<256x128xbf16>, vector<256x128xbf16>, vector<256x128xbf16>, vector<256x128xbf16> -> vector<256x1152xbf16>
    %c0_12 = arith.constant 0 : index
    %c0_13 = arith.constant 0 : index
    %58 = vector.load %arg3[%c0_12, %c0_13] : memref<1152x128xbf16, #tpu.memory_space<vmem>>, vector<1152x128xbf16>
    %cst_14 = arith.constant dense<0.000000e+00> : vector<256x128xf32>
    %59 = tpu.matmul %57, %58, %cst_14 {dimension_numbers = #tpu.dot_dimension_numbers<[1], [0], [0], [1], [0, 0, 1, 1], [], []>} : vector<256x1152xbf16>, vector<1152x128xbf16>, vector<256x128xf32> -> vector<256x128xf32>
    %c0_15 = arith.constant 0 : index
    %c0_16 = arith.constant 0 : index
    %60 = vector.load %arg4[%c0_15, %c0_16] : memref<1x128xf32, #tpu.memory_space<vmem>>, vector<1x128xf32>
    %61 = vector.broadcast %60 : vector<1x128xf32> to vector<256x128xf32>
    %62 = arith.addf %59, %61 : vector<256x128xf32>
    %c0_17 = arith.constant 0 : index
    %c0_18 = arith.constant 0 : index
    %c0_19 = arith.constant 0 : index
    %63 = vector.load %arg5[%c0_17, %c0_18, %c0_19] : memref<1x256x128xf32, #tpu.memory_space<vmem>>, vector<1x256x128xf32>
    %64 = vector.shape_cast %63 : vector<1x256x128xf32> to vector<256x128xf32>
    %65 = vector.shape_cast %62 : vector<256x128xf32> to vector<1x256x128xf32>
    tpu.vector_store %arg5[%c0_17, %c0_18, %c0_19], %65 {strides = array<i32>} : memref<1x256x128xf32, #tpu.memory_space<vmem>>, vector<1x256x128xf32>,
    return
  }
  func.func @transform_0(%arg0: i32, %arg1: i32) -> (i32, i32, i32, i32) {
    %c0_i32 = arith.constant 0 : i32
    %c0_i32_0 = arith.constant 0 : i32
    %c0_i32_1 = arith.constant 0 : i32
    return %arg0, %arg1, %c0_i32, %c0_i32_0 : i32, i32, i32, i32
  }
  func.func @transform_1(%arg0: i32, %arg1: i32) -> (i32, i32) {
    %c0_i32 = arith.constant 0 : i32
    %c0_i32_0 = arith.constant 0 : i32
    %c0_i32_1 = arith.constant 0 : i32
    return %c0_i32, %c0_i32_0 : i32, i32
  }
  func.func @transform_2(%arg0: i32, %arg1: i32) -> (i32, i32) {
    %c0_i32 = arith.constant 0 : i32
    %c0_i32_0 = arith.constant 0 : i32
    %c0_i32_1 = arith.constant 0 : i32
    return %c0_i32, %c0_i32_0 : i32, i32
  }
  func.func @transform_3(%arg0: i32, %arg1: i32) -> (i32, i32, i32) {
    %c0_i32 = arith.constant 0 : i32
    %c0_i32_0 = arith.constant 0 : i32
    return %arg0, %arg1, %c0_i32 : i32, i32, i32
  }
}

</mosaic_0001>

<llo_original>
// kernel: conv3x3_plain.1
$region0: #{conv3x3_plain.1}
  #allocation0 [shape = 'u32[]', space=smem, size = 0x4, offset = 0x4, fixed_abs, tag = 'smem constant byte address 0x4 - core index']
  #allocation1 [shape = 'u32[72,128]{1,0:T(1,128)}', space=vmem, size = 0x9000, scoped, tag = 'internal scratch']
  %s0 = inlined_call_operand.vmem [shape: f32[2,1,290,128], index: 0, kind: input, shape index: {}]
  %s1 = inlined_call_operand.vmem [shape: bf16[1152,128], index: 1, kind: input, shape index: {}]
  %s2 = inlined_call_operand.vmem [shape: f32[1,128], index: 2, kind: input, shape index: {}]
  %s3 = inlined_call_operand.hbm [shape: f32[2,256,128], index: 3, kind: output, shape index: {}]
  %s4 = sld [smem:[#allocation0]]
  $region45: #{conv3x3_plain.1} parent=0
    _
  %s6 = ssub.s32 1, %s4
  %s7 = scalar_select 0, %s6, %s4
  $region1: #{conv3x3_plain.1} parent=0
    #allocation2 [shape = 'u8[262144]{0}', space=vmem, size = 0x40000, scoped, tag = 'output window, operand 0']
    #allocation3 [shape = 's32[2]{0}', space=sflag, size = 0x8, scoped, tag = 'scoped memory for conv3x3_plain.1']
    %8 = vsyncpa [#allocation3], 0
    %s9 = scalar_lea.sflag [#allocation3], 1
    %10 = vsyncpa %s9, 0
    loop: start=0, step=1, limit=4
    $region2: #{conv3x3_plain.1} parent=1 // loop_pre_header
      _
    $region3: #{conv3x3_plain.1} parent=1 // loop_header
      %s12 = sphi 0, %s16
      %p13 = scmp.ge.s32.totalorder %s12, 4
      %s19 = sphi 0, %s31
      %s20 = sphi 0, %s27
      %s21 = sphi 0, %s19
      %s22 = sphi 0, %s20
      %s23 = sphi 0, %s21
      %s24 = sphi 0, %s22
      %s36 = sphi 0, %s38
      %s39 = sphi 0, %s36
      %s40 = sphi 0, %s39
      %s56 = sphi 0, %s40
      %s60 = sphi 0, %s60
      %s62 = sphi 0, %s60
      %s63 = sphi 0, %s62
      %s77 = sphi 0, %s63
      %s81 = sphi 0, %s81
      %s83 = sphi 0, %s81
      %s84 = sphi 0, %s83
      %s98 = sphi 0, %s84
      %s106 = sphi 0, %s108
      %s109 = sphi 0, %s106
      %s110 = sphi 0, %s109
      %s126 = sphi 0, %s110
    $region4: #{conv3x3_plain.1} parent=1 // loop_header_branch
      %15 = sbr.rel (%p13) target = $region8
    $region5: #{conv3x3_plain.1} parent=1 // loop_body
      %s17 = ssub.s32 %s12, 1
      %s18 = ssub.s32 %s12, 2
      %s25 = sadd.s32 1, %s20
      %p26 = scmp.ge.s32.totalorder %s25, 1
      %s27 = scalar_select %p26, 0, %s25
      %s28 = sadd.s32 1, %s19
      %s29 = scalar_select %p26, %s28, %s19
      %p30 = scmp.ge.s32.totalorder %s29, 2
      %s31 = scalar_select %p30, 0, %s29
      %s32 = ssub.s32 %s19, %s31
      %s33 = ssub.s32 %s20, %s27
      %s34 = sor.u32 %s32, %s33
      %p35 = scmp.eq.s32.totalorder %s34, 0
      %s37 = sadd.s32 %s36, 1
      %s38 = scalar_select %p35, %s36, %s37
      %p41 = pneg %p35
      %p42 = scmp.eq.s32.totalorder %s12, 1
      %p43 = por %p41, %p42
      %p44 = scmp.ne.s32.totalorder %s36, %s39
      %p45 = scmp.eq.s32.totalorder %s12, 0
      %p46 = por %p44, %p45
      %p47 = scmp.ne.s32.totalorder %s36, %s39
      %p48 = scmp.eq.s32.totalorder %s17, 1
      %p49 = por %p47, %p48
      %p50 = scmp.ne.s32.totalorder %s39, %s40
      %p51 = scmp.eq.s32.totalorder %s17, 0
      %p52 = por %p50, %p51
      %p53 = scmp.ne.s32.totalorder %s39, %s40
      %p54 = scmp.eq.s32.totalorder %s18, 1
      %p55 = por %p53, %p54
      %p57 = scmp.ne.s32.totalorder %s40, %s56
      %p58 = scmp.eq.s32.totalorder %s18, 0
      %p59 = por %p57, %p58
      %s61 = sadd.s32 %s60, 1
      %p64 = scmp.eq.s32.totalorder %s12, 1
      %p65 = scmp.ne.s32.totalorder %s60, %s62
      %p66 = scmp.eq.s32.totalorder %s12, 0
      %p67 = por %p65, %p66
      %p68 = scmp.ne.s32.totalorder %s60, %s62
      %p69 = scmp.eq.s32.totalorder %s17, 1
      %p70 = por %p68, %p69
      %p71 = scmp.ne.s32.totalorder %s62, %s63
      %p72 = scmp.eq.s32.totalorder %s17, 0
      %p73 = por %p71, %p72
      %p74 = scmp.ne.s32.totalorder %s62, %s63
      %p75 = scmp.eq.s32.totalorder %s18, 1
      %p76 = por %p74, %p75
      %p78 = scmp.ne.s32.totalorder %s63, %s77
      %p79 = scmp.eq.s32.totalorder %s18, 0
      %p80 = por %p78, %p79
      %s82 = sadd.s32 %s81, 1
      %p85 = scmp.eq.s32.totalorder %s12, 1
      %p86 = scmp.ne.s32.totalorder %s81, %s83
      %p87 = scmp.eq.s32.totalorder %s12, 0
      %p88 = por %p86, %p87
      %p89 = scmp.ne.s32.totalorder %s81, %s83
      %p90 = scmp.eq.s32.totalorder %s17, 1
      %p91 = por %p89, %p90
      %p92 = scmp.ne.s32.totalorder %s83, %s84
      %p93 = scmp.eq.s32.totalorder %s17, 0
      %p94 = por %p92, %p93
      %p95 = scmp.ne.s32.totalorder %s83, %s84
      %p96 = scmp.eq.s32.totalorder %s18, 1
      %p97 = por %p95, %p96
      %p99 = scmp.ne.s32.totalorder %s84, %s98
      %p100 = scmp.eq.s32.totalorder %s18, 0
      %p101 = por %p99, %p100
      %s102 = ssub.s32 %s19, %s31
      %s103 = ssub.s32 %s20, %s27
      %s104 = sor.u32 %s102, %s103
      %p105 = scmp.eq.s32.totalorder %s104, 0
      %s107 = sadd.s32 %s106, 1
      %s108 = scalar_select %p105, %s106, %s107
      %p111 = pneg %p105
      %p112 = scmp.eq.s32.totalorder %s12, 1
      %p113 = por %p111, %p112
      %p114 = scmp.ne.s32.totalorder %s106, %s109
      %p115 = scmp.eq.s32.totalorder %s12, 0
      %p116 = por %p114, %p115
      %p117 = scmp.ne.s32.totalorder %s106, %s109
      %p118 = scmp.eq.s32.totalorder %s17, 1
      %p119 = por %p117, %p118
      %p120 = scmp.ne.s32.totalorder %s109, %s110
      %p121 = scmp.eq.s32.totalorder %s17, 0
      %p122 = por %p120, %p121
      %p123 = scmp.ne.s32.totalorder %s109, %s110
      %p124 = scmp.eq.s32.totalorder %s18, 1
      %p125 = por %p123, %p124
      %p127 = scmp.ne.s32.totalorder %s110, %s126
      %p128 = scmp.eq.s32.totalorder %s18, 0
      %p129 = por %p127, %p128
      %p130 = scmp.le.s32.totalorder 1, %s12
      %p131 = scmp.lt.s32.totalorder %s12, 3
      %p132 = pnand %p130, %p131
      %p133 = pneg %p132
      // Predicated region
      $region9: #{conv3x3_plain.1} parent=5 // pred_check
        _
      $region10: #{conv3x3_plain.1} parent=5 // pred_check_branch
        %135 = sbr.rel (%p132) target = $region12
      $region11: #{conv3x3_plain.1} parent=5 // pred_region
        %s136 = ssub.s32 %s12, 1
        // Predicated region
        $region13: #{conv3x3_plain.1} parent=11 // pred_check
          %p137 = pneg %p73
        $region14: #{conv3x3_plain.1} parent=11 // pred_check_branch
          %139 = sbr.rel (%p137) target = $region16
        $region15: #{conv3x3_plain.1} parent=11 // pred_region
          _
        $region16: #{conv3x3_plain.1} parent=11 // pred_fallthru
          _
        // Predicated region
        $region17: #{conv3x3_plain.1} parent=11 // pred_check
          %p140 = pneg %p94
        $region18: #{conv3x3_plain.1} parent=11 // pred_check_branch
          %142 = sbr.rel (%p140) target = $region20
        $region19: #{conv3x3_plain.1} parent=11 // pred_region
          _
        $region20: #{conv3x3_plain.1} parent=11 // pred_fallthru
          _
      $region12: #{conv3x3_plain.1} parent=5 // pred_fallthru
        _
      %p143 = scmp.lt.s32.totalorder %s12, 2
      // Predicated region
      $region21: #{conv3x3_plain.1} parent=5 // pred_check
        %p144 = pneg %p143
      $region22: #{conv3x3_plain.1} parent=5 // pred_check_branch
        %146 = sbr.rel (%p144) target = $region24
      $region23: #{conv3x3_plain.1} parent=5 // pred_region
        // Predicated region
        $region25: #{conv3x3_plain.1} parent=23 // pred_check
          %p147 = pneg %p46
        $region26: #{conv3x3_plain.1} parent=23 // pred_check_branch
          %149 = sbr.rel (%p147) target = $region28
        $region27: #{conv3x3_plain.1} parent=23 // pred_region
          %p150 = scmp.lt.s32.totalorder %s19, 1
          %s151 = scalar_select %p150, %s19, 1
          %p152 = scmp.lt.s32.totalorder %s20, 0
          %s153 = scalar_select %p152, %s20, 0
          %s154 = smul.addr %s153, 37
          %s155 = smul.addr %s151, 37
          %s156 = sadd.s32 %s154, %s155
          %s157 = smul.addr %s156, 8
          %s158 = scalar_lea.vmem %s0, %s157
        $region28: #{conv3x3_plain.1} parent=23 // pred_fallthru
          _
      $region24: #{conv3x3_plain.1} parent=5 // pred_fallthru
        _
      %p159 = scmp.le.s32.totalorder 1, %s12
      %p160 = scmp.lt.s32.totalorder %s12, 3
      %p161 = pnand %p159, %p160
      %p162 = pneg %p161
      // Predicated region
      $region29: #{conv3x3_plain.1} parent=5 // pred_check
        _
      $region30: #{conv3x3_plain.1} parent=5 // pred_check_branch
        %164 = sbr.rel (%p161) target = $region32
      $region31: #{conv3x3_plain.1} parent=5 // pred_region
        %s165 = ssub.s32 %s12, 1
        %p166 = scmp.lt.s32.totalorder %s21, 1
        %s167 = scalar_select %p166, %s21, 1
        %p168 = scmp.lt.s32.totalorder %s22, 0
        %s169 = scalar_select %p168, %s22, 0
        %s170 = smul.addr %s169, 37
        %s171 = smul.addr %s167, 37
        %s172 = sadd.s32 %s170, %s171
        %s173 = smul.addr %s172, 8
        %s174 = scalar_lea.vmem %s0, %s173
        %p175 = pneg %p52
        %p176 = pneg %p49
        %p177 = pneg %p73
        %p178 = pneg %p70
        %p179 = pneg %p94
        %p180 = pneg %p91
        %p181 = pneg %p122
        %p182 = pneg %p119
        %s183 = sand.u32 %s109, 1
        %s184 = scalar_lea.sflag [#allocation3], %s183
        %s185 = sand.u32 %s109, 1
        %s186 = smul.addr %s185, 256
        %s187 = scalar_lea.vmem [#allocation2], %s186
        %p188 = scmp.lt.s32.totalorder %s21, 1
        %s189 = scalar_select %p188, %s21, 1
        %p190 = scmp.lt.s32.totalorder %s22, 0
        %s191 = scalar_select %p190, %s22, 0
        %s192 = smul.addr %s191, 37
        %s193 = smul.addr %s189, 37
        %s194 = sadd.s32 %s192, %s193
        %s195 = smul.addr %s194, 8
        %s196 = scalar_lea.vmem %s0, %s195
        %s197 = smul.u32 32, %s22
        %v201 = vld [vmem:[%s196] sm:$0xff]
        %v202 = vld [vmem:[%s196 + $0x8] sm:$0xff]
        %v203 = vld [vmem:[%s196 + $0x10] sm:$0xff]
        %v204 = vld [vmem:[%s196 + $0x18] sm:$0xff]
        %v205 = vld [vmem:[%s196 + $0x20] sm:$0xff]
        %v206 = vld [vmem:[%s196 + $0x28] sm:$0xff]
        %v207 = vld [vmem:[%s196 + $0x30] sm:$0xff]
        %v208 = vld [vmem:[%s196 + $0x38] sm:$0xff]
        %v209 = vld [vmem:[%s196 + $0x40] sm:$0xff]
        %v210 = vld [vmem:[%s196 + $0x48] sm:$0xff]
        %v211 = vld [vmem:[%s196 + $0x50] sm:$0xff]
        %v212 = vld [vmem:[%s196 + $0x58] sm:$0xff]
        %v213 = vld [vmem:[%s196 + $0x60] sm:$0xff]
        %v214 = vld [vmem:[%s196 + $0x68] sm:$0xff]
        %v215 = vld [vmem:[%s196 + $0x70] sm:$0xff]
        %v216 = vld [vmem:[%s196 + $0x78] sm:$0xff]
        %v217 = vld [vmem:[%s196 + $0x80] sm:$0xff]
        %v218 = vld [vmem:[%s196 + $0x88] sm:$0xff]
        %v219 = vld [vmem:[%s196 + $0x90] sm:$0xff]
        %v220 = vld [vmem:[%s196 + $0x98] sm:$0xff]
        %v221 = vld [vmem:[%s196 + $0xa0] sm:$0xff]
        %v222 = vld [vmem:[%s196 + $0xa8] sm:$0xff]
        %v223 = vld [vmem:[%s196 + $0xb0] sm:$0xff]
        %v224 = vld [vmem:[%s196 + $0xb8] sm:$0xff]
        %v225 = vld [vmem:[%s196 + $0xc0] sm:$0xff]
        %v226 = vld [vmem:[%s196 + $0xc8] sm:$0xff]
        %v227 = vld [vmem:[%s196 + $0xd0] sm:$0xff]
        %v228 = vld [vmem:[%s196 + $0xd8] sm:$0xff]
        %v229 = vld [vmem:[%s196 + $0xe0] sm:$0xff]
        %v230 = vld [vmem:[%s196 + $0xe8] sm:$0xff]
        %v231 = vld [vmem:[%s196 + $0xf0] sm:$0xff]
        %v232 = vld [vmem:[%s196 + $0xf8] sm:$0xff]
        %v233 = vld [vmem:[%s196 + $0x100] sm:$0xff]
        %v234 = vld [vmem:[%s196 + $0x108] sm:$0xff]
        %v235 = vld [vmem:[%s196 + $0x110] sm:$0xff]
        %v236 = vld [vmem:[%s196 + $0x118] sm:$0xff]
        %v237 = vld [vmem:[%s196 + $0x120] sm:$0x3]
        %v238 = vpack.c.bf16 %v201, %v201
        %v239 = vpack.c.bf16 %v202, %v202
        %v240 = vpack.c.bf16 %v203, %v203
        %v241 = vpack.c.bf16 %v204, %v204
        %v242 = vpack.c.bf16 %v205, %v205
        %v243 = vpack.c.bf16 %v206, %v206
        %v244 = vpack.c.bf16 %v207, %v207
        %v245 = vpack.c.bf16 %v208, %v208
        %v246 = vpack.c.bf16 %v209, %v209
        %v247 = vpack.c.bf16 %v210, %v210
        %v248 = vpack.c.bf16 %v211, %v211
        %v249 = vpack.c.bf16 %v212, %v212
        %v250 = vpack.c.bf16 %v213, %v213
        %v251 = vpack.c.bf16 %v214, %v214
        %v252 = vpack.c.bf16 %v215, %v215
        %v253 = vpack.c.bf16 %v216, %v216
        %v254 = vpack.c.bf16 %v217, %v217
        %v255 = vpack.c.bf16 %v218, %v218
        %v256 = vpack.c.bf16 %v219, %v219
        %v257 = vpack.c.bf16 %v220, %v220
        %v258 = vpack.c.bf16 %v221, %v221
        %v259 = vpack.c.bf16 %v222, %v222
        %v260 = vpack.c.bf16 %v223, %v223
        %v261 = vpack.c.bf16 %v224, %v224
        %v262 = vpack.c.bf16 %v225, %v225
        %v263 = vpack.c.bf16 %v226, %v226
        %v264 = vpack.c.bf16 %v227, %v227
        %v265 = vpack.c.bf16 %v228, %v228
        %v266 = vpack.c.bf16 %v229, %v229
        %v267 = vpack.c.bf16 %v230, %v230
        %v268 = vpack.c.bf16 %v231, %v231
        %v269 = vpack.c.bf16 %v232, %v232
        %v270 = vpack.c.bf16 %v233, %v233
        %v271 = vpack.c.bf16 %v234, %v234
        %v272 = vpack.c.bf16 %v235, %v235
        %v273 = vpack.c.bf16 %v236, %v236
        %v274 = vpack.c.bf16 %v237, %v237
        %v275 = vlaneseq
        %v276 = vshrl.u32 %v275, 7
        %v277 = vadd.s32 %v276, 8
        %v278 = vadd.s32 %v276, 16
        %v279 = vadd.s32 %v276, 24
        %v280 = vadd.s32 %v276, 32
        %v281 = vadd.s32 %v276, 40
        %v282 = vadd.s32 %v276, 48
        %v283 = vadd.s32 %v276, 56
        %v284 = vadd.s32 %v276, 64
        %v285 = vadd.s32 %v276, 72
        %v286 = vadd.s32 %v276, 80
        %v287 = vadd.s32 %v276, 88
        %v288 = vadd.s32 %v276, 96
        %v289 = vadd.s32 %v276, 104
        %v290 = vadd.s32 %v276, 112
        %v291 = vadd.s32 %v276, 120
        %v292 = vadd.s32 %v276, 128
        %v293 = vadd.s32 %v276, 136
        %v294 = vadd.s32 %v276, 144
        %v295 = vadd.s32 %v276, 152
        %v296 = vadd.s32 %v276, 160
        %v297 = vadd.s32 %v276, 168
        %v298 = vadd.s32 %v276, 176
        %v299 = vadd.s32 %v276, 184
        %v300 = vadd.s32 %v276, 192
        %v301 = vadd.s32 %v276, 200
        %v302 = vadd.s32 %v276, 208
        %v303 = vadd.s32 %v276, 216
        %v304 = vadd.s32 %v276, 224
        %v305 = vadd.s32 %v276, 232
        %v306 = vadd.s32 %v276, 240
        %v307 = vadd.s32 %v276, 248
        %vm308 = vcmp.lt.s32.totalorder %v276, 0
        %v309 = vsub.s32 0, %v276
        %v310 = vsel %vm308, %v309, %v276
        %v311 = vshrl.u32 %v310, 4
        %v312 = vand.u32 %v310, 15
        %v313 = vsub.s32 0, %v312
        %v314 = vsel %vm308, %v313, %v312
        %vm315 = vcmp.lt.s32.totalorder %v277, 0
        %v316 = vsub.s32 0, %v277
        %v317 = vsel %vm315, %v316, %v277
        %v318 = vshrl.u32 %v317, 4
        %v319 = vand.u32 %v317, 15
        %v320 = vsub.s32 0, %v319
        %v321 = vsel %vm315, %v320, %v319
        %vm322 = vcmp.lt.s32.totalorder %v278, 0
        %v323 = vsub.s32 0, %v278
        %v324 = vsel %vm322, %v323, %v278
        %v325 = vshrl.u32 %v324, 4
        %v326 = vand.u32 %v324, 15
        %v327 = vsub.s32 0, %v326
        %v328 = vsel %vm322, %v327, %v326
        %vm329 = vcmp.lt.s32.totalorder %v279, 0
        %v330 = vsub.s32 0, %v279
        %v331 = vsel %vm329, %v330, %v279
        %v332 = vshrl.u32 %v331, 4
        %v333 = vand.u32 %v331, 15
        %v334 = vsub.s32 0, %v333
        %v335 = vsel %vm329, %v334, %v333
        %vm336 = vcmp.lt.s32.totalorder %v280, 0
        %v337 = vsub.s32 0, %v280
        %v338 = vsel %vm336, %v337, %v280
        %v339 = vshrl.u32 %v338, 4
        %v340 = vand.u32 %v338, 15
        %v341 = vsub.s32 0, %v340
        %v342 = vsel %vm336, %v341, %v340
        %vm343 = vcmp.lt.s32.totalorder %v281, 0
        %v344 = vsub.s32 0, %v281
        %v345 = vsel %vm343, %v344, %v281
        %v346 = vshrl.u32 %v345, 4
        %v347 = vand.u32 %v345, 15
        %v348 = vsub.s32 0, %v347
        %v349 = vsel %vm343, %v348, %v347
        %vm350 = vcmp.lt.s32.totalorder %v282, 0
        %v351 = vsub.s32 0, %v282
        %v352 = vsel %vm350, %v351, %v282
        %v353 = vshrl.u32 %v352, 4
        %v354 = vand.u32 %v352, 15
        %v355 = vsub.s32 0, %v354
        %v356 = vsel %vm350, %v355, %v354
        %vm357 = vcmp.lt.s32.totalorder %v283, 0
        %v358 = vsub.s32 0, %v283
        %v359 = vsel %vm357, %v358, %v283
        %v360 = vshrl.u32 %v359, 4
        %v361 = vand.u32 %v359, 15
        %v362 = vsub.s32 0, %v361
        %v363 = vsel %vm357, %v362, %v361
        %vm364 = vcmp.lt.s32.totalorder %v284, 0
        %v365 = vsub.s32 0, %v284
        %v366 = vsel %vm364, %v365, %v284
        %v367 = vshrl.u32 %v366, 4
        %v368 = vand.u32 %v366, 15
        %v369 = vsub.s32 0, %v368
        %v370 = vsel %vm364, %v369, %v368
        %vm371 = vcmp.lt.s32.totalorder %v285, 0
        %v372 = vsub.s32 0, %v285
        %v373 = vsel %vm371, %v372, %v285
        %v374 = vshrl.u32 %v373, 4
        %v375 = vand.u32 %v373, 15
        %v376 = vsub.s32 0, %v375
        %v377 = vsel %vm371, %v376, %v375
        %vm378 = vcmp.lt.s32.totalorder %v286, 0
        %v379 = vsub.s32 0, %v286
        %v380 = vsel %vm378, %v379, %v286
        %v381 = vshrl.u32 %v380, 4
        %v382 = vand.u32 %v380, 15
        %v383 = vsub.s32 0, %v382
        %v384 = vsel %vm378, %v383, %v382
        %vm385 = vcmp.lt.s32.totalorder %v287, 0
        %v386 = vsub.s32 0, %v287
        %v387 = vsel %vm385, %v386, %v287
        %v388 = vshrl.u32 %v387, 4
        %v389 = vand.u32 %v387, 15
        %v390 = vsub.s32 0, %v389
        %v391 = vsel %vm385, %v390, %v389
        %vm392 = vcmp.lt.s32.totalorder %v288, 0
        %v393 = vsub.s32 0, %v288
        %v394 = vsel %vm392, %v393, %v288
        %v395 = vshrl.u32 %v394, 4
        %v396 = vand.u32 %v394, 15
        %v397 = vsub.s32 0, %v396
        %v398 = vsel %vm392, %v397, %v396
        %vm399 = vcmp.lt.s32.totalorder %v289, 0
        %v400 = vsub.s32 0, %v289
        %v401 = vsel %vm399, %v400, %v289
        %v402 = vshrl.u32 %v401, 4
        %v403 = vand.u32 %v401, 15
        %v404 = vsub.s32 0, %v403
        %v405 = vsel %vm399, %v404, %v403
        %vm406 = vcmp.lt.s32.totalorder %v290, 0
        %v407 = vsub.s32 0, %v290
        %v408 = vsel %vm406, %v407, %v290
        %v409 = vshrl.u32 %v408, 4
        %v410 = vand.u32 %v408, 15
        %v411 = vsub.s32 0, %v410
        %v412 = vsel %vm406, %v411, %v410
        %vm413 = vcmp.lt.s32.totalorder %v291, 0
        %v414 = vsub.s32 0, %v291
        %v415 = vsel %vm413, %v414, %v291
        %v416 = vshrl.u32 %v415, 4
        %v417 = vand.u32 %v415, 15
        %v418 = vsub.s32 0, %v417
        %v419 = vsel %vm413, %v418, %v417
        %vm420 = vcmp.lt.s32.totalorder %v292, 0
        %v421 = vsub.s32 0, %v292
        %v422 = vsel %vm420, %v421, %v292
        %v423 = vshrl.u32 %v422, 4
        %v424 = vand.u32 %v422, 15
        %v425 = vsub.s32 0, %v424
        %v426 = vsel %vm420, %v425, %v424
        %vm427 = vcmp.lt.s32.totalorder %v293, 0
        %v428 = vsub.s32 0, %v293
        %v429 = vsel %vm427, %v428, %v293
        %v430 = vshrl.u32 %v429, 4
        %v431 = vand.u32 %v429, 15
        %v432 = vsub.s32 0, %v431
        %v433 = vsel %vm427, %v432, %v431
        %vm434 = vcmp.lt.s32.totalorder %v294, 0
        %v435 = vsub.s32 0, %v294
        %v436 = vsel %vm434, %v435, %v294
        %v437 = vshrl.u32 %v436, 4
        %v438 = vand.u32 %v436, 15
        %v439 = vsub.s32 0, %v438
        %v440 = vsel %vm434, %v439, %v438
        %vm441 = vcmp.lt.s32.totalorder %v295, 0
        %v442 = vsub.s32 0, %v295
        %v443 = vsel %vm441, %v442, %v295
        %v444 = vshrl.u32 %v443, 4
        %v445 = vand.u32 %v443, 15
        %v446 = vsub.s32 0, %v445
        %v447 = vsel %vm441, %v446, %v445
        %vm448 = vcmp.lt.s32.totalorder %v296, 0
        %v449 = vsub.s32 0, %v296
        %v450 = vsel %vm448, %v449, %v296
        %v451 = vshrl.u32 %v450, 4
        %v452 = vand.u32 %v450, 15
        %v453 = vsub.s32 0, %v452
        %v454 = vsel %vm448, %v453, %v452
        %vm455 = vcmp.lt.s32.totalorder %v297, 0
        %v456 = vsub.s32 0, %v297
        %v457 = vsel %vm455, %v456, %v297
        %v458 = vshrl.u32 %v457, 4
        %v459 = vand.u32 %v457, 15
        %v460 = vsub.s32 0, %v459
        %v461 = vsel %vm455, %v460, %v459
        %vm462 = vcmp.lt.s32.totalorder %v298, 0
        %v463 = vsub.s32 0, %v298
        %v464 = vsel %vm462, %v463, %v298
        %v465 = vshrl.u32 %v464, 4
        %v466 = vand.u32 %v464, 15
        %v467 = vsub.s32 0, %v466
        %v468 = vsel %vm462, %v467, %v466
        %vm469 = vcmp.lt.s32.totalorder %v299, 0
        %v470 = vsub.s32 0, %v299
        %v471 = vsel %vm469, %v470, %v299
        %v472 = vshrl.u32 %v471, 4
        %v473 = vand.u32 %v471, 15
        %v474 = vsub.s32 0, %v473
        %v475 = vsel %vm469, %v474, %v473
        %vm476 = vcmp.lt.s32.totalorder %v300, 0
        %v477 = vsub.s32 0, %v300
        %v478 = vsel %vm476, %v477, %v300
        %v479 = vshrl.u32 %v478, 4
        %v480 = vand.u32 %v478, 15
        %v481 = vsub.s32 0, %v480
        %v482 = vsel %vm476, %v481, %v480
        %vm483 = vcmp.lt.s32.totalorder %v301, 0
        %v484 = vsub.s32 0, %v301
        %v485 = vsel %vm483, %v484, %v301
        %v486 = vshrl.u32 %v485, 4
        %v487 = vand.u32 %v485, 15
        %v488 = vsub.s32 0, %v487
        %v489 = vsel %vm483, %v488, %v487
        %vm490 = vcmp.lt.s32.totalorder %v302, 0
        %v491 = vsub.s32 0, %v302
        %v492 = vsel %vm490, %v491, %v302
        %v493 = vshrl.u32 %v492, 4
        %v494 = vand.u32 %v492, 15
        %v495 = vsub.s32 0, %v494
        %v496 = vsel %vm490, %v495, %v494
        %vm497 = vcmp.lt.s32.totalorder %v303, 0
        %v498 = vsub.s32 0, %v303
        %v499 = vsel %vm497, %v498, %v303
        %v500 = vshrl.u32 %v499, 4
        %v501 = vand.u32 %v499, 15
        %v502 = vsub.s32 0, %v501
        %v503 = vsel %vm497, %v502, %v501
        %vm504 = vcmp.lt.s32.totalorder %v304, 0
        %v505 = vsub.s32 0, %v304
        %v506 = vsel %vm504, %v505, %v304
        %v507 = vshrl.u32 %v506, 4
        %v508 = vand.u32 %v506, 15
        %v509 = vsub.s32 0, %v508
        %v510 = vsel %vm504, %v509, %v508
        %vm511 = vcmp.lt.s32.totalorder %v305, 0
        %v512 = vsub.s32 0, %v305
        %v513 = vsel %vm511, %v512, %v305
        %v514 = vshrl.u32 %v513, 4
        %v515 = vand.u32 %v513, 15
        %v516 = vsub.s32 0, %v515
        %v517 = vsel %vm511, %v516, %v515
        %vm518 = vcmp.lt.s32.totalorder %v306, 0
        %v519 = vsub.s32 0, %v306
        %v520 = vsel %vm518, %v519, %v306
        %v521 = vshrl.u32 %v520, 4
        %v522 = vand.u32 %v520, 15
        %v523 = vsub.s32 0, %v522
        %v524 = vsel %vm518, %v523, %v522
        %vm525 = vcmp.lt.s32.totalorder %v307, 0
        %v526 = vsub.s32 0, %v307
        %v527 = vsel %vm525, %v526, %v307
        %v528 = vshrl.u32 %v527, 4
        %v529 = vand.u32 %v527, 15
        %v530 = vsub.s32 0, %v529
        %v531 = vsel %vm525, %v530, %v529
        %vm532 = vcmp.ne.s32.totalorder %v314, 0
        %vm533 = vcmp.ne.s32.totalorder %v321, 0
        %vm534 = vcmp.ne.s32.totalorder %v328, 0
        %vm535 = vcmp.ne.s32.totalorder %v335, 0
        %vm536 = vcmp.ne.s32.totalorder %v342, 0
        %vm537 = vcmp.ne.s32.totalorder %v349, 0
        %vm538 = vcmp.ne.s32.totalorder %v356, 0
        %vm539 = vcmp.ne.s32.totalorder %v363, 0
        %vm540 = vcmp.ne.s32.totalorder %v370, 0
        %vm541 = vcmp.ne.s32.totalorder %v377, 0
        %vm542 = vcmp.ne.s32.totalorder %v384, 0
        %vm543 = vcmp.ne.s32.totalorder %v391, 0
        %vm544 = vcmp.ne.s32.totalorder %v398, 0
        %vm545 = vcmp.ne.s32.totalorder %v405, 0
        %vm546 = vcmp.ne.s32.totalorder %v412, 0
        %vm547 = vcmp.ne.s32.totalorder %v419, 0
        %vm548 = vcmp.ne.s32.totalorder %v426, 0
        %vm549 = vcmp.ne.s32.totalorder %v433, 0
        %vm550 = vcmp.ne.s32.totalorder %v440, 0
        %vm551 = vcmp.ne.s32.totalorder %v447, 0
        %vm552 = vcmp.ne.s32.totalorder %v454, 0
        %vm553 = vcmp.ne.s32.totalorder %v461, 0
        %vm554 = vcmp.ne.s32.totalorder %v468, 0
        %vm555 = vcmp.ne.s32.totalorder %v475, 0
        %vm556 = vcmp.ne.s32.totalorder %v482, 0
        %vm557 = vcmp.ne.s32.totalorder %v489, 0
        %vm558 = vcmp.ne.s32.totalorder %v496, 0
        %vm559 = vcmp.ne.s32.totalorder %v503, 0
        %vm560 = vcmp.ne.s32.totalorder %v510, 0
        %vm561 = vcmp.ne.s32.totalorder %v517, 0
        %vm562 = vcmp.ne.s32.totalorder %v524, 0
        %vm563 = vcmp.ne.s32.totalorder %v531, 0
        %vm564 = vcmp.lt.s32.totalorder %v314, 0
        %vm565 = vcmp.lt.s32.totalorder %v321, 0
        %vm566 = vcmp.lt.s32.totalorder %v328, 0
        %vm567 = vcmp.lt.s32.totalorder %v335, 0
        %vm568 = vcmp.lt.s32.totalorder %v342, 0
        %vm569 = vcmp.lt.s32.totalorder %v349, 0
        %vm570 = vcmp.lt.s32.totalorder %v356, 0
        %vm571 = vcmp.lt.s32.totalorder %v363, 0
        %vm572 = vcmp.lt.s32.totalorder %v370, 0
        %vm573 = vcmp.lt.s32.totalorder %v377, 0
        %vm574 = vcmp.lt.s32.totalorder %v384, 0
        %vm575 = vcmp.lt.s32.totalorder %v391, 0
        %vm576 = vcmp.lt.s32.totalorder %v398, 0
        %vm577 = vcmp.lt.s32.totalorder %v405, 0
        %vm578 = vcmp.lt.s32.totalorder %v412, 0
        %vm579 = vcmp.lt.s32.totalorder %v419, 0
        %vm580 = vcmp.lt.s32.totalorder %v426, 0
        %vm581 = vcmp.lt.s32.totalorder %v433, 0
        %vm582 = vcmp.lt.s32.totalorder %v440, 0
        %vm583 = vcmp.lt.s32.totalorder %v447, 0
        %vm584 = vcmp.lt.s32.totalorder %v454, 0
        %vm585 = vcmp.lt.s32.totalorder %v461, 0
        %vm586 = vcmp.lt.s32.totalorder %v468, 0
        %vm587 = vcmp.lt.s32.totalorder %v475, 0
        %vm588 = vcmp.lt.s32.totalorder %v482, 0
        %vm589 = vcmp.lt.s32.totalorder %v489, 0
        %vm590 = vcmp.lt.s32.totalorder %v496, 0
        %vm591 = vcmp.lt.s32.totalorder %v503, 0
        %vm592 = vcmp.lt.s32.totalorder %v510, 0
        %vm593 = vcmp.lt.s32.totalorder %v517, 0
        %vm594 = vcmp.lt.s32.totalorder %v524, 0
        %vm595 = vcmp.lt.s32.totalorder %v531, 0
        %vm596 = vmand %vm564, %vm532
        %vm597 = vmand %vm565, %vm533
        %vm598 = vmand %vm566, %vm534
        %vm599 = vmand %vm567, %vm535
        %vm600 = vmand %vm568, %vm536
        %vm601 = vmand %vm569, %vm537
        %vm602 = vmand %vm570, %vm538
        %vm603 = vmand %vm571, %vm539
        %vm604 = vmand %vm572, %vm540
        %vm605 = vmand %vm573, %vm541
        %vm606 = vmand %vm574, %vm542
        %vm607 = vmand %vm575, %vm543
        %vm608 = vmand %vm576, %vm544
        %vm609 = vmand %vm577, %vm545
        %vm610 = vmand %vm578, %vm546
        %vm611 = vmand %vm579, %vm547
        %vm612 = vmand %vm580, %vm548
        %vm613 = vmand %vm581, %vm549
        %vm614 = vmand %vm582, %vm550
        %vm615 = vmand %vm583, %vm551
        %vm616 = vmand %vm584, %vm552
        %vm617 = vmand %vm585, %vm553
        %vm618 = vmand %vm586, %vm554
        %vm619 = vmand %vm587, %vm555
        %vm620 = vmand %vm588, %vm556
        %vm621 = vmand %vm589, %vm557
        %vm622 = vmand %vm590, %vm558
        %vm623 = vmand %vm591, %vm559
        %vm624 = vmand %vm592, %vm560
        %vm625 = vmand %vm593, %vm561
        %vm626 = vmand %vm594, %vm562
        %vm627 = vmand %vm595, %vm563
        %v628 = vadd.s32 %v314, 16
        %v629 = vadd.s32 %v321, 16
        %v630 = vadd.s32 %v328, 16
        %v631 = vadd.s32 %v335, 16
        %v632 = vadd.s32 %v342, 16
        %v633 = vadd.s32 %v349, 16
        %v634 = vadd.s32 %v356, 16
        %v635 = vadd.s32 %v363, 16
        %v636 = vadd.s32 %v370, 16
        %v637 = vadd.s32 %v377, 16
        %v638 = vadd.s32 %v384, 16
        %v639 = vadd.s32 %v391, 16
        %v640 = vadd.s32 %v398, 16
        %v641 = vadd.s32 %v405, 16
        %v642 = vadd.s32 %v412, 16
        %v643 = vadd.s32 %v419, 16
        %v644 = vadd.s32 %v426, 16
        %v645 = vadd.s32 %v433, 16
        %v646 = vadd.s32 %v440, 16
        %v647 = vadd.s32 %v447, 16
        %v648 = vadd.s32 %v454, 16
        %v649 = vadd.s32 %v461, 16
        %v650 = vadd.s32 %v468, 16
        %v651 = vadd.s32 %v475, 16
        %v652 = vadd.s32 %v482, 16
        %v653 = vadd.s32 %v489, 16
        %v654 = vadd.s32 %v496, 16
        %v655 = vadd.s32 %v503, 16
        %v656 = vadd.s32 %v510, 16
        %v657 = vadd.s32 %v517, 16
        %v658 = vadd.s32 %v524, 16
        %v659 = vadd.s32 %v531, 16
        %v660 = vsel %vm596, %v628, %v314
        %v661 = vsel %vm597, %v629, %v321
        %v662 = vsel %vm598, %v630, %v328
        %v663 = vsel %vm599, %v631, %v335
        %v664 = vsel %vm600, %v632, %v342
        %v665 = vsel %vm601, %v633, %v349
        %v666 = vsel %vm602, %v634, %v356
        %v667 = vsel %vm603, %v635, %v363
        %v668 = vsel %vm604, %v636, %v370
        %v669 = vsel %vm605, %v637, %v377
        %v670 = vsel %vm606, %v638, %v384
        %v671 = vsel %vm607, %v639, %v391
        %v672 = vsel %vm608, %v640, %v398
        %v673 = vsel %vm609, %v641, %v405
        %v674 = vsel %vm610, %v642, %v412
        %v675 = vsel %vm611, %v643, %v419
        %v676 = vsel %vm612, %v644, %v426
        %v677 = vsel %vm613, %v645, %v433
        %v678 = vsel %vm614, %v646, %v440
        %v679 = vsel %vm615, %v647, %v447
        %v680 = vsel %vm616, %v648, %v454
        %v681 = vsel %vm617, %v649, %v461
        %v682 = vsel %vm618, %v650, %v468
        %v683 = vsel %vm619, %v651, %v475
        %v684 = vsel %vm620, %v652, %v482
        %v685 = vsel %vm621, %v653, %v489
        %v686 = vsel %vm622, %v654, %v496
        %v687 = vsel %vm623, %v655, %v503
        %v688 = vsel %vm624, %v656, %v510
        %v689 = vsel %vm625, %v657, %v517
        %v690 = vsel %vm626, %v658, %v524
        %v691 = vsel %vm627, %v659, %v531
        %vm692 = vcmp.ne.s32.totalorder %v660, 0
        %vm693 = vcmp.ne.s32.totalorder %v661, 0
        %vm694 = vcmp.ne.s32.totalorder %v662, 0
        %vm695 = vcmp.ne.s32.totalorder %v663, 0
        %vm696 = vcmp.ne.s32.totalorder %v664, 0
        %vm697 = vcmp.ne.s32.totalorder %v665, 0
        %vm698 = vcmp.ne.s32.totalorder %v666, 0
        %vm699 = vcmp.ne.s32.totalorder %v667, 0
        %vm700 = vcmp.ne.s32.totalorder %v668, 0
        %vm701 = vcmp.ne.s32.totalorder %v669, 0
        %vm702 = vcmp.ne.s32.totalorder %v670, 0
        %vm703 = vcmp.ne.s32.totalorder %v671, 0
        %vm704 = vcmp.ne.s32.totalorder %v672, 0
        %vm705 = vcmp.ne.s32.totalorder %v673, 0
        %vm706 = vcmp.ne.s32.totalorder %v674, 0
        %vm707 = vcmp.ne.s32.totalorder %v675, 0
        %vm708 = vcmp.ne.s32.totalorder %v676, 0
        %vm709 = vcmp.ne.s32.totalorder %v677, 0
        %vm710 = vcmp.ne.s32.totalorder %v678, 0
        %vm711 = vcmp.ne.s32.totalorder %v679, 0
        %vm712 = vcmp.ne.s32.totalorder %v680, 0
        %vm713 = vcmp.ne.s32.totalorder %v681, 0
        %vm714 = vcmp.ne.s32.totalorder %v682, 0
        %vm715 = vcmp.ne.s32.totalorder %v683, 0
        %vm716 = vcmp.ne.s32.totalorder %v684, 0
        %vm717 = vcmp.ne.s32.totalorder %v685, 0
        %vm718 = vcmp.ne.s32.totalorder %v686, 0
        %vm719 = vcmp.ne.s32.totalorder %v687, 0
        %vm720 = vcmp.ne.s32.totalorder %v688, 0
        %vm721 = vcmp.ne.s32.totalorder %v689, 0
        %vm722 = vcmp.ne.s32.totalorder %v690, 0
        %vm723 = vcmp.ne.s32.totalorder %v691, 0
        %vm724 = vcmp.ne.s32.totalorder %v660, 15
        %vm725 = vcmp.ne.s32.totalorder %v661, 15
        %vm726 = vcmp.ne.s32.totalorder %v662, 15
        %vm727 = vcmp.ne.s32.totalorder %v663, 15
        %vm728 = vcmp.ne.s32.totalorder %v664, 15
        %vm729 = vcmp.ne.s32.totalorder %v665, 15
        %vm730 = vcmp.ne.s32.totalorder %v666, 15
        %vm731 = vcmp.ne.s32.totalorder %v667, 15
        %vm732 = vcmp.ne.s32.totalorder %v668, 15
        %vm733 = vcmp.ne.s32.totalorder %v669, 15
        %vm734 = vcmp.ne.s32.totalorder %v670, 15
        %vm735 = vcmp.ne.s32.totalorder %v671, 15
        %vm736 = vcmp.ne.s32.totalorder %v672, 15
        %vm737 = vcmp.ne.s32.totalorder %v673, 15
        %vm738 = vcmp.ne.s32.totalorder %v674, 15
        %vm739 = vcmp.ne.s32.totalorder %v675, 15
        %vm740 = vcmp.ne.s32.totalorder %v676, 15
        %vm741 = vcmp.ne.s32.totalorder %v677, 15
        %vm742 = vcmp.ne.s32.totalorder %v678, 15
        %vm743 = vcmp.ne.s32.totalorder %v679, 15
        %vm744 = vcmp.ne.s32.totalorder %v680, 15
        %vm745 = vcmp.ne.s32.totalorder %v681, 15
        %vm746 = vcmp.ne.s32.totalorder %v682, 15
        %vm747 = vcmp.ne.s32.totalorder %v683, 15
        %vm748 = vcmp.ne.s32.totalorder %v684, 15
        %vm749 = vcmp.ne.s32.totalorder %v685, 15
        %vm750 = vcmp.ne.s32.totalorder %v686, 15
        %vm751 = vcmp.ne.s32.totalorder %v687, 15
        %vm752 = vcmp.ne.s32.totalorder %v688, 15
        %vm753 = vcmp.ne.s32.totalorder %v689, 15
        %vm754 = vcmp.ne.s32.totalorder %v690, 15
        %vm755 = vcmp.ne.s32.totalorder %v691, 15
        %v756 = vsel %vm692, 1, 0
        %v757 = vsel %vm693, 1, 0
        %v758 = vsel %vm694, 1, 0
        %v759 = vsel %vm695, 1, 0
        %v760 = vsel %vm696, 1, 0
        %v761 = vsel %vm697, 1, 0
        %v762 = vsel %vm698, 1, 0
        %v763 = vsel %vm699, 1, 0
        %v764 = vsel %vm700, 1, 0
        %v765 = vsel %vm701, 1, 0
        %v766 = vsel %vm702, 1, 0
        %v767 = vsel %vm703, 1, 0
        %v768 = vsel %vm704, 1, 0
        %v769 = vsel %vm705, 1, 0
        %v770 = vsel %vm706, 1, 0
        %v771 = vsel %vm707, 1, 0
        %v772 = vsel %vm708, 1, 0
        %v773 = vsel %vm709, 1, 0
        %v774 = vsel %vm710, 1, 0
        %v775 = vsel %vm711, 1, 0
        %v776 = vsel %vm712, 1, 0
        %v777 = vsel %vm713, 1, 0
        %v778 = vsel %vm714, 1, 0
        %v779 = vsel %vm715, 1, 0
        %v780 = vsel %vm716, 1, 0
        %v781 = vsel %vm717, 1, 0
        %v782 = vsel %vm718, 1, 0
        %v783 = vsel %vm719, 1, 0
        %v784 = vsel %vm720, 1, 0
        %v785 = vsel %vm721, 1, 0
        %v786 = vsel %vm722, 1, 0
        %v787 = vsel %vm723, 1, 0
        %vm788 = vcmp.eq.s32.totalorder %v756, 1
        %vm789 = vcmp.eq.s32.totalorder %v757, 1
        %vm790 = vcmp.eq.s32.totalorder %v758, 1
        %vm791 = vcmp.eq.s32.totalorder %v759, 1
        %vm792 = vcmp.eq.s32.totalorder %v760, 1
        %vm793 = vcmp.eq.s32.totalorder %v761, 1
        %vm794 = vcmp.eq.s32.totalorder %v762, 1
        %vm795 = vcmp.eq.s32.totalorder %v763, 1
        %vm796 = vcmp.eq.s32.totalorder %v764, 1
        %vm797 = vcmp.eq.s32.totalorder %v765, 1
        %vm798 = vcmp.eq.s32.totalorder %v766, 1
        %vm799 = vcmp.eq.s32.totalorder %v767, 1
        %vm800 = vcmp.eq.s32.totalorder %v768, 1
        %vm801 = vcmp.eq.s32.totalorder %v769, 1
        %vm802 = vcmp.eq.s32.totalorder %v770, 1
        %vm803 = vcmp.eq.s32.totalorder %v771, 1
        %vm804 = vcmp.eq.s32.totalorder %v772, 1
        %vm805 = vcmp.eq.s32.totalorder %v773, 1
        %vm806 = vcmp.eq.s32.totalorder %v774, 1
        %vm807 = vcmp.eq.s32.totalorder %v775, 1
        %vm808 = vcmp.eq.s32.totalorder %v776, 1
        %vm809 = vcmp.eq.s32.totalorder %v777, 1
        %vm810 = vcmp.eq.s32.totalorder %v778, 1
        %vm811 = vcmp.eq.s32.totalorder %v779, 1
        %vm812 = vcmp.eq.s32.totalorder %v780, 1
        %vm813 = vcmp.eq.s32.totalorder %v781, 1
        %vm814 = vcmp.eq.s32.totalorder %v782, 1
        %vm815 = vcmp.eq.s32.totalorder %v783, 1
        %vm816 = vcmp.eq.s32.totalorder %v784, 1
        %vm817 = vcmp.eq.s32.totalorder %v785, 1
        %vm818 = vcmp.eq.s32.totalorder %v786, 1
        %vm819 = vcmp.eq.s32.totalorder %v787, 1
        %vm820 = vmpackc.low %vm788, %vm788
        %vm821 = vmpackc.low %vm789, %vm789
        %vm822 = vmpackc.low %vm790, %vm790
        %vm823 = vmpackc.low %vm791, %vm791
        %vm824 = vmpackc.low %vm792, %vm792
        %vm825 = vmpackc.low %vm793, %vm793
        %vm826 = vmpackc.low %vm794, %vm794
        %vm827 = vmpackc.low %vm795, %vm795
        %vm828 = vmpackc.low %vm796, %vm796
        %vm829 = vmpackc.low %vm797, %vm797
        %vm830 = vmpackc.low %vm798, %vm798
        %vm831 = vmpackc.low %vm799, %vm799
        %vm832 = vmpackc.low %vm800, %vm800
        %vm833 = vmpackc.low %vm801, %vm801
        %vm834 = vmpackc.low %vm802, %vm802
        %vm835 = vmpackc.low %vm803, %vm803
        %vm836 = vmpackc.low %vm804, %vm804
        %vm837 = vmpackc.low %vm805, %vm805
        %vm838 = vmpackc.low %vm806, %vm806
        %vm839 = vmpackc.low %vm807, %vm807
        %vm840 = vmpackc.low %vm808, %vm808
        %vm841 = vmpackc.low %vm809, %vm809
        %vm842 = vmpackc.low %vm810, %vm810
        %vm843 = vmpackc.low %vm811, %vm811
        %vm844 = vmpackc.low %vm812, %vm812
        %vm845 = vmpackc.low %vm813, %vm813
        %vm846 = vmpackc.low %vm814, %vm814
        %vm847 = vmpackc.low %vm815, %vm815
        %vm848 = vmpackc.low %vm816, %vm816
        %vm849 = vmpackc.low %vm817, %vm817
        %vm850 = vmpackc.low %vm818, %vm818
        %vm851 = vmpackc.low %vm819, %vm819
        %v852 = vsel %vm820, %v238, 0
        %v853 = vsel %vm821, %v239, 0
        %v854 = vsel %vm822, %v240, 0
        %v855 = vsel %vm823, %v241, 0
        %v856 = vsel %vm824, %v242, 0
        %v857 = vsel %vm825, %v243, 0
        %v858 = vsel %vm826, %v244, 0
        %v859 = vsel %vm827, %v245, 0
        %v860 = vsel %vm828, %v246, 0
        %v861 = vsel %vm829, %v247, 0
        %v862 = vsel %vm830, %v248, 0
        %v863 = vsel %vm831, %v249, 0
        %v864 = vsel %vm832, %v250, 0
        %v865 = vsel %vm833, %v251, 0
        %v866 = vsel %vm834, %v252, 0
        %v867 = vsel %vm835, %v253, 0
        %v868 = vsel %vm836, %v254, 0
        %v869 = vsel %vm837, %v255, 0
        %v870 = vsel %vm838, %v256, 0
        %v871 = vsel %vm839, %v257, 0
        %v872 = vsel %vm840, %v258, 0
        %v873 = vsel %vm841, %v259, 0
        %v874 = vsel %vm842, %v260, 0
        %v875 = vsel %vm843, %v261, 0
        %v876 = vsel %vm844, %v262, 0
        %v877 = vsel %vm845, %v263, 0
        %v878 = vsel %vm846, %v264, 0
        %v879 = vsel %vm847, %v265, 0
        %v880 = vsel %vm848, %v266, 0
        %v881 = vsel %vm849, %v267, 0
        %v882 = vsel %vm850, %v268, 0
        %v883 = vsel %vm851, %v269, 0
        %v884 = vsel %vm724, 1, 0
        %v885 = vsel %vm725, 1, 0
        %v886 = vsel %vm726, 1, 0
        %v887 = vsel %vm727, 1, 0
        %v888 = vsel %vm728, 1, 0
        %v889 = vsel %vm729, 1, 0
        %v890 = vsel %vm730, 1, 0
        %v891 = vsel %vm731, 1, 0
        %v892 = vsel %vm732, 1, 0
        %v893 = vsel %vm733, 1, 0
        %v894 = vsel %vm734, 1, 0
        %v895 = vsel %vm735, 1, 0
        %v896 = vsel %vm736, 1, 0
        %v897 = vsel %vm737, 1, 0
        %v898 = vsel %vm738, 1, 0
        %v899 = vsel %vm739, 1, 0
        %v900 = vsel %vm740, 1, 0
        %v901 = vsel %vm741, 1, 0
        %v902 = vsel %vm742, 1, 0
        %v903 = vsel %vm743, 1, 0
        %v904 = vsel %vm744, 1, 0
        %v905 = vsel %vm745, 1, 0
        %v906 = vsel %vm746, 1, 0
        %v907 = vsel %vm747, 1, 0
        %v908 = vsel %vm748, 1, 0
        %v909 = vsel %vm749, 1, 0
        %v910 = vsel %vm750, 1, 0
        %v911 = vsel %vm751, 1, 0
        %v912 = vsel %vm752, 1, 0
        %v913 = vsel %vm753, 1, 0
        %v914 = vsel %vm754, 1, 0
        %v915 = vsel %vm755, 1, 0
        %vm916 = vcmp.eq.s32.totalorder %v884, 1
        %vm917 = vcmp.eq.s32.totalorder %v885, 1
        %vm918 = vcmp.eq.s32.totalorder %v886, 1
        %vm919 = vcmp.eq.s32.totalorder %v887, 1
        %vm920 = vcmp.eq.s32.totalorder %v888, 1
        %vm921 = vcmp.eq.s32.totalorder %v889, 1
        %vm922 = vcmp.eq.s32.totalorder %v890, 1
        %vm923 = vcmp.eq.s32.totalorder %v891, 1
        %vm924 = vcmp.eq.s32.totalorder %v892, 1
        %vm925 = vcmp.eq.s32.totalorder %v893, 1
        %vm926 = vcmp.eq.s32.totalorder %v894, 1
        %vm927 = vcmp.eq.s32.totalorder %v895, 1
        %vm928 = vcmp.eq.s32.totalorder %v896, 1
        %vm929 = vcmp.eq.s32.totalorder %v897, 1
        %vm930 = vcmp.eq.s32.totalorder %v898, 1
        %vm931 = vcmp.eq.s32.totalorder %v899, 1
        %vm932 = vcmp.eq.s32.totalorder %v900, 1
        %vm933 = vcmp.eq.s32.totalorder %v901, 1
        %vm934 = vcmp.eq.s32.totalorder %v902, 1
        %vm935 = vcmp.eq.s32.totalorder %v903, 1
        %vm936 = vcmp.eq.s32.totalorder %v904, 1
        %vm937 = vcmp.eq.s32.totalorder %v905, 1
        %vm938 = vcmp.eq.s32.totalorder %v906, 1
        %vm939 = vcmp.eq.s32.totalorder %v907, 1
        %vm940 = vcmp.eq.s32.totalorder %v908, 1
        %vm941 = vcmp.eq.s32.totalorder %v909, 1
        %vm942 = vcmp.eq.s32.totalorder %v910, 1
        %vm943 = vcmp.eq.s32.totalorder %v911, 1
        %vm944 = vcmp.eq.s32.totalorder %v912, 1
        %vm945 = vcmp.eq.s32.totalorder %v913, 1
        %vm946 = vcmp.eq.s32.totalorder %v914, 1
        %vm947 = vcmp.eq.s32.totalorder %v915, 1
        %vm948 = vmpackc.low %vm916, %vm916
        %vm949 = vmpackc.low %vm917, %vm917
        %vm950 = vmpackc.low %vm918, %vm918
        %vm951 = vmpackc.low %vm919, %vm919
        %vm952 = vmpackc.low %vm920, %vm920
        %vm953 = vmpackc.low %vm921, %vm921
        %vm954 = vmpackc.low %vm922, %vm922
        %vm955 = vmpackc.low %vm923, %vm923
        %vm956 = vmpackc.low %vm924, %vm924
        %vm957 = vmpackc.low %vm925, %vm925
        %vm958 = vmpackc.low %vm926, %vm926
        %vm959 = vmpackc.low %vm927, %vm927
        %vm960 = vmpackc.low %vm928, %vm928
        %vm961 = vmpackc.low %vm929, %vm929
        %vm962 = vmpackc.low %vm930, %vm930
        %vm963 = vmpackc.low %vm931, %vm931
        %vm964 = vmpackc.low %vm932, %vm932
        %vm965 = vmpackc.low %vm933, %vm933
        %vm966 = vmpackc.low %vm934, %vm934
        %vm967 = vmpackc.low %vm935, %vm935
        %vm968 = vmpackc.low %vm936, %vm936
        %vm969 = vmpackc.low %vm937, %vm937
        %vm970 = vmpackc.low %vm938, %vm938
        %vm971 = vmpackc.low %vm939, %vm939
        %vm972 = vmpackc.low %vm940, %vm940
        %vm973 = vmpackc.low %vm941, %vm941
        %vm974 = vmpackc.low %vm942, %vm942
        %vm975 = vmpackc.low %vm943, %vm943
        %vm976 = vmpackc.low %vm944, %vm944
        %vm977 = vmpackc.low %vm945, %vm945
        %vm978 = vmpackc.low %vm946, %vm946
        %vm979 = vmpackc.low %vm947, %vm947
        %v980 = vsel %vm948, 65537, 0
        %v981 = vsel %vm949, 65537, 0
        %v982 = vsel %vm950, 65537, 0
        %v983 = vsel %vm951, 65537, 0
        %v984 = vsel %vm952, 65537, 0
        %v985 = vsel %vm953, 65537, 0
        %v986 = vsel %vm954, 65537, 0
        %v987 = vsel %vm955, 65537, 0
        %v988 = vsel %vm956, 65537, 0
        %v989 = vsel %vm957, 65537, 0
        %v990 = vsel %vm958, 65537, 0
        %v991 = vsel %vm959, 65537, 0
        %v992 = vsel %vm960, 65537, 0
        %v993 = vsel %vm961, 65537, 0
        %v994 = vsel %vm962, 65537, 0
        %v995 = vsel %vm963, 65537, 0
        %v996 = vsel %vm964, 65537, 0
        %v997 = vsel %vm965, 65537, 0
        %v998 = vsel %vm966, 65537, 0
        %v999 = vsel %vm967, 65537, 0
        %v1000 = vsel %vm968, 65537, 0
        %v1001 = vsel %vm969, 65537, 0
        %v1002 = vsel %vm970, 65537, 0
        %v1003 = vsel %vm971, 65537, 0
        %v1004 = vsel %vm972, 65537, 0
        %v1005 = vsel %vm973, 65537, 0
        %v1006 = vsel %vm974, 65537, 0
        %v1007 = vsel %vm975, 65537, 0
        %v1008 = vsel %vm976, 65537, 0
        %v1009 = vsel %vm977, 65537, 0
        %v1010 = vsel %vm978, 65537, 0
        %v1011 = vsel %vm979, 65537, 0
        %vm1012 = vcmask 1040384
        %vm1013 = vcmask 1044484
        %vm1014 = vmor %vm1012, %vm1013
        %v1015 = vrot.slane %v980, 7
        %v1016 = vrot.slane %v1015, 4
        %v1017 = vrot.slane %v981, 7
        %v1018 = vsel %vm1014, %v1016, %v1017
        %v1019 = vrot.slane %v1017, 4
        %v1020 = vrot.slane %v982, 7
        %v1021 = vsel %vm1014, %v1019, %v1020
        %v1022 = vrot.slane %v1020, 4
        %v1023 = vrot.slane %v983, 7
        %v1024 = vsel %vm1014, %v1022, %v1023
        %v1025 = vrot.slane %v1023, 4
        %v1026 = vrot.slane %v984, 7
        %v1027 = vsel %vm1014, %v1025, %v1026
        %v1028 = vrot.slane %v1026, 4
        %v1029 = vrot.slane %v985, 7
        %v1030 = vsel %vm1014, %v1028, %v1029
        %v1031 = vrot.slane %v1029, 4
        %v1032 = vrot.slane %v986, 7
        %v1033 = vsel %vm1014, %v1031, %v1032
        %v1034 = vrot.slane %v1032, 4
        %v1035 = vrot.slane %v987, 7
        %v1036 = vsel %vm1014, %v1034, %v1035
        %v1037 = vrot.slane %v1035, 4
        %v1038 = vrot.slane %v988, 7
        %v1039 = vsel %vm1014, %v1037, %v1038
        %v1040 = vrot.slane %v1038, 4
        %v1041 = vrot.slane %v989, 7
        %v1042 = vsel %vm1014, %v1040, %v1041
        %v1043 = vrot.slane %v1041, 4
        %v1044 = vrot.slane %v990, 7
        %v1045 = vsel %vm1014, %v1043, %v1044
        %v1046 = vrot.slane %v1044, 4
        %v1047 = vrot.slane %v991, 7
        %v1048 = vsel %vm1014, %v1046, %v1047
        %v1049 = vrot.slane %v1047, 4
        %v1050 = vrot.slane %v992, 7
        %v1051 = vsel %vm1014, %v1049, %v1050
        %v1052 = vrot.slane %v1050, 4
        %v1053 = vrot.slane %v993, 7
        %v1054 = vsel %vm1014, %v1052, %v1053
        %v1055 = vrot.slane %v1053, 4
        %v1056 = vrot.slane %v994, 7
        %v1057 = vsel %vm1014, %v1055, %v1056
        %v1058 = vrot.slane %v1056, 4
        %v1059 = vrot.slane %v995, 7
        %v1060 = vsel %vm1014, %v1058, %v1059
        %v1061 = vrot.slane %v1059, 4
        %v1062 = vrot.slane %v996, 7
        %v1063 = vsel %vm1014, %v1061, %v1062
        %v1064 = vrot.slane %v1062, 4
        %v1065 = vrot.slane %v997, 7
        %v1066 = vsel %vm1014, %v1064, %v1065
        %v1067 = vrot.slane %v1065, 4
        %v1068 = vrot.slane %v998, 7
        %v1069 = vsel %vm1014, %v1067, %v1068
        %v1070 = vrot.slane %v1068, 4
        %v1071 = vrot.slane %v999, 7
        %v1072 = vsel %vm1014, %v1070, %v1071
        %v1073 = vrot.slane %v1071, 4
        %v1074 = vrot.slane %v1000, 7
        %v1075 = vsel %vm1014, %v1073, %v1074
        %v1076 = vrot.slane %v1074, 4
        %v1077 = vrot.slane %v1001, 7
        %v1078 = vsel %vm1014, %v1076, %v1077
        %v1079 = vrot.slane %v1077, 4
        %v1080 = vrot.slane %v1002, 7
        %v1081 = vsel %vm1014, %v1079, %v1080
        %v1082 = vrot.slane %v1080, 4
        %v1083 = vrot.slane %v1003, 7
        %v1084 = vsel %vm1014, %v1082, %v1083
        %v1085 = vrot.slane %v1083, 4
        %v1086 = vrot.slane %v1004, 7
        %v1087 = vsel %vm1014, %v1085, %v1086
        %v1088 = vrot.slane %v1086, 4
        %v1089 = vrot.slane %v1005, 7
        %v1090 = vsel %vm1014, %v1088, %v1089
        %v1091 = vrot.slane %v1089, 4
        %v1092 = vrot.slane %v1006, 7
        %v1093 = vsel %vm1014, %v1091, %v1092
        %v1094 = vrot.slane %v1092, 4
        %v1095 = vrot.slane %v1007, 7
        %v1096 = vsel %vm1014, %v1094, %v1095
        %v1097 = vrot.slane %v1095, 4
        %v1098 = vrot.slane %v1008, 7
        %v1099 = vsel %vm1014, %v1097, %v1098
        %v1100 = vrot.slane %v1098, 4
        %v1101 = vrot.slane %v1009, 7
        %v1102 = vsel %vm1014, %v1100, %v1101
        %v1103 = vrot.slane %v1101, 4
        %v1104 = vrot.slane %v1010, 7
        %v1105 = vsel %vm1014, %v1103, %v1104
        %v1106 = vrot.slane %v1104, 4
        %v1107 = vrot.slane %v1011, 7
        %v1108 = vsel %vm1014, %v1106, %v1107
        %v1109 = vrot.slane %v1107, 4
        %v1110 = vunpack.c.l.b16 %v1015
        %v1111 = vunpack.c.h.b16 %v1015
        %v1112 = vunpack.c.l.b16 0
        %v1113 = vunpack.c.h.b16 0
        %vm1114 = vcmp.ne.s32.totalorder %v1110, %v1112
        %vm1115 = vcmp.ne.s32.totalorder %v1111, %v1113
        %vm1116 = vmpackc.low %vm1115, %vm1114
        %v1117 = vunpack.c.l.b16 %v1018
        %v1118 = vunpack.c.h.b16 %v1018
        %v1119 = vunpack.c.l.b16 0
        %v1120 = vunpack.c.h.b16 0
        %vm1121 = vcmp.ne.s32.totalorder %v1117, %v1119
        %vm1122 = vcmp.ne.s32.totalorder %v1118, %v1120
        %vm1123 = vmpackc.low %vm1122, %vm1121
        %v1124 = vunpack.c.l.b16 %v1021
        %v1125 = vunpack.c.h.b16 %v1021
        %v1126 = vunpack.c.l.b16 0
        %v1127 = vunpack.c.h.b16 0
        %vm1128 = vcmp.ne.s32.totalorder %v1124, %v1126
        %vm1129 = vcmp.ne.s32.totalorder %v1125, %v1127
        %vm1130 = vmpackc.low %vm1129, %vm1128
        %v1131 = vunpack.c.l.b16 %v1024
        %v1132 = vunpack.c.h.b16 %v1024
        %v1133 = vunpack.c.l.b16 0
        %v1134 = vunpack.c.h.b16 0
        %vm1135 = vcmp.ne.s32.totalorder %v1131, %v1133
        %vm1136 = vcmp.ne.s32.totalorder %v1132, %v1134
        %vm1137 = vmpackc.low %vm1136, %vm1135
        %v1138 = vunpack.c.l.b16 %v1027
        %v1139 = vunpack.c.h.b16 %v1027
        %v1140 = vunpack.c.l.b16 0
        %v1141 = vunpack.c.h.b16 0
        %vm1142 = vcmp.ne.s32.totalorder %v1138, %v1140
        %vm1143 = vcmp.ne.s32.totalorder %v1139, %v1141
        %vm1144 = vmpackc.low %vm1143, %vm1142
        %v1145 = vunpack.c.l.b16 %v1030
        %v1146 = vunpack.c.h.b16 %v1030
        %v1147 = vunpack.c.l.b16 0
        %v1148 = vunpack.c.h.b16 0
        %vm1149 = vcmp.ne.s32.totalorder %v1145, %v1147
        %vm1150 = vcmp.ne.s32.totalorder %v1146, %v1148
        %vm1151 = vmpackc.low %vm1150, %vm1149
        %v1152 = vunpack.c.l.b16 %v1033
        %v1153 = vunpack.c.h.b16 %v1033
        %v1154 = vunpack.c.l.b16 0
        %v1155 = vunpack.c.h.b16 0
        %vm1156 = vcmp.ne.s32.totalorder %v1152, %v1154
        %vm1157 = vcmp.ne.s32.totalorder %v1153, %v1155
        %vm1158 = vmpackc.low %vm1157, %vm1156
        %v1159 = vunpack.c.l.b16 %v1036
        %v1160 = vunpack.c.h.b16 %v1036
        %v1161 = vunpack.c.l.b16 0
        %v1162 = vunpack.c.h.b16 0
        %vm1163 = vcmp.ne.s32.totalorder %v1159, %v1161
        %vm1164 = vcmp.ne.s32.totalorder %v1160, %v1162
        %vm1165 = vmpackc.low %vm1164, %vm1163
        %v1166 = vunpack.c.l.b16 %v1039
        %v1167 = vunpack.c.h.b16 %v1039
        %v1168 = vunpack.c.l.b16 0
        %v1169 = vunpack.c.h.b16 0
        %vm1170 = vcmp.ne.s32.totalorder %v1166, %v1168
        %vm1171 = vcmp.ne.s32.totalorder %v1167, %v1169
        %vm1172 = vmpackc.low %vm1171, %vm1170
        %v1173 = vunpack.c.l.b16 %v1042
        %v1174 = vunpack.c.h.b16 %v1042
        %v1175 = vunpack.c.l.b16 0
        %v1176 = vunpack.c.h.b16 0
        %vm1177 = vcmp.ne.s32.totalorder %v1173, %v1175
        %vm1178 = vcmp.ne.s32.totalorder %v1174, %v1176
        %vm1179 = vmpackc.low %vm1178, %vm1177
        %v1180 = vunpack.c.l.b16 %v1045
        %v1181 = vunpack.c.h.b16 %v1045
        %v1182 = vunpack.c.l.b16 0
        %v1183 = vunpack.c.h.b16 0
        %vm1184 = vcmp.ne.s32.totalorder %v1180, %v1182
        %vm1185 = vcmp.ne.s32.totalorder %v1181, %v1183
        %vm1186 = vmpackc.low %vm1185, %vm1184
        %v1187 = vunpack.c.l.b16 %v1048
        %v1188 = vunpack.c.h.b16 %v1048
        %v1189 = vunpack.c.l.b16 0
        %v1190 = vunpack.c.h.b16 0
        %vm1191 = vcmp.ne.s32.totalorder %v1187, %v1189
        %vm1192 = vcmp.ne.s32.totalorder %v1188, %v1190
        %vm1193 = vmpackc.low %vm1192, %vm1191
        %v1194 = vunpack.c.l.b16 %v1051
        %v1195 = vunpack.c.h.b16 %v1051
        %v1196 = vunpack.c.l.b16 0
        %v1197 = vunpack.c.h.b16 0
        %vm1198 = vcmp.ne.s32.totalorder %v1194, %v1196
        %vm1199 = vcmp.ne.s32.totalorder %v1195, %v1197
        %vm1200 = vmpackc.low %vm1199, %vm1198
        %v1201 = vunpack.c.l.b16 %v1054
        %v1202 = vunpack.c.h.b16 %v1054
        %v1203 = vunpack.c.l.b16 0
        %v1204 = vunpack.c.h.b16 0
        %vm1205 = vcmp.ne.s32.totalorder %v1201, %v1203
        %vm1206 = vcmp.ne.s32.totalorder %v1202, %v1204
        %vm1207 = vmpackc.low %vm1206, %vm1205
        %v1208 = vunpack.c.l.b16 %v1057
        %v1209 = vunpack.c.h.b16 %v1057
        %v1210 = vunpack.c.l.b16 0
        %v1211 = vunpack.c.h.b16 0
        %vm1212 = vcmp.ne.s32.totalorder %v1208, %v1210
        %vm1213 = vcmp.ne.s32.totalorder %v1209, %v1211
        %vm1214 = vmpackc.low %vm1213, %vm1212
        %v1215 = vunpack.c.l.b16 %v1060
        %v1216 = vunpack.c.h.b16 %v1060
        %v1217 = vunpack.c.l.b16 0
        %v1218 = vunpack.c.h.b16 0
        %vm1219 = vcmp.ne.s32.totalorder %v1215, %v1217
        %vm1220 = vcmp.ne.s32.totalorder %v1216, %v1218
        %vm1221 = vmpackc.low %vm1220, %vm1219
        %v1222 = vunpack.c.l.b16 %v1063
        %v1223 = vunpack.c.h.b16 %v1063
        %v1224 = vunpack.c.l.b16 0
        %v1225 = vunpack.c.h.b16 0
        %vm1226 = vcmp.ne.s32.totalorder %v1222, %v1224
        %vm1227 = vcmp.ne.s32.totalorder %v1223, %v1225
        %vm1228 = vmpackc.low %vm1227, %vm1226
        %v1229 = vunpack.c.l.b16 %v1066
        %v1230 = vunpack.c.h.b16 %v1066
        %v1231 = vunpack.c.l.b16 0
        %v1232 = vunpack.c.h.b16 0
        %vm1233 = vcmp.ne.s32.totalorder %v1229, %v1231
        %vm1234 = vcmp.ne.s32.totalorder %v1230, %v1232
        %vm1235 = vmpackc.low %vm1234, %vm1233
        %v1236 = vunpack.c.l.b16 %v1069
        %v1237 = vunpack.c.h.b16 %v1069
        %v1238 = vunpack.c.l.b16 0
        %v1239 = vunpack.c.h.b16 0
        %vm1240 = vcmp.ne.s32.totalorder %v1236, %v1238
        %vm1241 = vcmp.ne.s32.totalorder %v1237, %v1239
        %vm1242 = vmpackc.low %vm1241, %vm1240
        %v1243 = vunpack.c.l.b16 %v1072
        %v1244 = vunpack.c.h.b16 %v1072
        %v1245 = vunpack.c.l.b16 0
        %v1246 = vunpack.c.h.b16 0
        %vm1247 = vcmp.ne.s32.totalorder %v1243, %v1245
        %vm1248 = vcmp.ne.s32.totalorder %v1244, %v1246
        %vm1249 = vmpackc.low %vm1248, %vm1247
        %v1250 = vunpack.c.l.b16 %v1075
        %v1251 = vunpack.c.h.b16 %v1075
        %v1252 = vunpack.c.l.b16 0
        %v1253 = vunpack.c.h.b16 0
        %vm1254 = vcmp.ne.s32.totalorder %v1250, %v1252
        %vm1255 = vcmp.ne.s32.totalorder %v1251, %v1253
        %vm1256 = vmpackc.low %vm1255, %vm1254
        %v1257 = vunpack.c.l.b16 %v1078
        %v1258 = vunpack.c.h.b16 %v1078
        %v1259 = vunpack.c.l.b16 0
        %v1260 = vunpack.c.h.b16 0
        %vm1261 = vcmp.ne.s32.totalorder %v1257, %v1259
        %vm1262 = vcmp.ne.s32.totalorder %v1258, %v1260
        %vm1263 = vmpackc.low %vm1262, %vm1261
        %v1264 = vunpack.c.l.b16 %v1081
        %v1265 = vunpack.c.h.b16 %v1081
        %v1266 = vunpack.c.l.b16 0
        %v1267 = vunpack.c.h.b16 0
        %vm1268 = vcmp.ne.s32.totalorder %v1264, %v1266
        %vm1269 = vcmp.ne.s32.totalorder %v1265, %v1267
        %vm1270 = vmpackc.low %vm1269, %vm1268
        %v1271 = vunpack.c.l.b16 %v1084
        %v1272 = vunpack.c.h.b16 %v1084
        %v1273 = vunpack.c.l.b16 0
        %v1274 = vunpack.c.h.b16 0
        %vm1275 = vcmp.ne.s32.totalorder %v1271, %v1273
        %vm1276 = vcmp.ne.s32.totalorder %v1272, %v1274
        %vm1277 = vmpackc.low %vm1276, %vm1275
        %v1278 = vunpack.c.l.b16 %v1087
        %v1279 = vunpack.c.h.b16 %v1087
        %v1280 = vunpack.c.l.b16 0
        %v1281 = vunpack.c.h.b16 0
        %vm1282 = vcmp.ne.s32.totalorder %v1278, %v1280
        %vm1283 = vcmp.ne.s32.totalorder %v1279, %v1281
        %vm1284 = vmpackc.low %vm1283, %vm1282
        %v1285 = vunpack.c.l.b16 %v1090
        %v1286 = vunpack.c.h.b16 %v1090
        %v1287 = vunpack.c.l.b16 0
        %v1288 = vunpack.c.h.b16 0
        %vm1289 = vcmp.ne.s32.totalorder %v1285, %v1287
        %vm1290 = vcmp.ne.s32.totalorder %v1286, %v1288
        %vm1291 = vmpackc.low %vm1290, %vm1289
        %v1292 = vunpack.c.l.b16 %v1093
        %v1293 = vunpack.c.h.b16 %v1093
        %v1294 = vunpack.c.l.b16 0
        %v1295 = vunpack.c.h.b16 0
        %vm1296 = vcmp.ne.s32.totalorder %v1292, %v1294
        %vm1297 = vcmp.ne.s32.totalorder %v1293, %v1295
        %vm1298 = vmpackc.low %vm1297, %vm1296
        %v1299 = vunpack.c.l.b16 %v1096
        %v1300 = vunpack.c.h.b16 %v1096
        %v1301 = vunpack.c.l.b16 0
        %v1302 = vunpack.c.h.b16 0
        %vm1303 = vcmp.ne.s32.totalorder %v1299, %v1301
        %vm1304 = vcmp.ne.s32.totalorder %v1300, %v1302
        %vm1305 = vmpackc.low %vm1304, %vm1303
        %v1306 = vunpack.c.l.b16 %v1099
        %v1307 = vunpack.c.h.b16 %v1099
        %v1308 = vunpack.c.l.b16 0
        %v1309 = vunpack.c.h.b16 0
        %vm1310 = vcmp.ne.s32.totalorder %v1306, %v1308
        %vm1311 = vcmp.ne.s32.totalorder %v1307, %v1309
        %vm1312 = vmpackc.low %vm1311, %vm1310
        %v1313 = vunpack.c.l.b16 %v1102
        %v1314 = vunpack.c.h.b16 %v1102
        %v1315 = vunpack.c.l.b16 0
        %v1316 = vunpack.c.h.b16 0
        %vm1317 = vcmp.ne.s32.totalorder %v1313, %v1315
        %vm1318 = vcmp.ne.s32.totalorder %v1314, %v1316
        %vm1319 = vmpackc.low %vm1318, %vm1317
        %v1320 = vunpack.c.l.b16 %v1105
        %v1321 = vunpack.c.h.b16 %v1105
        %v1322 = vunpack.c.l.b16 0
        %v1323 = vunpack.c.h.b16 0
        %vm1324 = vcmp.ne.s32.totalorder %v1320, %v1322
        %vm1325 = vcmp.ne.s32.totalorder %v1321, %v1323
        %vm1326 = vmpackc.low %vm1325, %vm1324
        %v1327 = vunpack.c.l.b16 %v1108
        %v1328 = vunpack.c.h.b16 %v1108
        %v1329 = vunpack.c.l.b16 0
        %v1330 = vunpack.c.h.b16 0
        %vm1331 = vcmp.ne.s32.totalorder %v1327, %v1329
        %vm1332 = vcmp.ne.s32.totalorder %v1328, %v1330
        %vm1333 = vmpackc.low %vm1332, %vm1331
        %v1334 = vunpack.c.l.b16 %v1109
        %v1335 = vunpack.c.h.b16 %v1109
        %v1336 = vunpack.c.l.b16 0
        %v1337 = vunpack.c.h.b16 0
        %vm1338 = vcmp.ne.s32.totalorder %v1334, %v1336
        %vm1339 = vcmp.ne.s32.totalorder %v1335, %v1337
        %vm1340 = vmpackc.low %vm1339, %vm1338
        %v1341 = vsel %vm1116, %v238, 0
        %v1342 = vsel %vm1123, %v239, 0
        %v1343 = vsel %vm1130, %v240, 0
        %v1344 = vsel %vm1137, %v241, 0
        %v1345 = vsel %vm1144, %v242, 0
        %v1346 = vsel %vm1151, %v243, 0
        %v1347 = vsel %vm1158, %v244, 0
        %v1348 = vsel %vm1165, %v245, 0
        %v1349 = vsel %vm1172, %v246, 0
        %v1350 = vsel %vm1179, %v247, 0
        %v1351 = vsel %vm1186, %v248, 0
        %v1352 = vsel %vm1193, %v249, 0
        %v1353 = vsel %vm1200, %v250, 0
        %v1354 = vsel %vm1207, %v251, 0
        %v1355 = vsel %vm1214, %v252, 0
        %v1356 = vsel %vm1221, %v253, 0
        %v1357 = vsel %vm1228, %v254, 0
        %v1358 = vsel %vm1235, %v255, 0
        %v1359 = vsel %vm1242, %v256, 0
        %v1360 = vsel %vm1249, %v257, 0
        %v1361 = vsel %vm1256, %v258, 0
        %v1362 = vsel %vm1263, %v259, 0
        %v1363 = vsel %vm1270, %v260, 0
        %v1364 = vsel %vm1277, %v261, 0
        %v1365 = vsel %vm1284, %v262, 0
        %v1366 = vsel %vm1291, %v263, 0
        %v1367 = vsel %vm1298, %v264, 0
        %v1368 = vsel %vm1305, %v265, 0
        %v1369 = vsel %vm1312, %v266, 0
        %v1370 = vsel %vm1319, %v267, 0
        %v1371 = vsel %vm1326, %v268, 0
        %v1372 = vsel %vm1333, %v269, 0
        %v1373 = vsel %vm1340, %v270, 0
        %v1374 = vsel %vm820, %v240, 0
        %v1375 = vsel %vm821, %v241, 0
        %v1376 = vsel %vm822, %v242, 0
        %v1377 = vsel %vm823, %v243, 0
        %v1378 = vsel %vm824, %v244, 0
        %v1379 = vsel %vm825, %v245, 0
        %v1380 = vsel %vm826, %v246, 0
        %v1381 = vsel %vm827, %v247, 0
        %v1382 = vsel %vm828, %v248, 0
        %v1383 = vsel %vm829, %v249, 0
        %v1384 = vsel %vm830, %v250, 0
        %v1385 = vsel %vm831, %v251, 0
        %v1386 = vsel %vm832, %v252, 0
        %v1387 = vsel %vm833, %v253, 0
        %v1388 = vsel %vm834, %v254, 0
        %v1389 = vsel %vm835, %v255, 0
        %v1390 = vsel %vm836, %v256, 0
        %v1391 = vsel %vm837, %v257, 0
        %v1392 = vsel %vm838, %v258, 0
        %v1393 = vsel %vm839, %v259, 0
        %v1394 = vsel %vm840, %v260, 0
        %v1395 = vsel %vm841, %v261, 0
        %v1396 = vsel %vm842, %v262, 0
        %v1397 = vsel %vm843, %v263, 0
        %v1398 = vsel %vm844, %v264, 0
        %v1399 = vsel %vm845, %v265, 0
        %v1400 = vsel %vm846, %v266, 0
        %v1401 = vsel %vm847, %v267, 0
        %v1402 = vsel %vm848, %v268, 0
        %v1403 = vsel %vm849, %v269, 0
        %v1404 = vsel %vm850, %v270, 0
        %v1405 = vsel %vm851, %v271, 0
        %v1406 = vsel %vm1116, %v240, 0
        %v1407 = vsel %vm1123, %v241, 0
        %v1408 = vsel %vm1130, %v242, 0
        %v1409 = vsel %vm1137, %v243, 0
        %v1410 = vsel %vm1144, %v244, 0
        %v1411 = vsel %vm1151, %v245, 0
        %v1412 = vsel %vm1158, %v246, 0
        %v1413 = vsel %vm1165, %v247, 0
        %v1414 = vsel %vm1172, %v248, 0
        %v1415 = vsel %vm1179, %v249, 0
        %v1416 = vsel %vm1186, %v250, 0
        %v1417 = vsel %vm1193, %v251, 0
        %v1418 = vsel %vm1200, %v252, 0
        %v1419 = vsel %vm1207, %v253, 0
        %v1420 = vsel %vm1214, %v254, 0
        %v1421 = vsel %vm1221, %v255, 0
        %v1422 = vsel %vm1228, %v256, 0
        %v1423 = vsel %vm1235, %v257, 0
        %v1424 = vsel %vm1242, %v258, 0
        %v1425 = vsel %vm1249, %v259, 0
        %v1426 = vsel %vm1256, %v260, 0
        %v1427 = vsel %vm1263, %v261, 0
        %v1428 = vsel %vm1270, %v262, 0
        %v1429 = vsel %vm1277, %v263, 0
        %v1430 = vsel %vm1284, %v264, 0
        %v1431 = vsel %vm1291, %v265, 0
        %v1432 = vsel %vm1298, %v266, 0
        %v1433 = vsel %vm1305, %v267, 0
        %v1434 = vsel %vm1312, %v268, 0
        %v1435 = vsel %vm1319, %v269, 0
        %v1436 = vsel %vm1326, %v270, 0
        %v1437 = vsel %vm1333, %v271, 0
        %v1438 = vsel %vm1340, %v272, 0
        %v1439 = vsel %vm820, %v242, 0
        %v1440 = vsel %vm821, %v243, 0
        %v1441 = vsel %vm822, %v244, 0
        %v1442 = vsel %vm823, %v245, 0
        %v1443 = vsel %vm824, %v246, 0
        %v1444 = vsel %vm825, %v247, 0
        %v1445 = vsel %vm826, %v248, 0
        %v1446 = vsel %vm827, %v249, 0
        %v1447 = vsel %vm828, %v250, 0
        %v1448 = vsel %vm829, %v251, 0
        %v1449 = vsel %vm830, %v252, 0
        %v1450 = vsel %vm831, %v253, 0
        %v1451 = vsel %vm832, %v254, 0
        %v1452 = vsel %vm833, %v255, 0
        %v1453 = vsel %vm834, %v256, 0
        %v1454 = vsel %vm835, %v257, 0
        %v1455 = vsel %vm836, %v258, 0
        %v1456 = vsel %vm837, %v259, 0
        %v1457 = vsel %vm838, %v260, 0
        %v1458 = vsel %vm839, %v261, 0
        %v1459 = vsel %vm840, %v262, 0
        %v1460 = vsel %vm841, %v263, 0
        %v1461 = vsel %vm842, %v264, 0
        %v1462 = vsel %vm843, %v265, 0
        %v1463 = vsel %vm844, %v266, 0
        %v1464 = vsel %vm845, %v267, 0
        %v1465 = vsel %vm846, %v268, 0
        %v1466 = vsel %vm847, %v269, 0
        %v1467 = vsel %vm848, %v270, 0
        %v1468 = vsel %vm849, %v271, 0
        %v1469 = vsel %vm850, %v272, 0
        %v1470 = vsel %vm851, %v273, 0
        %v1471 = vsel %vm1116, %v242, 0
        %v1472 = vsel %vm1123, %v243, 0
        %v1473 = vsel %vm1130, %v244, 0
        %v1474 = vsel %vm1137, %v245, 0
        %v1475 = vsel %vm1144, %v246, 0
        %v1476 = vsel %vm1151, %v247, 0
        %v1477 = vsel %vm1158, %v248, 0
        %v1478 = vsel %vm1165, %v249, 0
        %v1479 = vsel %vm1172, %v250, 0
        %v1480 = vsel %vm1179, %v251, 0
        %v1481 = vsel %vm1186, %v252, 0
        %v1482 = vsel %vm1193, %v253, 0
        %v1483 = vsel %vm1200, %v254, 0
        %v1484 = vsel %vm1207, %v255, 0
        %v1485 = vsel %vm1214, %v256, 0
        %v1486 = vsel %vm1221, %v257, 0
        %v1487 = vsel %vm1228, %v258, 0
        %v1488 = vsel %vm1235, %v259, 0
        %v1489 = vsel %vm1242, %v260, 0
        %v1490 = vsel %vm1249, %v261, 0
        %v1491 = vsel %vm1256, %v262, 0
        %v1492 = vsel %vm1263, %v263, 0
        %v1493 = vsel %vm1270, %v264, 0
        %v1494 = vsel %vm1277, %v265, 0
        %v1495 = vsel %vm1284, %v266, 0
        %v1496 = vsel %vm1291, %v267, 0
        %v1497 = vsel %vm1298, %v268, 0
        %v1498 = vsel %vm1305, %v269, 0
        %v1499 = vsel %vm1312, %v270, 0
        %v1500 = vsel %vm1319, %v271, 0
        %v1501 = vsel %vm1326, %v272, 0
        %v1502 = vsel %vm1333, %v273, 0
        %v1503 = vsel %vm1340, %v274, 0
        %v1536 = vunpack.c.l.b16 %v852
        %v1537 = vunpack.c.l.b16 %v853
        %v1538 = vunpack.c.l.b16 %v854
        %v1539 = vunpack.c.l.b16 %v855
        %v1540 = vunpack.c.l.b16 %v856
        %v1541 = vunpack.c.l.b16 %v857
        %v1542 = vunpack.c.l.b16 %v858
        %v1543 = vunpack.c.l.b16 %v859
        %v1544 = vunpack.c.l.b16 %v860
        %v1545 = vunpack.c.l.b16 %v861
        %v1546 = vunpack.c.l.b16 %v862
        %v1547 = vunpack.c.l.b16 %v863
        %v1548 = vunpack.c.l.b16 %v864
        %v1549 = vunpack.c.l.b16 %v865
        %v1550 = vunpack.c.l.b16 %v866
        %v1551 = vunpack.c.l.b16 %v867
        %v1552 = vunpack.c.l.b16 %v868
        %v1553 = vunpack.c.l.b16 %v869
        %v1554 = vunpack.c.l.b16 %v870
        %v1555 = vunpack.c.l.b16 %v871
        %v1556 = vunpack.c.l.b16 %v872
        %v1557 = vunpack.c.l.b16 %v873
        %v1558 = vunpack.c.l.b16 %v874
        %v1559 = vunpack.c.l.b16 %v875
        %v1560 = vunpack.c.l.b16 %v876
        %v1561 = vunpack.c.l.b16 %v877
        %v1562 = vunpack.c.l.b16 %v878
        %v1563 = vunpack.c.l.b16 %v879
        %v1564 = vunpack.c.l.b16 %v880
        %v1565 = vunpack.c.l.b16 %v881
        %v1566 = vunpack.c.l.b16 %v882
        %v1567 = vunpack.c.l.b16 %v883
        %v1568 = vpack.c.b16 %v1537, %v1536
        %v1569 = vpack.c.b16 %v1539, %v1538
        %v1570 = vpack.c.b16 %v1541, %v1540
        %v1571 = vpack.c.b16 %v1543, %v1542
        %v1572 = vpack.c.b16 %v1545, %v1544
        %v1573 = vpack.c.b16 %v1547, %v1546
        %v1574 = vpack.c.b16 %v1549, %v1548
        %v1575 = vpack.c.b16 %v1551, %v1550
        %v1576 = vpack.c.b16 %v1553, %v1552
        %v1577 = vpack.c.b16 %v1555, %v1554
        %v1578 = vpack.c.b16 %v1557, %v1556
        %v1579 = vpack.c.b16 %v1559, %v1558
        %v1580 = vpack.c.b16 %v1561, %v1560
        %v1581 = vpack.c.b16 %v1563, %v1562
        %v1582 = vpack.c.b16 %v1565, %v1564
        %v1583 = vpack.c.b16 %v1567, %v1566
        %v1633 = vunpack.c.l.b16 %v238
        %v1634 = vunpack.c.l.b16 %v239
        %v1635 = vunpack.c.l.b16 %v240
        %v1636 = vunpack.c.l.b16 %v241
        %v1637 = vunpack.c.l.b16 %v242
        %v1638 = vunpack.c.l.b16 %v243
        %v1639 = vunpack.c.l.b16 %v244
        %v1640 = vunpack.c.l.b16 %v245
        %v1641 = vunpack.c.l.b16 %v246
        %v1642 = vunpack.c.l.b16 %v247
        %v1643 = vunpack.c.l.b16 %v248
        %v1644 = vunpack.c.l.b16 %v249
        %v1645 = vunpack.c.l.b16 %v250
        %v1646 = vunpack.c.l.b16 %v251
        %v1647 = vunpack.c.l.b16 %v252
        %v1648 = vunpack.c.l.b16 %v253
        %v1649 = vunpack.c.l.b16 %v254
        %v1650 = vunpack.c.l.b16 %v255
        %v1651 = vunpack.c.l.b16 %v256
        %v1652 = vunpack.c.l.b16 %v257
        %v1653 = vunpack.c.l.b16 %v258
        %v1654 = vunpack.c.l.b16 %v259
        %v1655 = vunpack.c.l.b16 %v260
        %v1656 = vunpack.c.l.b16 %v261
        %v1657 = vunpack.c.l.b16 %v262
        %v1658 = vunpack.c.l.b16 %v263
        %v1659 = vunpack.c.l.b16 %v264
        %v1660 = vunpack.c.l.b16 %v265
        %v1661 = vunpack.c.l.b16 %v266
        %v1662 = vunpack.c.l.b16 %v267
        %v1663 = vunpack.c.l.b16 %v268
        %v1664 = vunpack.c.l.b16 %v269
        %v1665 = vunpack.c.l.b16 %v270
        %v1666 = vpack.c.b16 %v1634, %v1633
        %v1667 = vpack.c.b16 %v1636, %v1635
        %v1668 = vpack.c.b16 %v1638, %v1637
        %v1669 = vpack.c.b16 %v1640, %v1639
        %v1670 = vpack.c.b16 %v1642, %v1641
        %v1671 = vpack.c.b16 %v1644, %v1643
        %v1672 = vpack.c.b16 %v1646, %v1645
        %v1673 = vpack.c.b16 %v1648, %v1647
        %v1674 = vpack.c.b16 %v1650, %v1649
        %v1675 = vpack.c.b16 %v1652, %v1651
        %v1676 = vpack.c.b16 %v1654, %v1653
        %v1677 = vpack.c.b16 %v1656, %v1655
        %v1678 = vpack.c.b16 %v1658, %v1657
        %v1679 = vpack.c.b16 %v1660, %v1659
        %v1680 = vpack.c.b16 %v1662, %v1661
        %v1681 = vpack.c.b16 %v1664, %v1663
        %v1682 = vpack.c.b16 %v1665, %v1665
        %vm1683 = vsmask.f32 7424
        %v1685 = vshrl.u32 %v1666, 16
        %v1687 = vshll.u32 %v1666, 16
        %v1689 = vrot.slane %v1687, 1
        %v1690 = vor.u32 %v1685, %v1689
        %v1692 = vshll.u32 %v1667, 16
        %v1694 = vrot.slane %v1692, 1
        %v1695 = vsel %vm1683, %v1690, %v1694
        %v1696 = vshrl.u32 %v1667, 16
        %v1698 = vor.u32 %v1696, %v1694
        %v1700 = vshll.u32 %v1668, 16
        %v1702 = vrot.slane %v1700, 1
        %v1703 = vsel %vm1683, %v1698, %v1702
        %v1704 = vshrl.u32 %v1668, 16
        %v1706 = vor.u32 %v1704, %v1702
        %v1708 = vshll.u32 %v1669, 16
        %v1710 = vrot.slane %v1708, 1
        %v1711 = vsel %vm1683, %v1706, %v1710
        %v1712 = vshrl.u32 %v1669, 16
        %v1714 = vor.u32 %v1712, %v1710
        %v1716 = vshll.u32 %v1670, 16
        %v1718 = vrot.slane %v1716, 1
        %v1719 = vsel %vm1683, %v1714, %v1718
        %v1720 = vshrl.u32 %v1670, 16
        %v1722 = vor.u32 %v1720, %v1718
        %v1724 = vshll.u32 %v1671, 16
        %v1726 = vrot.slane %v1724, 1
        %v1727 = vsel %vm1683, %v1722, %v1726
        %v1728 = vshrl.u32 %v1671, 16
        %v1730 = vor.u32 %v1728, %v1726
        %v1732 = vshll.u32 %v1672, 16
        %v1734 = vrot.slane %v1732, 1
        %v1735 = vsel %vm1683, %v1730, %v1734
        %v1736 = vshrl.u32 %v1672, 16
        %v1738 = vor.u32 %v1736, %v1734
        %v1740 = vshll.u32 %v1673, 16
        %v1742 = vrot.slane %v1740, 1
        %v1743 = vsel %vm1683, %v1738, %v1742
        %v1744 = vshrl.u32 %v1673, 16
        %v1746 = vor.u32 %v1744, %v1742
        %v1748 = vshll.u32 %v1674, 16
        %v1750 = vrot.slane %v1748, 1
        %v1751 = vsel %vm1683, %v1746, %v1750
        %v1752 = vshrl.u32 %v1674, 16
        %v1754 = vor.u32 %v1752, %v1750
        %v1756 = vshll.u32 %v1675, 16
        %v1758 = vrot.slane %v1756, 1
        %v1759 = vsel %vm1683, %v1754, %v1758
        %v1760 = vshrl.u32 %v1675, 16
        %v1762 = vor.u32 %v1760, %v1758
        %v1764 = vshll.u32 %v1676, 16
        %v1766 = vrot.slane %v1764, 1
        %v1767 = vsel %vm1683, %v1762, %v1766
        %v1768 = vshrl.u32 %v1676, 16
        %v1770 = vor.u32 %v1768, %v1766
        %v1772 = vshll.u32 %v1677, 16
        %v1774 = vrot.slane %v1772, 1
        %v1775 = vsel %vm1683, %v1770, %v1774
        %v1776 = vshrl.u32 %v1677, 16
        %v1778 = vor.u32 %v1776, %v1774
        %v1780 = vshll.u32 %v1678, 16
        %v1782 = vrot.slane %v1780, 1
        %v1783 = vsel %vm1683, %v1778, %v1782
        %v1784 = vshrl.u32 %v1678, 16
        %v1786 = vor.u32 %v1784, %v1782
        %v1788 = vshll.u32 %v1679, 16
        %v1790 = vrot.slane %v1788, 1
        %v1791 = vsel %vm1683, %v1786, %v1790
        %v1792 = vshrl.u32 %v1679, 16
        %v1794 = vor.u32 %v1792, %v1790
        %v1796 = vshll.u32 %v1680, 16
        %v1798 = vrot.slane %v1796, 1
        %v1799 = vsel %vm1683, %v1794, %v1798
        %v1800 = vshrl.u32 %v1680, 16
        %v1802 = vor.u32 %v1800, %v1798
        %v1804 = vshll.u32 %v1681, 16
        %v1806 = vrot.slane %v1804, 1
        %v1807 = vsel %vm1683, %v1802, %v1806
        %v1808 = vshrl.u32 %v1681, 16
        %v1810 = vor.u32 %v1808, %v1806
        %v1812 = vshll.u32 %v1682, 16
        %v1814 = vrot.slane %v1812, 1
        %v1815 = vsel %vm1683, %v1810, %v1814
        %v1865 = vunpack.c.l.b16 %v1341
        %v1866 = vunpack.c.l.b16 %v1342
        %v1867 = vunpack.c.l.b16 %v1343
        %v1868 = vunpack.c.l.b16 %v1344
        %v1869 = vunpack.c.l.b16 %v1345
        %v1870 = vunpack.c.l.b16 %v1346
        %v1871 = vunpack.c.l.b16 %v1347
        %v1872 = vunpack.c.l.b16 %v1348
        %v1873 = vunpack.c.l.b16 %v1349
        %v1874 = vunpack.c.l.b16 %v1350
        %v1875 = vunpack.c.l.b16 %v1351
        %v1876 = vunpack.c.l.b16 %v1352
        %v1877 = vunpack.c.l.b16 %v1353
        %v1878 = vunpack.c.l.b16 %v1354
        %v1879 = vunpack.c.l.b16 %v1355
        %v1880 = vunpack.c.l.b16 %v1356
        %v1881 = vunpack.c.l.b16 %v1357
        %v1882 = vunpack.c.l.b16 %v1358
        %v1883 = vunpack.c.l.b16 %v1359
        %v1884 = vunpack.c.l.b16 %v1360
        %v1885 = vunpack.c.l.b16 %v1361
        %v1886 = vunpack.c.l.b16 %v1362
        %v1887 = vunpack.c.l.b16 %v1363
        %v1888 = vunpack.c.l.b16 %v1364
        %v1889 = vunpack.c.l.b16 %v1365
        %v1890 = vunpack.c.l.b16 %v1366
        %v1891 = vunpack.c.l.b16 %v1367
        %v1892 = vunpack.c.l.b16 %v1368
        %v1893 = vunpack.c.l.b16 %v1369
        %v1894 = vunpack.c.l.b16 %v1370
        %v1895 = vunpack.c.l.b16 %v1371
        %v1896 = vunpack.c.l.b16 %v1372
        %v1897 = vunpack.c.l.b16 %v1373
        %v1898 = vpack.c.b16 %v1866, %v1865
        %v1899 = vpack.c.b16 %v1868, %v1867
        %v1900 = vpack.c.b16 %v1870, %v1869
        %v1901 = vpack.c.b16 %v1872, %v1871
        %v1902 = vpack.c.b16 %v1874, %v1873
        %v1903 = vpack.c.b16 %v1876, %v1875
        %v1904 = vpack.c.b16 %v1878, %v1877
        %v1905 = vpack.c.b16 %v1880, %v1879
        %v1906 = vpack.c.b16 %v1882, %v1881
        %v1907 = vpack.c.b16 %v1884, %v1883
        %v1908 = vpack.c.b16 %v1886, %v1885
        %v1909 = vpack.c.b16 %v1888, %v1887
        %v1910 = vpack.c.b16 %v1890, %v1889
        %v1911 = vpack.c.b16 %v1892, %v1891
        %v1912 = vpack.c.b16 %v1894, %v1893
        %v1913 = vpack.c.b16 %v1896, %v1895
        %v1914 = vpack.c.b16 %v1897, %v1897
        %vm1915 = vcmask 1046528
        %v1916 = vrot.slane %v1898, 1
        %v1917 = vrot.slane %v1899, 1
        %v1918 = vsel %vm1915, %v1916, %v1917
        %v1919 = vrot.slane %v1900, 1
        %v1920 = vsel %vm1915, %v1917, %v1919
        %v1921 = vrot.slane %v1901, 1
        %v1922 = vsel %vm1915, %v1919, %v1921
        %v1923 = vrot.slane %v1902, 1
        %v1924 = vsel %vm1915, %v1921, %v1923
        %v1925 = vrot.slane %v1903, 1
        %v1926 = vsel %vm1915, %v1923, %v1925
        %v1927 = vrot.slane %v1904, 1
        %v1928 = vsel %vm1915, %v1925, %v1927
        %v1929 = vrot.slane %v1905, 1
        %v1930 = vsel %vm1915, %v1927, %v1929
        %v1931 = vrot.slane %v1906, 1
        %v1932 = vsel %vm1915, %v1929, %v1931
        %v1933 = vrot.slane %v1907, 1
        %v1934 = vsel %vm1915, %v1931, %v1933
        %v1935 = vrot.slane %v1908, 1
        %v1936 = vsel %vm1915, %v1933, %v1935
        %v1937 = vrot.slane %v1909, 1
        %v1938 = vsel %vm1915, %v1935, %v1937
        %v1939 = vrot.slane %v1910, 1
        %v1940 = vsel %vm1915, %v1937, %v1939
        %v1941 = vrot.slane %v1911, 1
        %v1942 = vsel %vm1915, %v1939, %v1941
        %v1943 = vrot.slane %v1912, 1
        %v1944 = vsel %vm1915, %v1941, %v1943
        %v1945 = vrot.slane %v1913, 1
        %v1946 = vsel %vm1915, %v1943, %v1945
        %v1947 = vrot.slane %v1914, 1
        %v1948 = vsel %vm1915, %v1945, %v1947
        %v1997 = vunpack.c.l.b16 %v1374
        %v1998 = vunpack.c.l.b16 %v1375
        %v1999 = vunpack.c.l.b16 %v1376
        %v2000 = vunpack.c.l.b16 %v1377
        %v2001 = vunpack.c.l.b16 %v1378
        %v2002 = vunpack.c.l.b16 %v1379
        %v2003 = vunpack.c.l.b16 %v1380
        %v2004 = vunpack.c.l.b16 %v1381
        %v2005 = vunpack.c.l.b16 %v1382
        %v2006 = vunpack.c.l.b16 %v1383
        %v2007 = vunpack.c.l.b16 %v1384
        %v2008 = vunpack.c.l.b16 %v1385
        %v2009 = vunpack.c.l.b16 %v1386
        %v2010 = vunpack.c.l.b16 %v1387
        %v2011 = vunpack.c.l.b16 %v1388
        %v2012 = vunpack.c.l.b16 %v1389
        %v2013 = vunpack.c.l.b16 %v1390
        %v2014 = vunpack.c.l.b16 %v1391
        %v2015 = vunpack.c.l.b16 %v1392
        %v2016 = vunpack.c.l.b16 %v1393
        %v2017 = vunpack.c.l.b16 %v1394
        %v2018 = vunpack.c.l.b16 %v1395
        %v2019 = vunpack.c.l.b16 %v1396
        %v2020 = vunpack.c.l.b16 %v1397
        %v2021 = vunpack.c.l.b16 %v1398
        %v2022 = vunpack.c.l.b16 %v1399
        %v2023 = vunpack.c.l.b16 %v1400
        %v2024 = vunpack.c.l.b16 %v1401
        %v2025 = vunpack.c.l.b16 %v1402
        %v2026 = vunpack.c.l.b16 %v1403
        %v2027 = vunpack.c.l.b16 %v1404
        %v2028 = vunpack.c.l.b16 %v1405
        %v2029 = vpack.c.b16 %v1998, %v1997
        %v2030 = vpack.c.b16 %v2000, %v1999
        %v2031 = vpack.c.b16 %v2002, %v2001
        %v2032 = vpack.c.b16 %v2004, %v2003
        %v2033 = vpack.c.b16 %v2006, %v2005
        %v2034 = vpack.c.b16 %v2008, %v2007
        %v2035 = vpack.c.b16 %v2010, %v2009
        %v2036 = vpack.c.b16 %v2012, %v2011
        %v2037 = vpack.c.b16 %v2014, %v2013
        %v2038 = vpack.c.b16 %v2016, %v2015
        %v2039 = vpack.c.b16 %v2018, %v2017
        %v2040 = vpack.c.b16 %v2020, %v2019
        %v2041 = vpack.c.b16 %v2022, %v2021
        %v2042 = vpack.c.b16 %v2024, %v2023
        %v2043 = vpack.c.b16 %v2026, %v2025
        %v2044 = vpack.c.b16 %v2028, %v2027
        %v2063 = vunpack.c.l.b16 %v271
        %v2064 = vunpack.c.l.b16 %v272
        %v2065 = vpack.c.b16 %v2063, %v1665
        %v2066 = vpack.c.b16 %v2064, %v2064
        %v2068 = vshll.u32 %v2065, 16
        %v2070 = vrot.slane %v2068, 1
        %v2071 = vsel %vm1683, %v1810, %v2070
        %v2072 = vshrl.u32 %v2065, 16
        %v2074 = vor.u32 %v2072, %v2070
        %v2076 = vshll.u32 %v2066, 16
        %v2078 = vrot.slane %v2076, 1
        %v2079 = vsel %vm1683, %v2074, %v2078
        %v2115 = vunpack.c.l.b16 %v1406
        %v2116 = vunpack.c.l.b16 %v1407
        %v2117 = vunpack.c.l.b16 %v1408
        %v2118 = vunpack.c.l.b16 %v1409
        %v2119 = vunpack.c.l.b16 %v1410
        %v2120 = vunpack.c.l.b16 %v1411
        %v2121 = vunpack.c.l.b16 %v1412
        %v2122 = vunpack.c.l.b16 %v1413
        %v2123 = vunpack.c.l.b16 %v1414
        %v2124 = vunpack.c.l.b16 %v1415
        %v2125 = vunpack.c.l.b16 %v1416
        %v2126 = vunpack.c.l.b16 %v1417
        %v2127 = vunpack.c.l.b16 %v1418
        %v2128 = vunpack.c.l.b16 %v1419
        %v2129 = vunpack.c.l.b16 %v1420
        %v2130 = vunpack.c.l.b16 %v1421
        %v2131 = vunpack.c.l.b16 %v1422
        %v2132 = vunpack.c.l.b16 %v1423
        %v2133 = vunpack.c.l.b16 %v1424
        %v2134 = vunpack.c.l.b16 %v1425
        %v2135 = vunpack.c.l.b16 %v1426
        %v2136 = vunpack.c.l.b16 %v1427
        %v2137 = vunpack.c.l.b16 %v1428
        %v2138 = vunpack.c.l.b16 %v1429
        %v2139 = vunpack.c.l.b16 %v1430
        %v2140 = vunpack.c.l.b16 %v1431
        %v2141 = vunpack.c.l.b16 %v1432
        %v2142 = vunpack.c.l.b16 %v1433
        %v2143 = vunpack.c.l.b16 %v1434
        %v2144 = vunpack.c.l.b16 %v1435
        %v2145 = vunpack.c.l.b16 %v1436
        %v2146 = vunpack.c.l.b16 %v1437
        %v2147 = vunpack.c.l.b16 %v1438
        %v2148 = vpack.c.b16 %v2116, %v2115
        %v2149 = vpack.c.b16 %v2118, %v2117
        %v2150 = vpack.c.b16 %v2120, %v2119
        %v2151 = vpack.c.b16 %v2122, %v2121
        %v2152 = vpack.c.b16 %v2124, %v2123
        %v2153 = vpack.c.b16 %v2126, %v2125
        %v2154 = vpack.c.b16 %v2128, %v2127
        %v2155 = vpack.c.b16 %v2130, %v2129
        %v2156 = vpack.c.b16 %v2132, %v2131
        %v2157 = vpack.c.b16 %v2134, %v2133
        %v2158 = vpack.c.b16 %v2136, %v2135
        %v2159 = vpack.c.b16 %v2138, %v2137
        %v2160 = vpack.c.b16 %v2140, %v2139
        %v2161 = vpack.c.b16 %v2142, %v2141
        %v2162 = vpack.c.b16 %v2144, %v2143
        %v2163 = vpack.c.b16 %v2146, %v2145
        %v2164 = vpack.c.b16 %v2147, %v2147
        %v2165 = vrot.slane %v2148, 1
        %v2166 = vrot.slane %v2149, 1
        %v2167 = vsel %vm1915, %v2165, %v2166
        %v2168 = vrot.slane %v2150, 1
        %v2169 = vsel %vm1915, %v2166, %v2168
        %v2170 = vrot.slane %v2151, 1
        %v2171 = vsel %vm1915, %v2168, %v2170
        %v2172 = vrot.slane %v2152, 1
        %v2173 = vsel %vm1915, %v2170, %v2172
        %v2174 = vrot.slane %v2153, 1
        %v2175 = vsel %vm1915, %v2172, %v2174
        %v2176 = vrot.slane %v2154, 1
        %v2177 = vsel %vm1915, %v2174, %v2176
        %v2178 = vrot.slane %v2155, 1
        %v2179 = vsel %vm1915, %v2176, %v2178
        %v2180 = vrot.slane %v2156, 1
        %v2181 = vsel %vm1915, %v2178, %v2180
        %v2182 = vrot.slane %v2157, 1
        %v2183 = vsel %vm1915, %v2180, %v2182
        %v2184 = vrot.slane %v2158, 1
        %v2185 = vsel %vm1915, %v2182, %v2184
        %v2186 = vrot.slane %v2159, 1
        %v2187 = vsel %vm1915, %v2184, %v2186
        %v2188 = vrot.slane %v2160, 1
        %v2189 = vsel %vm1915, %v2186, %v2188
        %v2190 = vrot.slane %v2161, 1
        %v2191 = vsel %vm1915, %v2188, %v2190
        %v2192 = vrot.slane %v2162, 1
        %v2193 = vsel %vm1915, %v2190, %v2192
        %v2194 = vrot.slane %v2163, 1
        %v2195 = vsel %vm1915, %v2192, %v2194
        %v2196 = vrot.slane %v2164, 1
        %v2197 = vsel %vm1915, %v2194, %v2196
        %v2246 = vunpack.c.l.b16 %v1439
        %v2247 = vunpack.c.l.b16 %v1440
        %v2248 = vunpack.c.l.b16 %v1441
        %v2249 = vunpack.c.l.b16 %v1442
        %v2250 = vunpack.c.l.b16 %v1443
        %v2251 = vunpack.c.l.b16 %v1444
        %v2252 = vunpack.c.l.b16 %v1445
        %v2253 = vunpack.c.l.b16 %v1446
        %v2254 = vunpack.c.l.b16 %v1447
        %v2255 = vunpack.c.l.b16 %v1448
        %v2256 = vunpack.c.l.b16 %v1449
        %v2257 = vunpack.c.l.b16 %v1450
        %v2258 = vunpack.c.l.b16 %v1451
        %v2259 = vunpack.c.l.b16 %v1452
        %v2260 = vunpack.c.l.b16 %v1453
        %v2261 = vunpack.c.l.b16 %v1454
        %v2262 = vunpack.c.l.b16 %v1455
        %v2263 = vunpack.c.l.b16 %v1456
        %v2264 = vunpack.c.l.b16 %v1457
        %v2265 = vunpack.c.l.b16 %v1458
        %v2266 = vunpack.c.l.b16 %v1459
        %v2267 = vunpack.c.l.b16 %v1460
        %v2268 = vunpack.c.l.b16 %v1461
        %v2269 = vunpack.c.l.b16 %v1462
        %v2270 = vunpack.c.l.b16 %v1463
        %v2271 = vunpack.c.l.b16 %v1464
        %v2272 = vunpack.c.l.b16 %v1465
        %v2273 = vunpack.c.l.b16 %v1466
        %v2274 = vunpack.c.l.b16 %v1467
        %v2275 = vunpack.c.l.b16 %v1468
        %v2276 = vunpack.c.l.b16 %v1469
        %v2277 = vunpack.c.l.b16 %v1470
        %v2278 = vpack.c.b16 %v2247, %v2246
        %v2279 = vpack.c.b16 %v2249, %v2248
        %v2280 = vpack.c.b16 %v2251, %v2250
        %v2281 = vpack.c.b16 %v2253, %v2252
        %v2282 = vpack.c.b16 %v2255, %v2254
        %v2283 = vpack.c.b16 %v2257, %v2256
        %v2284 = vpack.c.b16 %v2259, %v2258
        %v2285 = vpack.c.b16 %v2261, %v2260
        %v2286 = vpack.c.b16 %v2263, %v2262
        %v2287 = vpack.c.b16 %v2265, %v2264
        %v2288 = vpack.c.b16 %v2267, %v2266
        %v2289 = vpack.c.b16 %v2269, %v2268
        %v2290 = vpack.c.b16 %v2271, %v2270
        %v2291 = vpack.c.b16 %v2273, %v2272
        %v2292 = vpack.c.b16 %v2275, %v2274
        %v2293 = vpack.c.b16 %v2277, %v2276
        %v2312 = vunpack.c.l.b16 %v273
        %v2313 = vunpack.c.l.b16 %v274
        %v2314 = vpack.c.b16 %v2312, %v2064
        %v2315 = vpack.c.b16 %v2313, %v2313
        %v2317 = vshll.u32 %v2314, 16
        %v2319 = vrot.slane %v2317, 1
        %v2320 = vsel %vm1683, %v2074, %v2319
        %v2321 = vshrl.u32 %v2314, 16
        %v2323 = vor.u32 %v2321, %v2319
        %v2325 = vshll.u32 %v2315, 16
        %v2327 = vrot.slane %v2325, 1
        %v2328 = vsel %vm1683, %v2323, %v2327
        %v2364 = vunpack.c.l.b16 %v1471
        %v2365 = vunpack.c.l.b16 %v1472
        %v2366 = vunpack.c.l.b16 %v1473
        %v2367 = vunpack.c.l.b16 %v1474
        %v2368 = vunpack.c.l.b16 %v1475
        %v2369 = vunpack.c.l.b16 %v1476
        %v2370 = vunpack.c.l.b16 %v1477
        %v2371 = vunpack.c.l.b16 %v1478
        %v2372 = vunpack.c.l.b16 %v1479
        %v2373 = vunpack.c.l.b16 %v1480
        %v2374 = vunpack.c.l.b16 %v1481
        %v2375 = vunpack.c.l.b16 %v1482
        %v2376 = vunpack.c.l.b16 %v1483
        %v2377 = vunpack.c.l.b16 %v1484
        %v2378 = vunpack.c.l.b16 %v1485
        %v2379 = vunpack.c.l.b16 %v1486
        %v2380 = vunpack.c.l.b16 %v1487
        %v2381 = vunpack.c.l.b16 %v1488
        %v2382 = vunpack.c.l.b16 %v1489
        %v2383 = vunpack.c.l.b16 %v1490
        %v2384 = vunpack.c.l.b16 %v1491
        %v2385 = vunpack.c.l.b16 %v1492
        %v2386 = vunpack.c.l.b16 %v1493
        %v2387 = vunpack.c.l.b16 %v1494
        %v2388 = vunpack.c.l.b16 %v1495
        %v2389 = vunpack.c.l.b16 %v1496
        %v2390 = vunpack.c.l.b16 %v1497
        %v2391 = vunpack.c.l.b16 %v1498
        %v2392 = vunpack.c.l.b16 %v1499
        %v2393 = vunpack.c.l.b16 %v1500
        %v2394 = vunpack.c.l.b16 %v1501
        %v2395 = vunpack.c.l.b16 %v1502
        %v2396 = vunpack.c.l.b16 %v1503
        %v2397 = vpack.c.b16 %v2365, %v2364
        %v2398 = vpack.c.b16 %v2367, %v2366
        %v2399 = vpack.c.b16 %v2369, %v2368
        %v2400 = vpack.c.b16 %v2371, %v2370
        %v2401 = vpack.c.b16 %v2373, %v2372
        %v2402 = vpack.c.b16 %v2375, %v2374
        %v2403 = vpack.c.b16 %v2377, %v2376
        %v2404 = vpack.c.b16 %v2379, %v2378
        %v2405 = vpack.c.b16 %v2381, %v2380
        %v2406 = vpack.c.b16 %v2383, %v2382
        %v2407 = vpack.c.b16 %v2385, %v2384
        %v2408 = vpack.c.b16 %v2387, %v2386
        %v2409 = vpack.c.b16 %v2389, %v2388
        %v2410 = vpack.c.b16 %v2391, %v2390
        %v2411 = vpack.c.b16 %v2393, %v2392
        %v2412 = vpack.c.b16 %v2395, %v2394
        %v2413 = vpack.c.b16 %v2396, %v2396
        %v2414 = vrot.slane %v2397, 1
        %v2415 = vrot.slane %v2398, 1
        %v2416 = vsel %vm1915, %v2414, %v2415
        %v2417 = vrot.slane %v2399, 1
        %v2418 = vsel %vm1915, %v2415, %v2417
        %v2419 = vrot.slane %v2400, 1
        %v2420 = vsel %vm1915, %v2417, %v2419
        %v2421 = vrot.slane %v2401, 1
        %v2422 = vsel %vm1915, %v2419, %v2421
        %v2423 = vrot.slane %v2402, 1
        %v2424 = vsel %vm1915, %v2421, %v2423
        %v2425 = vrot.slane %v2403, 1
        %v2426 = vsel %vm1915, %v2423, %v2425
        %v2427 = vrot.slane %v2404, 1
        %v2428 = vsel %vm1915, %v2425, %v2427
        %v2429 = vrot.slane %v2405, 1
        %v2430 = vsel %vm1915, %v2427, %v2429
        %v2431 = vrot.slane %v2406, 1
        %v2432 = vsel %vm1915, %v2429, %v2431
        %v2433 = vrot.slane %v2407, 1
        %v2434 = vsel %vm1915, %v2431, %v2433
        %v2435 = vrot.slane %v2408, 1
        %v2436 = vsel %vm1915, %v2433, %v2435
        %v2437 = vrot.slane %v2409, 1
        %v2438 = vsel %vm1915, %v2435, %v2437
        %v2439 = vrot.slane %v2410, 1
        %v2440 = vsel %vm1915, %v2437, %v2439
        %v2441 = vrot.slane %v2411, 1
        %v2442 = vsel %vm1915, %v2439, %v2441
        %v2443 = vrot.slane %v2412, 1
        %v2444 = vsel %vm1915, %v2441, %v2443
        %v2445 = vrot.slane %v2413, 1
        %v2446 = vsel %vm1915, %v2443, %v2445
        %v2463 = vld [vmem:[%s1] sm:$0xf]
        %v2464 = vld [vmem:[%s1 + $0x4] sm:$0xf]
        %v2465 = vld [vmem:[%s1 + $0x8] sm:$0xf]
        %v2466 = vld [vmem:[%s1 + $0xc] sm:$0xf]
        %v2467 = vld [vmem:[%s1 + $0x10] sm:$0xf]
        %v2468 = vld [vmem:[%s1 + $0x14] sm:$0xf]
        %v2469 = vld [vmem:[%s1 + $0x18] sm:$0xf]
        %v2470 = vld [vmem:[%s1 + $0x1c] sm:$0xf]
        %v2471 = vld [vmem:[%s1 + $0x20] sm:$0xf]
        %v2472 = vld [vmem:[%s1 + $0x24] sm:$0xf]
        %v2473 = vld [vmem:[%s1 + $0x28] sm:$0xf]
        %v2474 = vld [vmem:[%s1 + $0x2c] sm:$0xf]
        %v2475 = vld [vmem:[%s1 + $0x30] sm:$0xf]
        %v2476 = vld [vmem:[%s1 + $0x34] sm:$0xf]
        %v2477 = vld [vmem:[%s1 + $0x38] sm:$0xf]
        %v2478 = vld [vmem:[%s1 + $0x3c] sm:$0xf]
        %v2479 = vld [vmem:[%s1 + $0x40] sm:$0xf]
        %v2480 = vld [vmem:[%s1 + $0x44] sm:$0xf]
        %v2481 = vld [vmem:[%s1 + $0x48] sm:$0xf]
        %v2482 = vld [vmem:[%s1 + $0x4c] sm:$0xf]
        %v2483 = vld [vmem:[%s1 + $0x50] sm:$0xf]
        %v2484 = vld [vmem:[%s1 + $0x54] sm:$0xf]
        %v2485 = vld [vmem:[%s1 + $0x58] sm:$0xf]
        %v2486 = vld [vmem:[%s1 + $0x5c] sm:$0xf]
        %v2487 = vld [vmem:[%s1 + $0x60] sm:$0xf]
        %v2488 = vld [vmem:[%s1 + $0x64] sm:$0xf]
        %v2489 = vld [vmem:[%s1 + $0x68] sm:$0xf]
        %v2490 = vld [vmem:[%s1 + $0x6c] sm:$0xf]
        %v2491 = vld [vmem:[%s1 + $0x70] sm:$0xf]
        %v2492 = vld [vmem:[%s1 + $0x74] sm:$0xf]
        %v2493 = vld [vmem:[%s1 + $0x78] sm:$0xf]
        %v2494 = vld [vmem:[%s1 + $0x7c] sm:$0xf]
        %v2495 = vld [vmem:[%s1 + $0x80] sm:$0xf]
        %v2496 = vld [vmem:[%s1 + $0x84] sm:$0xf]
        %v2497 = vld [vmem:[%s1 + $0x88] sm:$0xf]
        %v2498 = vld [vmem:[%s1 + $0x8c] sm:$0xf]
        %v2499 = vld [vmem:[%s1 + $0x90] sm:$0xf]
        %v2500 = vld [vmem:[%s1 + $0x94] sm:$0xf]
        %v2501 = vld [vmem:[%s1 + $0x98] sm:$0xf]
        %v2502 = vld [vmem:[%s1 + $0x9c] sm:$0xf]
        %v2503 = vld [vmem:[%s1 + $0xa0] sm:$0xf]
        %v2504 = vld [vmem:[%s1 + $0xa4] sm:$0xf]
        %v2505 = vld [vmem:[%s1 + $0xa8] sm:$0xf]
        %v2506 = vld [vmem:[%s1 + $0xac] sm:$0xf]
        %v2507 = vld [vmem:[%s1 + $0xb0] sm:$0xf]
        %v2508 = vld [vmem:[%s1 + $0xb4] sm:$0xf]
        %v2509 = vld [vmem:[%s1 + $0xb8] sm:$0xf]
        %v2510 = vld [vmem:[%s1 + $0xbc] sm:$0xf]
        %v2511 = vld [vmem:[%s1 + $0xc0] sm:$0xf]
        %v2512 = vld [vmem:[%s1 + $0xc4] sm:$0xf]
        %v2513 = vld [vmem:[%s1 + $0xc8] sm:$0xf]
        %v2514 = vld [vmem:[%s1 + $0xcc] sm:$0xf]
        %v2515 = vld [vmem:[%s1 + $0xd0] sm:$0xf]
        %v2516 = vld [vmem:[%s1 + $0xd4] sm:$0xf]
        %v2517 = vld [vmem:[%s1 + $0xd8] sm:$0xf]
        %v2518 = vld [vmem:[%s1 + $0xdc] sm:$0xf]
        %v2519 = vld [vmem:[%s1 + $0xe0] sm:$0xf]
        %v2520 = vld [vmem:[%s1 + $0xe4] sm:$0xf]
        %v2521 = vld [vmem:[%s1 + $0xe8] sm:$0xf]
        %v2522 = vld [vmem:[%s1 + $0xec] sm:$0xf]
        %v2523 = vld [vmem:[%s1 + $0xf0] sm:$0xf]
        %v2524 = vld [vmem:[%s1 + $0xf4] sm:$0xf]
        %v2525 = vld [vmem:[%s1 + $0xf8] sm:$0xf]
        %v2526 = vld [vmem:[%s1 + $0xfc] sm:$0xf]
        %v2527 = vld [vmem:[%s1 + $0x100] sm:$0xf]
        %v2528 = vld [vmem:[%s1 + $0x104] sm:$0xf]
        %v2529 = vld [vmem:[%s1 + $0x108] sm:$0xf]
        %v2530 = vld [vmem:[%s1 + $0x10c] sm:$0xf]
        %v2531 = vld [vmem:[%s1 + $0x110] sm:$0xf]
        %v2532 = vld [vmem:[%s1 + $0x114] sm:$0xf]
        %v2533 = vld [vmem:[%s1 + $0x118] sm:$0xf]
        %v2534 = vld [vmem:[%s1 + $0x11c] sm:$0xf]
        %v2535 = vld [vmem:[%s1 + $0x120] sm:$0xf]
        %v2536 = vld [vmem:[%s1 + $0x124] sm:$0xf]
        %v2537 = vld [vmem:[%s1 + $0x128] sm:$0xf]
        %v2538 = vld [vmem:[%s1 + $0x12c] sm:$0xf]
        %v2539 = vld [vmem:[%s1 + $0x130] sm:$0xf]
        %v2540 = vld [vmem:[%s1 + $0x134] sm:$0xf]
        %v2541 = vld [vmem:[%s1 + $0x138] sm:$0xf]
        %v2542 = vld [vmem:[%s1 + $0x13c] sm:$0xf]
        %v2543 = vld [vmem:[%s1 + $0x140] sm:$0xf]
        %v2544 = vld [vmem:[%s1 + $0x144] sm:$0xf]
        %v2545 = vld [vmem:[%s1 + $0x148] sm:$0xf]
        %v2546 = vld [vmem:[%s1 + $0x14c] sm:$0xf]
        %v2547 = vld [vmem:[%s1 + $0x150] sm:$0xf]
        %v2548 = vld [vmem:[%s1 + $0x154] sm:$0xf]
        %v2549 = vld [vmem:[%s1 + $0x158] sm:$0xf]
        %v2550 = vld [vmem:[%s1 + $0x15c] sm:$0xf]
        %v2551 = vld [vmem:[%s1 + $0x160] sm:$0xf]
        %v2552 = vld [vmem:[%s1 + $0x164] sm:$0xf]
        %v2553 = vld [vmem:[%s1 + $0x168] sm:$0xf]
        %v2554 = vld [vmem:[%s1 + $0x16c] sm:$0xf]
        %v2555 = vld [vmem:[%s1 + $0x170] sm:$0xf]
        %v2556 = vld [vmem:[%s1 + $0x174] sm:$0xf]
        %v2557 = vld [vmem:[%s1 + $0x178] sm:$0xf]
        %v2558 = vld [vmem:[%s1 + $0x17c] sm:$0xf]
        %v2559 = vld [vmem:[%s1 + $0x180] sm:$0xf]
        %v2560 = vld [vmem:[%s1 + $0x184] sm:$0xf]
        %v2561 = vld [vmem:[%s1 + $0x188] sm:$0xf]
        %v2562 = vld [vmem:[%s1 + $0x18c] sm:$0xf]
        %v2563 = vld [vmem:[%s1 + $0x190] sm:$0xf]
        %v2564 = vld [vmem:[%s1 + $0x194] sm:$0xf]
        %v2565 = vld [vmem:[%s1 + $0x198] sm:$0xf]
        %v2566 = vld [vmem:[%s1 + $0x19c] sm:$0xf]
        %v2567 = vld [vmem:[%s1 + $0x1a0] sm:$0xf]
        %v2568 = vld [vmem:[%s1 + $0x1a4] sm:$0xf]
        %v2569 = vld [vmem:[%s1 + $0x1a8] sm:$0xf]
        %v2570 = vld [vmem:[%s1 + $0x1ac] sm:$0xf]
        %v2571 = vld [vmem:[%s1 + $0x1b0] sm:$0xf]
        %v2572 = vld [vmem:[%s1 + $0x1b4] sm:$0xf]
        %v2573 = vld [vmem:[%s1 + $0x1b8] sm:$0xf]
        %v2574 = vld [vmem:[%s1 + $0x1bc] sm:$0xf]
        %v2575 = vld [vmem:[%s1 + $0x1c0] sm:$0xf]
        %v2576 = vld [vmem:[%s1 + $0x1c4] sm:$0xf]
        %v2577 = vld [vmem:[%s1 + $0x1c8] sm:$0xf]
        %v2578 = vld [vmem:[%s1 + $0x1cc] sm:$0xf]
        %v2579 = vld [vmem:[%s1 + $0x1d0] sm:$0xf]
        %v2580 = vld [vmem:[%s1 + $0x1d4] sm:$0xf]
        %v2581 = vld [vmem:[%s1 + $0x1d8] sm:$0xf]
        %v2582 = vld [vmem:[%s1 + $0x1dc] sm:$0xf]
        %v2583 = vld [vmem:[%s1 + $0x1e0] sm:$0xf]
        %v2584 = vld [vmem:[%s1 + $0x1e4] sm:$0xf]
        %v2585 = vld [vmem:[%s1 + $0x1e8] sm:$0xf]
        %v2586 = vld [vmem:[%s1 + $0x1ec] sm:$0xf]
        %v2587 = vld [vmem:[%s1 + $0x1f0] sm:$0xf]
        %v2588 = vld [vmem:[%s1 + $0x1f4] sm:$0xf]
        %v2589 = vld [vmem:[%s1 + $0x1f8] sm:$0xf]
        %v2590 = vld [vmem:[%s1 + $0x1fc] sm:$0xf]
        %v2591 = vld [vmem:[%s1 + $0x200] sm:$0xf]
        %v2592 = vld [vmem:[%s1 + $0x204] sm:$0xf]
        %v2593 = vld [vmem:[%s1 + $0x208] sm:$0xf]
        %v2594 = vld [vmem:[%s1 + $0x20c] sm:$0xf]
        %v2595 = vld [vmem:[%s1 + $0x210] sm:$0xf]
        %v2596 = vld [vmem:[%s1 + $0x214] sm:$0xf]
        %v2597 = vld [vmem:[%s1 + $0x218] sm:$0xf]
        %v2598 = vld [vmem:[%s1 + $0x21c] sm:$0xf]
        %v2599 = vld [vmem:[%s1 + $0x220] sm:$0xf]
        %v2600 = vld [vmem:[%s1 + $0x224] sm:$0xf]
        %v2601 = vld [vmem:[%s1 + $0x228] sm:$0xf]
        %v2602 = vld [vmem:[%s1 + $0x22c] sm:$0xf]
        %v2603 = vld [vmem:[%s1 + $0x230] sm:$0xf]
        %v2604 = vld [vmem:[%s1 + $0x234] sm:$0xf]
        %v2605 = vld [vmem:[%s1 + $0x238] sm:$0xf]
        %v2606 = vld [vmem:[%s1 + $0x23c] sm:$0xf]
        %v2607 = vld [vmem:[%s2] sm:$0x1]
        %v2609 = vperm.slane %v2607, 0
        %v2755 = vunpack.c.l.b16 %v2463
        %v2756 = vunpack.c.l.b16 %v2464
        %v2757 = vunpack.c.l.b16 %v2465
        %v2758 = vunpack.c.l.b16 %v2466
        %v2759 = vunpack.c.l.b16 %v2467
        %v2760 = vunpack.c.l.b16 %v2468
        %v2761 = vunpack.c.l.b16 %v2469
        %v2762 = vunpack.c.l.b16 %v2470
        %v2763 = vunpack.c.l.b16 %v2471
        %v2764 = vunpack.c.l.b16 %v2472
        %v2765 = vunpack.c.l.b16 %v2473
        %v2766 = vunpack.c.l.b16 %v2474
        %v2767 = vunpack.c.l.b16 %v2475
        %v2768 = vunpack.c.l.b16 %v2476
        %v2769 = vunpack.c.l.b16 %v2477
        %v2770 = vunpack.c.l.b16 %v2478
        %v2771 = vunpack.c.l.b16 %v2479
        %v2772 = vunpack.c.l.b16 %v2480
        %v2773 = vunpack.c.l.b16 %v2481
        %v2774 = vunpack.c.l.b16 %v2482
        %v2775 = vunpack.c.l.b16 %v2483
        %v2776 = vunpack.c.l.b16 %v2484
        %v2777 = vunpack.c.l.b16 %v2485
        %v2778 = vunpack.c.l.b16 %v2486
        %v2779 = vunpack.c.l.b16 %v2487
        %v2780 = vunpack.c.l.b16 %v2488
        %v2781 = vunpack.c.l.b16 %v2489
        %v2782 = vunpack.c.l.b16 %v2490
        %v2783 = vunpack.c.l.b16 %v2491
        %v2784 = vunpack.c.l.b16 %v2492
        %v2785 = vunpack.c.l.b16 %v2493
        %v2786 = vunpack.c.l.b16 %v2494
        %v2787 = vunpack.c.l.b16 %v2495
        %v2788 = vunpack.c.l.b16 %v2496
        %v2789 = vunpack.c.l.b16 %v2497
        %v2790 = vunpack.c.l.b16 %v2498
        %v2791 = vunpack.c.l.b16 %v2499
        %v2792 = vunpack.c.l.b16 %v2500
        %v2793 = vunpack.c.l.b16 %v2501
        %v2794 = vunpack.c.l.b16 %v2502
        %v2795 = vunpack.c.l.b16 %v2503
        %v2796 = vunpack.c.l.b16 %v2504
        %v2797 = vunpack.c.l.b16 %v2505
        %v2798 = vunpack.c.l.b16 %v2506
        %v2799 = vunpack.c.l.b16 %v2507
        %v2800 = vunpack.c.l.b16 %v2508
        %v2801 = vunpack.c.l.b16 %v2509
        %v2802 = vunpack.c.l.b16 %v2510
        %v2803 = vunpack.c.l.b16 %v2511
        %v2804 = vunpack.c.l.b16 %v2512
        %v2805 = vunpack.c.l.b16 %v2513
        %v2806 = vunpack.c.l.b16 %v2514
        %v2807 = vunpack.c.l.b16 %v2515
        %v2808 = vunpack.c.l.b16 %v2516
        %v2809 = vunpack.c.l.b16 %v2517
        %v2810 = vunpack.c.l.b16 %v2518
        %v2811 = vunpack.c.l.b16 %v2519
        %v2812 = vunpack.c.l.b16 %v2520
        %v2813 = vunpack.c.l.b16 %v2521
        %v2814 = vunpack.c.l.b16 %v2522
        %v2815 = vunpack.c.l.b16 %v2523
        %v2816 = vunpack.c.l.b16 %v2524
        %v2817 = vunpack.c.l.b16 %v2525
        %v2818 = vunpack.c.l.b16 %v2526
        %v2819 = vunpack.c.l.b16 %v2527
        %v2820 = vunpack.c.l.b16 %v2528
        %v2821 = vunpack.c.l.b16 %v2529
        %v2822 = vunpack.c.l.b16 %v2530
        %v2823 = vunpack.c.l.b16 %v2531
        %v2824 = vunpack.c.l.b16 %v2532
        %v2825 = vunpack.c.l.b16 %v2533
        %v2826 = vunpack.c.l.b16 %v2534
        %v2827 = vunpack.c.l.b16 %v2535
        %v2828 = vunpack.c.l.b16 %v2536
        %v2829 = vunpack.c.l.b16 %v2537
        %v2830 = vunpack.c.l.b16 %v2538
        %v2831 = vunpack.c.l.b16 %v2539
        %v2832 = vunpack.c.l.b16 %v2540
        %v2833 = vunpack.c.l.b16 %v2541
        %v2834 = vunpack.c.l.b16 %v2542
        %v2835 = vunpack.c.l.b16 %v2543
        %v2836 = vunpack.c.l.b16 %v2544
        %v2837 = vunpack.c.l.b16 %v2545
        %v2838 = vunpack.c.l.b16 %v2546
        %v2839 = vunpack.c.l.b16 %v2547
        %v2840 = vunpack.c.l.b16 %v2548
        %v2841 = vunpack.c.l.b16 %v2549
        %v2842 = vunpack.c.l.b16 %v2550
        %v2843 = vunpack.c.l.b16 %v2551
        %v2844 = vunpack.c.l.b16 %v2552
        %v2845 = vunpack.c.l.b16 %v2553
        %v2846 = vunpack.c.l.b16 %v2554
        %v2847 = vunpack.c.l.b16 %v2555
        %v2848 = vunpack.c.l.b16 %v2556
        %v2849 = vunpack.c.l.b16 %v2557
        %v2850 = vunpack.c.l.b16 %v2558
        %v2851 = vunpack.c.l.b16 %v2559
        %v2852 = vunpack.c.l.b16 %v2560
        %v2853 = vunpack.c.l.b16 %v2561
        %v2854 = vunpack.c.l.b16 %v2562
        %v2855 = vunpack.c.l.b16 %v2563
        %v2856 = vunpack.c.l.b16 %v2564
        %v2857 = vunpack.c.l.b16 %v2565
        %v2858 = vunpack.c.l.b16 %v2566
        %v2859 = vunpack.c.l.b16 %v2567
        %v2860 = vunpack.c.l.b16 %v2568
        %v2861 = vunpack.c.l.b16 %v2569
        %v2862 = vunpack.c.l.b16 %v2570
        %v2863 = vunpack.c.l.b16 %v2571
        %v2864 = vunpack.c.l.b16 %v2572
        %v2865 = vunpack.c.l.b16 %v2573
        %v2866 = vunpack.c.l.b16 %v2574
        %v2867 = vunpack.c.l.b16 %v2575
        %v2868 = vunpack.c.l.b16 %v2576
        %v2869 = vunpack.c.l.b16 %v2577
        %v2870 = vunpack.c.l.b16 %v2578
        %v2871 = vunpack.c.l.b16 %v2579
        %v2872 = vunpack.c.l.b16 %v2580
        %v2873 = vunpack.c.l.b16 %v2581
        %v2874 = vunpack.c.l.b16 %v2582
        %v2875 = vunpack.c.l.b16 %v2583
        %v2876 = vunpack.c.l.b16 %v2584
        %v2877 = vunpack.c.l.b16 %v2585
        %v2878 = vunpack.c.l.b16 %v2586
        %v2879 = vunpack.c.l.b16 %v2587
        %v2880 = vunpack.c.l.b16 %v2588
        %v2881 = vunpack.c.l.b16 %v2589
        %v2882 = vunpack.c.l.b16 %v2590
        %v2883 = vunpack.c.l.b16 %v2591
        %v2884 = vunpack.c.l.b16 %v2592
        %v2885 = vunpack.c.l.b16 %v2593
        %v2886 = vunpack.c.l.b16 %v2594
        %v2887 = vunpack.c.l.b16 %v2595
        %v2888 = vunpack.c.l.b16 %v2596
        %v2889 = vunpack.c.l.b16 %v2597
        %v2890 = vunpack.c.l.b16 %v2598
        %v2891 = vunpack.c.l.b16 %v2599
        %v2892 = vunpack.c.l.b16 %v2600
        %v2893 = vunpack.c.l.b16 %v2601
        %v2894 = vunpack.c.l.b16 %v2602
        %v2895 = vunpack.c.l.b16 %v2603
        %v2896 = vunpack.c.l.b16 %v2604
        %v2897 = vunpack.c.l.b16 %v2605
        %v2898 = vunpack.c.l.b16 %v2606
        %v2899 = vpack.c.b16 %v2756, %v2755
        %v2900 = vpack.c.b16 %v2758, %v2757
        %v2901 = vpack.c.b16 %v2760, %v2759
        %v2902 = vpack.c.b16 %v2762, %v2761
        %v2903 = vpack.c.b16 %v2764, %v2763
        %v2904 = vpack.c.b16 %v2766, %v2765
        %v2905 = vpack.c.b16 %v2768, %v2767
        %v2906 = vpack.c.b16 %v2770, %v2769
        %v2907 = vpack.c.b16 %v2772, %v2771
        %v2908 = vpack.c.b16 %v2774, %v2773
        %v2909 = vpack.c.b16 %v2776, %v2775
        %v2910 = vpack.c.b16 %v2778, %v2777
        %v2911 = vpack.c.b16 %v2780, %v2779
        %v2912 = vpack.c.b16 %v2782, %v2781
        %v2913 = vpack.c.b16 %v2784, %v2783
        %v2914 = vpack.c.b16 %v2786, %v2785
        %v2915 = vpack.c.b16 %v2788, %v2787
        %v2916 = vpack.c.b16 %v2790, %v2789
        %v2917 = vpack.c.b16 %v2792, %v2791
        %v2918 = vpack.c.b16 %v2794, %v2793
        %v2919 = vpack.c.b16 %v2796, %v2795
        %v2920 = vpack.c.b16 %v2798, %v2797
        %v2921 = vpack.c.b16 %v2800, %v2799
        %v2922 = vpack.c.b16 %v2802, %v2801
        %v2923 = vpack.c.b16 %v2804, %v2803
        %v2924 = vpack.c.b16 %v2806, %v2805
        %v2925 = vpack.c.b16 %v2808, %v2807
        %v2926 = vpack.c.b16 %v2810, %v2809
        %v2927 = vpack.c.b16 %v2812, %v2811
        %v2928 = vpack.c.b16 %v2814, %v2813
        %v2929 = vpack.c.b16 %v2816, %v2815
        %v2930 = vpack.c.b16 %v2818, %v2817
        %v2931 = vpack.c.b16 %v2820, %v2819
        %v2932 = vpack.c.b16 %v2822, %v2821
        %v2933 = vpack.c.b16 %v2824, %v2823
        %v2934 = vpack.c.b16 %v2826, %v2825
        %v2935 = vpack.c.b16 %v2828, %v2827
        %v2936 = vpack.c.b16 %v2830, %v2829
        %v2937 = vpack.c.b16 %v2832, %v2831
        %v2938 = vpack.c.b16 %v2834, %v2833
        %v2939 = vpack.c.b16 %v2836, %v2835
        %v2940 = vpack.c.b16 %v2838, %v2837
        %v2941 = vpack.c.b16 %v2840, %v2839
        %v2942 = vpack.c.b16 %v2842, %v2841
        %v2943 = vpack.c.b16 %v2844, %v2843
        %v2944 = vpack.c.b16 %v2846, %v2845
        %v2945 = vpack.c.b16 %v2848, %v2847
        %v2946 = vpack.c.b16 %v2850, %v2849
        %v2947 = vpack.c.b16 %v2852, %v2851
        %v2948 = vpack.c.b16 %v2854, %v2853
        %v2949 = vpack.c.b16 %v2856, %v2855
        %v2950 = vpack.c.b16 %v2858, %v2857
        %v2951 = vpack.c.b16 %v2860, %v2859
        %v2952 = vpack.c.b16 %v2862, %v2861
        %v2953 = vpack.c.b16 %v2864, %v2863
        %v2954 = vpack.c.b16 %v2866, %v2865
        %v2955 = vpack.c.b16 %v2868, %v2867
        %v2956 = vpack.c.b16 %v2870, %v2869
        %v2957 = vpack.c.b16 %v2872, %v2871
        %v2958 = vpack.c.b16 %v2874, %v2873
        %v2959 = vpack.c.b16 %v2876, %v2875
        %v2960 = vpack.c.b16 %v2878, %v2877
        %v2961 = vpack.c.b16 %v2880, %v2879
        %v2962 = vpack.c.b16 %v2882, %v2881
        %v2963 = vpack.c.b16 %v2884, %v2883
        %v2964 = vpack.c.b16 %v2886, %v2885
        %v2965 = vpack.c.b16 %v2888, %v2887
        %v2966 = vpack.c.b16 %v2890, %v2889
        %v2967 = vpack.c.b16 %v2892, %v2891
        %v2968 = vpack.c.b16 %v2894, %v2893
        %v2969 = vpack.c.b16 %v2896, %v2895
        %v2970 = vpack.c.b16 %v2898, %v2897
        %3043 = vmatpush.bf16.msra.mxu0 %v2906
        %3044 = vmatpush.bf16.msra.mxu0 %v2905
        %3045 = vmatpush.bf16.msra.mxu0 %v2904
        %3046 = vmatpush.bf16.msra.mxu0 %v2903
        %3047 = vmatpush.bf16.msra.mxu0 %v2902
        %3048 = vmatpush.bf16.msra.mxu0 %v2901
        %3049 = vmatpush.bf16.msra.mxu0 %v2900
        %3050 = vmatpush.bf16.msra.mxu0 %v2899
        %3051 = vmatmul.bf16.gmra.mxu0 %v1568
        %v3052 = vpop.f32.mrf.mxu0
        %v3053 = vadd.f32 %v2609, %v3052
        %v3054 = vpop.f32.mrf.mxu0
        %v3055 = vadd.f32 %v2609, %v3054
        %3056 = vmatmul.bf16.gmra.mxu0 %v1569
        %v3057 = vpop.f32.mrf.mxu0
        %v3058 = vadd.f32 %v2609, %v3057
        %v3059 = vpop.f32.mrf.mxu0
        %v3060 = vadd.f32 %v2609, %v3059
        %3061 = vmatmul.bf16.gmra.mxu0 %v1570
        %v3062 = vpop.f32.mrf.mxu0
        %v3063 = vadd.f32 %v2609, %v3062
        %v3064 = vpop.f32.mrf.mxu0
        %v3065 = vadd.f32 %v2609, %v3064
        %3066 = vmatmul.bf16.gmra.mxu0 %v1571
        %v3067 = vpop.f32.mrf.mxu0
        %v3068 = vadd.f32 %v2609, %v3067
        %v3069 = vpop.f32.mrf.mxu0
        %v3070 = vadd.f32 %v2609, %v3069
        %3071 = vmatmul.bf16.gmra.mxu0 %v1572
        %v3072 = vpop.f32.mrf.mxu0
        %v3073 = vadd.f32 %v2609, %v3072
        %v3074 = vpop.f32.mrf.mxu0
        %v3075 = vadd.f32 %v2609, %v3074
        %3076 = vmatmul.bf16.gmra.mxu0 %v1573
        %v3077 = vpop.f32.mrf.mxu0
        %v3078 = vadd.f32 %v2609, %v3077
        %v3079 = vpop.f32.mrf.mxu0
        %v3080 = vadd.f32 %v2609, %v3079
        %3081 = vmatmul.bf16.gmra.mxu0 %v1574
        %v3082 = vpop.f32.mrf.mxu0
        %v3083 = vadd.f32 %v2609, %v3082
        %v3084 = vpop.f32.mrf.mxu0
        %v3085 = vadd.f32 %v2609, %v3084
        %3086 = vmatmul.bf16.gmra.mxu0 %v1575
        %v3087 = vpop.f32.mrf.mxu0
        %v3088 = vadd.f32 %v2609, %v3087
        %v3089 = vpop.f32.mrf.mxu0
        %v3090 = vadd.f32 %v2609, %v3089
        %3091 = vmatmul.bf16.gmra.mxu0 %v1576
        %v3092 = vpop.f32.mrf.mxu0
        %v3093 = vadd.f32 %v2609, %v3092
        %v3094 = vpop.f32.mrf.mxu0
        %v3095 = vadd.f32 %v2609, %v3094
        %3096 = vmatmul.bf16.gmra.mxu0 %v1577
        %v3097 = vpop.f32.mrf.mxu0
        %v3098 = vadd.f32 %v2609, %v3097
        %v3099 = vpop.f32.mrf.mxu0
        %v3100 = vadd.f32 %v2609, %v3099
        %3101 = vmatmul.bf16.gmra.mxu0 %v1578
        %v3102 = vpop.f32.mrf.mxu0
        %v3103 = vadd.f32 %v2609, %v3102
        %v3104 = vpop.f32.mrf.mxu0
        %v3105 = vadd.f32 %v2609, %v3104
        %3106 = vmatmul.bf16.gmra.mxu0 %v1579
        %v3107 = vpop.f32.mrf.mxu0
        %v3108 = vadd.f32 %v2609, %v3107
        %v3109 = vpop.f32.mrf.mxu0
        %v3110 = vadd.f32 %v2609, %v3109
        %3111 = vmatmul.bf16.gmra.mxu0 %v1580
        %v3112 = vpop.f32.mrf.mxu0
        %v3113 = vadd.f32 %v2609, %v3112
        %v3114 = vpop.f32.mrf.mxu0
        %v3115 = vadd.f32 %v2609, %v3114
        %3116 = vmatmul.bf16.gmra.mxu0 %v1581
        %v3117 = vpop.f32.mrf.mxu0
        %v3118 = vadd.f32 %v2609, %v3117
        %v3119 = vpop.f32.mrf.mxu0
        %v3120 = vadd.f32 %v2609, %v3119
        %3121 = vmatmul.bf16.gmra.mxu0 %v1582
        %v3122 = vpop.f32.mrf.mxu0
        %v3123 = vadd.f32 %v2609, %v3122
        %v3124 = vpop.f32.mrf.mxu0
        %v3125 = vadd.f32 %v2609, %v3124
        %3126 = vmatmul.bf16.gmra.mxu0 %v1583
        %v3127 = vpop.f32.mrf.mxu0
        %v3128 = vadd.f32 %v2609, %v3127
        %v3129 = vpop.f32.mrf.mxu0
        %v3130 = vadd.f32 %v2609, %v3129
        %3131 = vdwg.mxu0
        %3132 = vmatpush.bf16.msra.mxu0 %v2914
        %3133 = vmatpush.bf16.msra.mxu0 %v2913
        %3134 = vmatpush.bf16.msra.mxu0 %v2912
        %3135 = vmatpush.bf16.msra.mxu0 %v2911
        %3136 = vmatpush.bf16.msra.mxu0 %v2910
        %3137 = vmatpush.bf16.msra.mxu0 %v2909
        %3138 = vmatpush.bf16.msra.mxu0 %v2908
        %3139 = vmatpush.bf16.msra.mxu0 %v2907
        %3140 = vmatmul.bf16.gmra.mxu0 %v1695
        %v3141 = vpop.f32.mrf.mxu0
        %v3142 = vadd.f32 %v3053, %v3141
        %v3143 = vpop.f32.mrf.mxu0
        %v3144 = vadd.f32 %v3055, %v3143
        %3145 = vmatmul.bf16.gmra.mxu0 %v1703
        %v3146 = vpop.f32.mrf.mxu0
        %v3147 = vadd.f32 %v3058, %v3146
        %v3148 = vpop.f32.mrf.mxu0
        %v3149 = vadd.f32 %v3060, %v3148
        %3150 = vmatmul.bf16.gmra.mxu0 %v1711
        %v3151 = vpop.f32.mrf.mxu0
        %v3152 = vadd.f32 %v3063, %v3151
        %v3153 = vpop.f32.mrf.mxu0
        %v3154 = vadd.f32 %v3065, %v3153
        %3155 = vmatmul.bf16.gmra.mxu0 %v1719
        %v3156 = vpop.f32.mrf.mxu0
        %v3157 = vadd.f32 %v3068, %v3156
        %v3158 = vpop.f32.mrf.mxu0
        %v3159 = vadd.f32 %v3070, %v3158
        %3160 = vmatmul.bf16.gmra.mxu0 %v1727
        %v3161 = vpop.f32.mrf.mxu0
        %v3162 = vadd.f32 %v3073, %v3161
        %v3163 = vpop.f32.mrf.mxu0
        %v3164 = vadd.f32 %v3075, %v3163
        %3165 = vmatmul.bf16.gmra.mxu0 %v1735
        %v3166 = vpop.f32.mrf.mxu0
        %v3167 = vadd.f32 %v3078, %v3166
        %v3168 = vpop.f32.mrf.mxu0
        %v3169 = vadd.f32 %v3080, %v3168
        %3170 = vmatmul.bf16.gmra.mxu0 %v1743
        %v3171 = vpop.f32.mrf.mxu0
        %v3172 = vadd.f32 %v3083, %v3171
        %v3173 = vpop.f32.mrf.mxu0
        %v3174 = vadd.f32 %v3085, %v3173
        %3175 = vmatmul.bf16.gmra.mxu0 %v1751
        %v3176 = vpop.f32.mrf.mxu0
        %v3177 = vadd.f32 %v3088, %v3176
        %v3178 = vpop.f32.mrf.mxu0
        %v3179 = vadd.f32 %v3090, %v3178
        %3180 = vmatmul.bf16.gmra.mxu0 %v1759
        %v3181 = vpop.f32.mrf.mxu0
        %v3182 = vadd.f32 %v3093, %v3181
        %v3183 = vpop.f32.mrf.mxu0
        %v3184 = vadd.f32 %v3095, %v3183
        %3185 = vmatmul.bf16.gmra.mxu0 %v1767
        %v3186 = vpop.f32.mrf.mxu0
        %v3187 = vadd.f32 %v3098, %v3186
        %v3188 = vpop.f32.mrf.mxu0
        %v3189 = vadd.f32 %v3100, %v3188
        %3190 = vmatmul.bf16.gmra.mxu0 %v1775
        %v3191 = vpop.f32.mrf.mxu0
        %v3192 = vadd.f32 %v3103, %v3191
        %v3193 = vpop.f32.mrf.mxu0
        %v3194 = vadd.f32 %v3105, %v3193
        %3195 = vmatmul.bf16.gmra.mxu0 %v1783
        %v3196 = vpop.f32.mrf.mxu0
        %v3197 = vadd.f32 %v3108, %v3196
        %v3198 = vpop.f32.mrf.mxu0
        %v3199 = vadd.f32 %v3110, %v3198
        %3200 = vmatmul.bf16.gmra.mxu0 %v1791
        %v3201 = vpop.f32.mrf.mxu0
        %v3202 = vadd.f32 %v3113, %v3201
        %v3203 = vpop.f32.mrf.mxu0
        %v3204 = vadd.f32 %v3115, %v3203
        %3205 = vmatmul.bf16.gmra.mxu0 %v1799
        %v3206 = vpop.f32.mrf.mxu0
        %v3207 = vadd.f32 %v3118, %v3206
        %v3208 = vpop.f32.mrf.mxu0
        %v3209 = vadd.f32 %v3120, %v3208
        %3210 = vmatmul.bf16.gmra.mxu0 %v1807
        %v3211 = vpop.f32.mrf.mxu0
        %v3212 = vadd.f32 %v3123, %v3211
        %v3213 = vpop.f32.mrf.mxu0
        %v3214 = vadd.f32 %v3125, %v3213
        %3215 = vmatmul.bf16.gmra.mxu0 %v1815
        %v3216 = vpop.f32.mrf.mxu0
        %v3217 = vadd.f32 %v3128, %v3216
        %v3218 = vpop.f32.mrf.mxu0
        %v3219 = vadd.f32 %v3130, %v3218
        %3220 = vdwg.mxu0
        %3221 = vmatpush.bf16.msra.mxu0 %v2922
        %3222 = vmatpush.bf16.msra.mxu0 %v2921
        %3223 = vmatpush.bf16.msra.mxu0 %v2920
        %3224 = vmatpush.bf16.msra.mxu0 %v2919
        %3225 = vmatpush.bf16.msra.mxu0 %v2918
        %3226 = vmatpush.bf16.msra.mxu0 %v2917
        %3227 = vmatpush.bf16.msra.mxu0 %v2916
        %3228 = vmatpush.bf16.msra.mxu0 %v2915
        %3229 = vmatmul.bf16.gmra.mxu0 %v1918
        %v3230 = vpop.f32.mrf.mxu0
        %v3231 = vadd.f32 %v3142, %v3230
        %v3232 = vpop.f32.mrf.mxu0
        %v3233 = vadd.f32 %v3144, %v3232
        %3234 = vmatmul.bf16.gmra.mxu0 %v1920
        %v3235 = vpop.f32.mrf.mxu0
        %v3236 = vadd.f32 %v3147, %v3235
        %v3237 = vpop.f32.mrf.mxu0
        %v3238 = vadd.f32 %v3149, %v3237
        %3239 = vmatmul.bf16.gmra.mxu0 %v1922
        %v3240 = vpop.f32.mrf.mxu0
        %v3241 = vadd.f32 %v3152, %v3240
        %v3242 = vpop.f32.mrf.mxu0
        %v3243 = vadd.f32 %v3154, %v3242
        %3244 = vmatmul.bf16.gmra.mxu0 %v1924
        %v3245 = vpop.f32.mrf.mxu0
        %v3246 = vadd.f32 %v3157, %v3245
        %v3247 = vpop.f32.mrf.mxu0
        %v3248 = vadd.f32 %v3159, %v3247
        %3249 = vmatmul.bf16.gmra.mxu0 %v1926
        %v3250 = vpop.f32.mrf.mxu0
        %v3251 = vadd.f32 %v3162, %v3250
        %v3252 = vpop.f32.mrf.mxu0
        %v3253 = vadd.f32 %v3164, %v3252
        %3254 = vmatmul.bf16.gmra.mxu0 %v1928
        %v3255 = vpop.f32.mrf.mxu0
        %v3256 = vadd.f32 %v3167, %v3255
        %v3257 = vpop.f32.mrf.mxu0
        %v3258 = vadd.f32 %v3169, %v3257
        %3259 = vmatmul.bf16.gmra.mxu0 %v1930
        %v3260 = vpop.f32.mrf.mxu0
        %v3261 = vadd.f32 %v3172, %v3260
        %v3262 = vpop.f32.mrf.mxu0
        %v3263 = vadd.f32 %v3174, %v3262
        %3264 = vmatmul.bf16.gmra.mxu0 %v1932
        %v3265 = vpop.f32.mrf.mxu0
        %v3266 = vadd.f32 %v3177, %v3265
        %v3267 = vpop.f32.mrf.mxu0
        %v3268 = vadd.f32 %v3179, %v3267
        %3269 = vmatmul.bf16.gmra.mxu0 %v1934
        %v3270 = vpop.f32.mrf.mxu0
        %v3271 = vadd.f32 %v3182, %v3270
        %v3272 = vpop.f32.mrf.mxu0
        %v3273 = vadd.f32 %v3184, %v3272
        %3274 = vmatmul.bf16.gmra.mxu0 %v1936
        %v3275 = vpop.f32.mrf.mxu0
        %v3276 = vadd.f32 %v3187, %v3275
        %v3277 = vpop.f32.mrf.mxu0
        %v3278 = vadd.f32 %v3189, %v3277
        %3279 = vmatmul.bf16.gmra.mxu0 %v1938
        %v3280 = vpop.f32.mrf.mxu0
        %v3281 = vadd.f32 %v3192, %v3280
        %v3282 = vpop.f32.mrf.mxu0
        %v3283 = vadd.f32 %v3194, %v3282
        %3284 = vmatmul.bf16.gmra.mxu0 %v1940
        %v3285 = vpop.f32.mrf.mxu0
        %v3286 = vadd.f32 %v3197, %v3285
        %v3287 = vpop.f32.mrf.mxu0
        %v3288 = vadd.f32 %v3199, %v3287
        %3289 = vmatmul.bf16.gmra.mxu0 %v1942
        %v3290 = vpop.f32.mrf.mxu0
        %v3291 = vadd.f32 %v3202, %v3290
        %v3292 = vpop.f32.mrf.mxu0
        %v3293 = vadd.f32 %v3204, %v3292
        %3294 = vmatmul.bf16.gmra.mxu0 %v1944
        %v3295 = vpop.f32.mrf.mxu0
        %v3296 = vadd.f32 %v3207, %v3295
        %v3297 = vpop.f32.mrf.mxu0
        %v3298 = vadd.f32 %v3209, %v3297
        %3299 = vmatmul.bf16.gmra.mxu0 %v1946
        %v3300 = vpop.f32.mrf.mxu0
        %v3301 = vadd.f32 %v3212, %v3300
        %v3302 = vpop.f32.mrf.mxu0
        %v3303 = vadd.f32 %v3214, %v3302
        %3304 = vmatmul.bf16.gmra.mxu0 %v1948
        %v3305 = vpop.f32.mrf.mxu0
        %v3306 = vadd.f32 %v3217, %v3305
        %v3307 = vpop.f32.mrf.mxu0
        %v3308 = vadd.f32 %v3219, %v3307
        %3309 = vdwg.mxu0
        %3310 = vmatpush.bf16.msra.mxu0 %v2930
        %3311 = vmatpush.bf16.msra.mxu0 %v2929
        %3312 = vmatpush.bf16.msra.mxu0 %v2928
        %3313 = vmatpush.bf16.msra.mxu0 %v2927
        %3314 = vmatpush.bf16.msra.mxu0 %v2926
        %3315 = vmatpush.bf16.msra.mxu0 %v2925
        %3316 = vmatpush.bf16.msra.mxu0 %v2924
        %3317 = vmatpush.bf16.msra.mxu0 %v2923
        %3318 = vmatmul.bf16.gmra.mxu0 %v2029
        %v3319 = vpop.f32.mrf.mxu0
        %v3320 = vadd.f32 %v3231, %v3319
        %v3321 = vpop.f32.mrf.mxu0
        %v3322 = vadd.f32 %v3233, %v3321
        %3323 = vmatmul.bf16.gmra.mxu0 %v2030
        %v3324 = vpop.f32.mrf.mxu0
        %v3325 = vadd.f32 %v3236, %v3324
        %v3326 = vpop.f32.mrf.mxu0
        %v3327 = vadd.f32 %v3238, %v3326
        %3328 = vmatmul.bf16.gmra.mxu0 %v2031
        %v3329 = vpop.f32.mrf.mxu0
        %v3330 = vadd.f32 %v3241, %v3329
        %v3331 = vpop.f32.mrf.mxu0
        %v3332 = vadd.f32 %v3243, %v3331
        %3333 = vmatmul.bf16.gmra.mxu0 %v2032
        %v3334 = vpop.f32.mrf.mxu0
        %v3335 = vadd.f32 %v3246, %v3334
        %v3336 = vpop.f32.mrf.mxu0
        %v3337 = vadd.f32 %v3248, %v3336
        %3338 = vmatmul.bf16.gmra.mxu0 %v2033
        %v3339 = vpop.f32.mrf.mxu0
        %v3340 = vadd.f32 %v3251, %v3339
        %v3341 = vpop.f32.mrf.mxu0
        %v3342 = vadd.f32 %v3253, %v3341
        %3343 = vmatmul.bf16.gmra.mxu0 %v2034
        %v3344 = vpop.f32.mrf.mxu0
        %v3345 = vadd.f32 %v3256, %v3344
        %v3346 = vpop.f32.mrf.mxu0
        %v3347 = vadd.f32 %v3258, %v3346
        %3348 = vmatmul.bf16.gmra.mxu0 %v2035
        %v3349 = vpop.f32.mrf.mxu0
        %v3350 = vadd.f32 %v3261, %v3349
        %v3351 = vpop.f32.mrf.mxu0
        %v3352 = vadd.f32 %v3263, %v3351
        %3353 = vmatmul.bf16.gmra.mxu0 %v2036
        %v3354 = vpop.f32.mrf.mxu0
        %v3355 = vadd.f32 %v3266, %v3354
        %v3356 = vpop.f32.mrf.mxu0
        %v3357 = vadd.f32 %v3268, %v3356
        %3358 = vmatmul.bf16.gmra.mxu0 %v2037
        %v3359 = vpop.f32.mrf.mxu0
        %v3360 = vadd.f32 %v3271, %v3359
        %v3361 = vpop.f32.mrf.mxu0
        %v3362 = vadd.f32 %v3273, %v3361
        %3363 = vmatmul.bf16.gmra.mxu0 %v2038
        %v3364 = vpop.f32.mrf.mxu0
        %v3365 = vadd.f32 %v3276, %v3364
        %v3366 = vpop.f32.mrf.mxu0
        %v3367 = vadd.f32 %v3278, %v3366
        %3368 = vmatmul.bf16.gmra.mxu0 %v2039
        %v3369 = vpop.f32.mrf.mxu0
        %v3370 = vadd.f32 %v3281, %v3369
        %v3371 = vpop.f32.mrf.mxu0
        %v3372 = vadd.f32 %v3283, %v3371
        %3373 = vmatmul.bf16.gmra.mxu0 %v2040
        %v3374 = vpop.f32.mrf.mxu0
        %v3375 = vadd.f32 %v3286, %v3374
        %v3376 = vpop.f32.mrf.mxu0
        %v3377 = vadd.f32 %v3288, %v3376
        %3378 = vmatmul.bf16.gmra.mxu0 %v2041
        %v3379 = vpop.f32.mrf.mxu0
        %v3380 = vadd.f32 %v3291, %v3379
        %v3381 = vpop.f32.mrf.mxu0
        %v3382 = vadd.f32 %v3293, %v3381
        %3383 = vmatmul.bf16.gmra.mxu0 %v2042
        %v3384 = vpop.f32.mrf.mxu0
        %v3385 = vadd.f32 %v3296, %v3384
        %v3386 = vpop.f32.mrf.mxu0
        %v3387 = vadd.f32 %v3298, %v3386
        %3388 = vmatmul.bf16.gmra.mxu0 %v2043
        %v3389 = vpop.f32.mrf.mxu0
        %v3390 = vadd.f32 %v3301, %v3389
        %v3391 = vpop.f32.mrf.mxu0
        %v3392 = vadd.f32 %v3303, %v3391
        %3393 = vmatmul.bf16.gmra.mxu0 %v2044
        %v3394 = vpop.f32.mrf.mxu0
        %v3395 = vadd.f32 %v3306, %v3394
        %v3396 = vpop.f32.mrf.mxu0
        %v3397 = vadd.f32 %v3308, %v3396
        %3398 = vdwg.mxu0
        %3399 = vmatpush.bf16.msra.mxu0 %v2938
        %3400 = vmatpush.bf16.msra.mxu0 %v2937
        %3401 = vmatpush.bf16.msra.mxu0 %v2936
        %3402 = vmatpush.bf16.msra.mxu0 %v2935
        %3403 = vmatpush.bf16.msra.mxu0 %v2934
        %3404 = vmatpush.bf16.msra.mxu0 %v2933
        %3405 = vmatpush.bf16.msra.mxu0 %v2932
        %3406 = vmatpush.bf16.msra.mxu0 %v2931
        %3407 = vmatmul.bf16.gmra.mxu0 %v1703
        %v3408 = vpop.f32.mrf.mxu0
        %v3409 = vadd.f32 %v3320, %v3408
        %v3410 = vpop.f32.mrf.mxu0
        %v3411 = vadd.f32 %v3322, %v3410
        %3412 = vmatmul.bf16.gmra.mxu0 %v1711
        %v3413 = vpop.f32.mrf.mxu0
        %v3414 = vadd.f32 %v3325, %v3413
        %v3415 = vpop.f32.mrf.mxu0
        %v3416 = vadd.f32 %v3327, %v3415
        %3417 = vmatmul.bf16.gmra.mxu0 %v1719
        %v3418 = vpop.f32.mrf.mxu0
        %v3419 = vadd.f32 %v3330, %v3418
        %v3420 = vpop.f32.mrf.mxu0
        %v3421 = vadd.f32 %v3332, %v3420
        %3422 = vmatmul.bf16.gmra.mxu0 %v1727
        %v3423 = vpop.f32.mrf.mxu0
        %v3424 = vadd.f32 %v3335, %v3423
        %v3425 = vpop.f32.mrf.mxu0
        %v3426 = vadd.f32 %v3337, %v3425
        %3427 = vmatmul.bf16.gmra.mxu0 %v1735
        %v3428 = vpop.f32.mrf.mxu0
        %v3429 = vadd.f32 %v3340, %v3428
        %v3430 = vpop.f32.mrf.mxu0
        %v3431 = vadd.f32 %v3342, %v3430
        %3432 = vmatmul.bf16.gmra.mxu0 %v1743
        %v3433 = vpop.f32.mrf.mxu0
        %v3434 = vadd.f32 %v3345, %v3433
        %v3435 = vpop.f32.mrf.mxu0
        %v3436 = vadd.f32 %v3347, %v3435
        %3437 = vmatmul.bf16.gmra.mxu0 %v1751
        %v3438 = vpop.f32.mrf.mxu0
        %v3439 = vadd.f32 %v3350, %v3438
        %v3440 = vpop.f32.mrf.mxu0
        %v3441 = vadd.f32 %v3352, %v3440
        %3442 = vmatmul.bf16.gmra.mxu0 %v1759
        %v3443 = vpop.f32.mrf.mxu0
        %v3444 = vadd.f32 %v3355, %v3443
        %v3445 = vpop.f32.mrf.mxu0
        %v3446 = vadd.f32 %v3357, %v3445
        %3447 = vmatmul.bf16.gmra.mxu0 %v1767
        %v3448 = vpop.f32.mrf.mxu0
        %v3449 = vadd.f32 %v3360, %v3448
        %v3450 = vpop.f32.mrf.mxu0
        %v3451 = vadd.f32 %v3362, %v3450
        %3452 = vmatmul.bf16.gmra.mxu0 %v1775
        %v3453 = vpop.f32.mrf.mxu0
        %v3454 = vadd.f32 %v3365, %v3453
        %v3455 = vpop.f32.mrf.mxu0
        %v3456 = vadd.f32 %v3367, %v3455
        %3457 = vmatmul.bf16.gmra.mxu0 %v1783
        %v3458 = vpop.f32.mrf.mxu0
        %v3459 = vadd.f32 %v3370, %v3458
        %v3460 = vpop.f32.mrf.mxu0
        %v3461 = vadd.f32 %v3372, %v3460
        %3462 = vmatmul.bf16.gmra.mxu0 %v1791
        %v3463 = vpop.f32.mrf.mxu0
        %v3464 = vadd.f32 %v3375, %v3463
        %v3465 = vpop.f32.mrf.mxu0
        %v3466 = vadd.f32 %v3377, %v3465
        %3467 = vmatmul.bf16.gmra.mxu0 %v1799
        %v3468 = vpop.f32.mrf.mxu0
        %v3469 = vadd.f32 %v3380, %v3468
        %v3470 = vpop.f32.mrf.mxu0
        %v3471 = vadd.f32 %v3382, %v3470
        %3472 = vmatmul.bf16.gmra.mxu0 %v1807
        %v3473 = vpop.f32.mrf.mxu0
        %v3474 = vadd.f32 %v3385, %v3473
        %v3475 = vpop.f32.mrf.mxu0
        %v3476 = vadd.f32 %v3387, %v3475
        %3477 = vmatmul.bf16.gmra.mxu0 %v2071
        %v3478 = vpop.f32.mrf.mxu0
        %v3479 = vadd.f32 %v3390, %v3478
        %v3480 = vpop.f32.mrf.mxu0
        %v3481 = vadd.f32 %v3392, %v3480
        %3482 = vmatmul.bf16.gmra.mxu0 %v2079
        %v3483 = vpop.f32.mrf.mxu0
        %v3484 = vadd.f32 %v3395, %v3483
        %v3485 = vpop.f32.mrf.mxu0
        %v3486 = vadd.f32 %v3397, %v3485
        %3487 = vdwg.mxu0
        %3488 = vmatpush.bf16.msra.mxu0 %v2946
        %3489 = vmatpush.bf16.msra.mxu0 %v2945
        %3490 = vmatpush.bf16.msra.mxu0 %v2944
        %3491 = vmatpush.bf16.msra.mxu0 %v2943
        %3492 = vmatpush.bf16.msra.mxu0 %v2942
        %3493 = vmatpush.bf16.msra.mxu0 %v2941
        %3494 = vmatpush.bf16.msra.mxu0 %v2940
        %3495 = vmatpush.bf16.msra.mxu0 %v2939
        %3496 = vmatmul.bf16.gmra.mxu0 %v2167
        %v3497 = vpop.f32.mrf.mxu0
        %v3498 = vadd.f32 %v3409, %v3497
        %v3499 = vpop.f32.mrf.mxu0
        %v3500 = vadd.f32 %v3411, %v3499
        %3501 = vmatmul.bf16.gmra.mxu0 %v2169
        %v3502 = vpop.f32.mrf.mxu0
        %v3503 = vadd.f32 %v3414, %v3502
        %v3504 = vpop.f32.mrf.mxu0
        %v3505 = vadd.f32 %v3416, %v3504
        %3506 = vmatmul.bf16.gmra.mxu0 %v2171
        %v3507 = vpop.f32.mrf.mxu0
        %v3508 = vadd.f32 %v3419, %v3507
        %v3509 = vpop.f32.mrf.mxu0
        %v3510 = vadd.f32 %v3421, %v3509
        %3511 = vmatmul.bf16.gmra.mxu0 %v2173
        %v3512 = vpop.f32.mrf.mxu0
        %v3513 = vadd.f32 %v3424, %v3512
        %v3514 = vpop.f32.mrf.mxu0
        %v3515 = vadd.f32 %v3426, %v3514
        %3516 = vmatmul.bf16.gmra.mxu0 %v2175
        %v3517 = vpop.f32.mrf.mxu0
        %v3518 = vadd.f32 %v3429, %v3517
        %v3519 = vpop.f32.mrf.mxu0
        %v3520 = vadd.f32 %v3431, %v3519
        %3521 = vmatmul.bf16.gmra.mxu0 %v2177
        %v3522 = vpop.f32.mrf.mxu0
        %v3523 = vadd.f32 %v3434, %v3522
        %v3524 = vpop.f32.mrf.mxu0
        %v3525 = vadd.f32 %v3436, %v3524
        %3526 = vmatmul.bf16.gmra.mxu0 %v2179
        %v3527 = vpop.f32.mrf.mxu0
        %v3528 = vadd.f32 %v3439, %v3527
        %v3529 = vpop.f32.mrf.mxu0
        %v3530 = vadd.f32 %v3441, %v3529
        %3531 = vmatmul.bf16.gmra.mxu0 %v2181
        %v3532 = vpop.f32.mrf.mxu0
        %v3533 = vadd.f32 %v3444, %v3532
        %v3534 = vpop.f32.mrf.mxu0
        %v3535 = vadd.f32 %v3446, %v3534
        %3536 = vmatmul.bf16.gmra.mxu0 %v2183
        %v3537 = vpop.f32.mrf.mxu0
        %v3538 = vadd.f32 %v3449, %v3537
        %v3539 = vpop.f32.mrf.mxu0
        %v3540 = vadd.f32 %v3451, %v3539
        %3541 = vmatmul.bf16.gmra.mxu0 %v2185
        %v3542 = vpop.f32.mrf.mxu0
        %v3543 = vadd.f32 %v3454, %v3542
        %v3544 = vpop.f32.mrf.mxu0
        %v3545 = vadd.f32 %v3456, %v3544
        %3546 = vmatmul.bf16.gmra.mxu0 %v2187
        %v3547 = vpop.f32.mrf.mxu0
        %v3548 = vadd.f32 %v3459, %v3547
        %v3549 = vpop.f32.mrf.mxu0
        %v3550 = vadd.f32 %v3461, %v3549
        %3551 = vmatmul.bf16.gmra.mxu0 %v2189
        %v3552 = vpop.f32.mrf.mxu0
        %v3553 = vadd.f32 %v3464, %v3552
        %v3554 = vpop.f32.mrf.mxu0
        %v3555 = vadd.f32 %v3466, %v3554
        %3556 = vmatmul.bf16.gmra.mxu0 %v2191
        %v3557 = vpop.f32.mrf.mxu0
        %v3558 = vadd.f32 %v3469, %v3557
        %v3559 = vpop.f32.mrf.mxu0
        %v3560 = vadd.f32 %v3471, %v3559
        %3561 = vmatmul.bf16.gmra.mxu0 %v2193
        %v3562 = vpop.f32.mrf.mxu0
        %v3563 = vadd.f32 %v3474, %v3562
        %v3564 = vpop.f32.mrf.mxu0
        %v3565 = vadd.f32 %v3476, %v3564
        %3566 = vmatmul.bf16.gmra.mxu0 %v2195
        %v3567 = vpop.f32.mrf.mxu0
        %v3568 = vadd.f32 %v3479, %v3567
        %v3569 = vpop.f32.mrf.mxu0
        %v3570 = vadd.f32 %v3481, %v3569
        %3571 = vmatmul.bf16.gmra.mxu0 %v2197
        %v3572 = vpop.f32.mrf.mxu0
        %v3573 = vadd.f32 %v3484, %v3572
        %v3574 = vpop.f32.mrf.mxu0
        %v3575 = vadd.f32 %v3486, %v3574
        %3576 = vdwg.mxu0
        %3577 = vmatpush.bf16.msra.mxu0 %v2954
        %3578 = vmatpush.bf16.msra.mxu0 %v2953
        %3579 = vmatpush.bf16.msra.mxu0 %v2952
        %3580 = vmatpush.bf16.msra.mxu0 %v2951
        %3581 = vmatpush.bf16.msra.mxu0 %v2950
        %3582 = vmatpush.bf16.msra.mxu0 %v2949
        %3583 = vmatpush.bf16.msra.mxu0 %v2948
        %3584 = vmatpush.bf16.msra.mxu0 %v2947
        %3585 = vmatmul.bf16.gmra.mxu0 %v2278
        %v3586 = vpop.f32.mrf.mxu0
        %v3587 = vadd.f32 %v3498, %v3586
        %v3588 = vpop.f32.mrf.mxu0
        %v3589 = vadd.f32 %v3500, %v3588
        %3590 = vmatmul.bf16.gmra.mxu0 %v2279
        %v3591 = vpop.f32.mrf.mxu0
        %v3592 = vadd.f32 %v3503, %v3591
        %v3593 = vpop.f32.mrf.mxu0
        %v3594 = vadd.f32 %v3505, %v3593
        %3595 = vmatmul.bf16.gmra.mxu0 %v2280
        %v3596 = vpop.f32.mrf.mxu0
        %v3597 = vadd.f32 %v3508, %v3596
        %v3598 = vpop.f32.mrf.mxu0
        %v3599 = vadd.f32 %v3510, %v3598
        %3600 = vmatmul.bf16.gmra.mxu0 %v2281
        %v3601 = vpop.f32.mrf.mxu0
        %v3602 = vadd.f32 %v3513, %v3601
        %v3603 = vpop.f32.mrf.mxu0
        %v3604 = vadd.f32 %v3515, %v3603
        %3605 = vmatmul.bf16.gmra.mxu0 %v2282
        %v3606 = vpop.f32.mrf.mxu0
        %v3607 = vadd.f32 %v3518, %v3606
        %v3608 = vpop.f32.mrf.mxu0
        %v3609 = vadd.f32 %v3520, %v3608
        %3610 = vmatmul.bf16.gmra.mxu0 %v2283
        %v3611 = vpop.f32.mrf.mxu0
        %v3612 = vadd.f32 %v3523, %v3611
        %v3613 = vpop.f32.mrf.mxu0
        %v3614 = vadd.f32 %v3525, %v3613
        %3615 = vmatmul.bf16.gmra.mxu0 %v2284
        %v3616 = vpop.f32.mrf.mxu0
        %v3617 = vadd.f32 %v3528, %v3616
        %v3618 = vpop.f32.mrf.mxu0
        %v3619 = vadd.f32 %v3530, %v3618
        %3620 = vmatmul.bf16.gmra.mxu0 %v2285
        %v3621 = vpop.f32.mrf.mxu0
        %v3622 = vadd.f32 %v3533, %v3621
        %v3623 = vpop.f32.mrf.mxu0
        %v3624 = vadd.f32 %v3535, %v3623
        %3625 = vmatmul.bf16.gmra.mxu0 %v2286
        %v3626 = vpop.f32.mrf.mxu0
        %v3627 = vadd.f32 %v3538, %v3626
        %v3628 = vpop.f32.mrf.mxu0
        %v3629 = vadd.f32 %v3540, %v3628
        %3630 = vmatmul.bf16.gmra.mxu0 %v2287
        %v3631 = vpop.f32.mrf.mxu0
        %v3632 = vadd.f32 %v3543, %v3631
        %v3633 = vpop.f32.mrf.mxu0
        %v3634 = vadd.f32 %v3545, %v3633
        %3635 = vmatmul.bf16.gmra.mxu0 %v2288
        %v3636 = vpop.f32.mrf.mxu0
        %v3637 = vadd.f32 %v3548, %v3636
        %v3638 = vpop.f32.mrf.mxu0
        %v3639 = vadd.f32 %v3550, %v3638
        %3640 = vmatmul.bf16.gmra.mxu0 %v2289
        %v3641 = vpop.f32.mrf.mxu0
        %v3642 = vadd.f32 %v3553, %v3641
        %v3643 = vpop.f32.mrf.mxu0
        %v3644 = vadd.f32 %v3555, %v3643
        %3645 = vmatmul.bf16.gmra.mxu0 %v2290
        %v3646 = vpop.f32.mrf.mxu0
        %v3647 = vadd.f32 %v3558, %v3646
        %v3648 = vpop.f32.mrf.mxu0
        %v3649 = vadd.f32 %v3560, %v3648
        %3650 = vmatmul.bf16.gmra.mxu0 %v2291
        %v3651 = vpop.f32.mrf.mxu0
        %v3652 = vadd.f32 %v3563, %v3651
        %v3653 = vpop.f32.mrf.mxu0
        %v3654 = vadd.f32 %v3565, %v3653
        %3655 = vmatmul.bf16.gmra.mxu0 %v2292
        %v3656 = vpop.f32.mrf.mxu0
        %v3657 = vadd.f32 %v3568, %v3656
        %v3658 = vpop.f32.mrf.mxu0
        %v3659 = vadd.f32 %v3570, %v3658
        %3660 = vmatmul.bf16.gmra.mxu0 %v2293
        %v3661 = vpop.f32.mrf.mxu0
        %v3662 = vadd.f32 %v3573, %v3661
        %v3663 = vpop.f32.mrf.mxu0
        %v3664 = vadd.f32 %v3575, %v3663
        %3665 = vdwg.mxu0
        %3666 = vmatpush.bf16.msra.mxu0 %v2962
        %3667 = vmatpush.bf16.msra.mxu0 %v2961
        %3668 = vmatpush.bf16.msra.mxu0 %v2960
        %3669 = vmatpush.bf16.msra.mxu0 %v2959
        %3670 = vmatpush.bf16.msra.mxu0 %v2958
        %3671 = vmatpush.bf16.msra.mxu0 %v2957
        %3672 = vmatpush.bf16.msra.mxu0 %v2956
        %3673 = vmatpush.bf16.msra.mxu0 %v2955
        %3674 = vmatmul.bf16.gmra.mxu0 %v1711
        %v3675 = vpop.f32.mrf.mxu0
        %v3676 = vadd.f32 %v3587, %v3675
        %v3677 = vpop.f32.mrf.mxu0
        %v3678 = vadd.f32 %v3589, %v3677
        %3679 = vmatmul.bf16.gmra.mxu0 %v1719
        %v3680 = vpop.f32.mrf.mxu0
        %v3681 = vadd.f32 %v3592, %v3680
        %v3682 = vpop.f32.mrf.mxu0
        %v3683 = vadd.f32 %v3594, %v3682
        %3684 = vmatmul.bf16.gmra.mxu0 %v1727
        %v3685 = vpop.f32.mrf.mxu0
        %v3686 = vadd.f32 %v3597, %v3685
        %v3687 = vpop.f32.mrf.mxu0
        %v3688 = vadd.f32 %v3599, %v3687
        %3689 = vmatmul.bf16.gmra.mxu0 %v1735
        %v3690 = vpop.f32.mrf.mxu0
        %v3691 = vadd.f32 %v3602, %v3690
        %v3692 = vpop.f32.mrf.mxu0
        %v3693 = vadd.f32 %v3604, %v3692
        %3694 = vmatmul.bf16.gmra.mxu0 %v1743
        %v3695 = vpop.f32.mrf.mxu0
        %v3696 = vadd.f32 %v3607, %v3695
        %v3697 = vpop.f32.mrf.mxu0
        %v3698 = vadd.f32 %v3609, %v3697
        %3699 = vmatmul.bf16.gmra.mxu0 %v1751
        %v3700 = vpop.f32.mrf.mxu0
        %v3701 = vadd.f32 %v3612, %v3700
        %v3702 = vpop.f32.mrf.mxu0
        %v3703 = vadd.f32 %v3614, %v3702
        %3704 = vmatmul.bf16.gmra.mxu0 %v1759
        %v3705 = vpop.f32.mrf.mxu0
        %v3706 = vadd.f32 %v3617, %v3705
        %v3707 = vpop.f32.mrf.mxu0
        %v3708 = vadd.f32 %v3619, %v3707
        %3709 = vmatmul.bf16.gmra.mxu0 %v1767
        %v3710 = vpop.f32.mrf.mxu0
        %v3711 = vadd.f32 %v3622, %v3710
        %v3712 = vpop.f32.mrf.mxu0
        %v3713 = vadd.f32 %v3624, %v3712
        %3714 = vmatmul.bf16.gmra.mxu0 %v1775
        %v3715 = vpop.f32.mrf.mxu0
        %v3716 = vadd.f32 %v3627, %v3715
        %v3717 = vpop.f32.mrf.mxu0
        %v3718 = vadd.f32 %v3629, %v3717
        %3719 = vmatmul.bf16.gmra.mxu0 %v1783
        %v3720 = vpop.f32.mrf.mxu0
        %v3721 = vadd.f32 %v3632, %v3720
        %v3722 = vpop.f32.mrf.mxu0
        %v3723 = vadd.f32 %v3634, %v3722
        %3724 = vmatmul.bf16.gmra.mxu0 %v1791
        %v3725 = vpop.f32.mrf.mxu0
        %v3726 = vadd.f32 %v3637, %v3725
        %v3727 = vpop.f32.mrf.mxu0
        %v3728 = vadd.f32 %v3639, %v3727
        %3729 = vmatmul.bf16.gmra.mxu0 %v1799
        %v3730 = vpop.f32.mrf.mxu0
        %v3731 = vadd.f32 %v3642, %v3730
        %v3732 = vpop.f32.mrf.mxu0
        %v3733 = vadd.f32 %v3644, %v3732
        %3734 = vmatmul.bf16.gmra.mxu0 %v1807
        %v3735 = vpop.f32.mrf.mxu0
        %v3736 = vadd.f32 %v3647, %v3735
        %v3737 = vpop.f32.mrf.mxu0
        %v3738 = vadd.f32 %v3649, %v3737
        %3739 = vmatmul.bf16.gmra.mxu0 %v2071
        %v3740 = vpop.f32.mrf.mxu0
        %v3741 = vadd.f32 %v3652, %v3740
        %v3742 = vpop.f32.mrf.mxu0
        %v3743 = vadd.f32 %v3654, %v3742
        %3744 = vmatmul.bf16.gmra.mxu0 %v2320
        %v3745 = vpop.f32.mrf.mxu0
        %v3746 = vadd.f32 %v3657, %v3745
        %v3747 = vpop.f32.mrf.mxu0
        %v3748 = vadd.f32 %v3659, %v3747
        %3749 = vmatmul.bf16.gmra.mxu0 %v2328
        %v3750 = vpop.f32.mrf.mxu0
        %v3751 = vadd.f32 %v3662, %v3750
        %v3752 = vpop.f32.mrf.mxu0
        %v3753 = vadd.f32 %v3664, %v3752
        %3754 = vdwg.mxu0
        %3755 = vmatpush.bf16.msra.mxu0 %v2970
        %3756 = vmatpush.bf16.msra.mxu0 %v2969
        %3757 = vmatpush.bf16.msra.mxu0 %v2968
        %3758 = vmatpush.bf16.msra.mxu0 %v2967
        %3759 = vmatpush.bf16.msra.mxu0 %v2966
        %3760 = vmatpush.bf16.msra.mxu0 %v2965
        %3761 = vmatpush.bf16.msra.mxu0 %v2964
        %3762 = vmatpush.bf16.msra.mxu0 %v2963
        %3763 = vmatmul.bf16.gmra.mxu0 %v2416
        %v3764 = vpop.f32.mrf.mxu0
        %v3765 = vadd.f32 %v3676, %v3764
        %v3766 = vpop.f32.mrf.mxu0
        %v3767 = vadd.f32 %v3678, %v3766
        %3768 = vmatmul.bf16.gmra.mxu0 %v2418
        %v3769 = vpop.f32.mrf.mxu0
        %v3770 = vadd.f32 %v3681, %v3769
        %v3771 = vpop.f32.mrf.mxu0
        %v3772 = vadd.f32 %v3683, %v3771
        %3773 = vmatmul.bf16.gmra.mxu0 %v2420
        %v3774 = vpop.f32.mrf.mxu0
        %v3775 = vadd.f32 %v3686, %v3774
        %v3776 = vpop.f32.mrf.mxu0
        %v3777 = vadd.f32 %v3688, %v3776
        %3778 = vmatmul.bf16.gmra.mxu0 %v2422
        %v3779 = vpop.f32.mrf.mxu0
        %v3780 = vadd.f32 %v3691, %v3779
        %v3781 = vpop.f32.mrf.mxu0
        %v3782 = vadd.f32 %v3693, %v3781
        %3783 = vmatmul.bf16.gmra.mxu0 %v2424
        %v3784 = vpop.f32.mrf.mxu0
        %v3785 = vadd.f32 %v3696, %v3784
        %v3786 = vpop.f32.mrf.mxu0
        %v3787 = vadd.f32 %v3698, %v3786
        %3788 = vmatmul.bf16.gmra.mxu0 %v2426
        %v3789 = vpop.f32.mrf.mxu0
        %v3790 = vadd.f32 %v3701, %v3789
        %v3791 = vpop.f32.mrf.mxu0
        %v3792 = vadd.f32 %v3703, %v3791
        %3793 = vmatmul.bf16.gmra.mxu0 %v2428
        %v3794 = vpop.f32.mrf.mxu0
        %v3795 = vadd.f32 %v3706, %v3794
        %v3796 = vpop.f32.mrf.mxu0
        %v3797 = vadd.f32 %v3708, %v3796
        %3798 = vmatmul.bf16.gmra.mxu0 %v2430
        %v3799 = vpop.f32.mrf.mxu0
        %v3800 = vadd.f32 %v3711, %v3799
        %v3801 = vpop.f32.mrf.mxu0
        %v3802 = vadd.f32 %v3713, %v3801
        %3803 = vmatmul.bf16.gmra.mxu0 %v2432
        %v3804 = vpop.f32.mrf.mxu0
        %v3805 = vadd.f32 %v3716, %v3804
        %v3806 = vpop.f32.mrf.mxu0
        %v3807 = vadd.f32 %v3718, %v3806
        %3808 = vmatmul.bf16.gmra.mxu0 %v2434
        %v3809 = vpop.f32.mrf.mxu0
        %v3810 = vadd.f32 %v3721, %v3809
        %v3811 = vpop.f32.mrf.mxu0
        %v3812 = vadd.f32 %v3723, %v3811
        %3813 = vmatmul.bf16.gmra.mxu0 %v2436
        %v3814 = vpop.f32.mrf.mxu0
        %v3815 = vadd.f32 %v3726, %v3814
        %v3816 = vpop.f32.mrf.mxu0
        %v3817 = vadd.f32 %v3728, %v3816
        %3818 = vmatmul.bf16.gmra.mxu0 %v2438
        %v3819 = vpop.f32.mrf.mxu0
        %v3820 = vadd.f32 %v3731, %v3819
        %v3821 = vpop.f32.mrf.mxu0
        %v3822 = vadd.f32 %v3733, %v3821
        %3823 = vmatmul.bf16.gmra.mxu0 %v2440
        %v3824 = vpop.f32.mrf.mxu0
        %v3825 = vadd.f32 %v3736, %v3824
        %v3826 = vpop.f32.mrf.mxu0
        %v3827 = vadd.f32 %v3738, %v3826
        %3828 = vmatmul.bf16.gmra.mxu0 %v2442
        %v3829 = vpop.f32.mrf.mxu0
        %v3830 = vadd.f32 %v3741, %v3829
        %v3831 = vpop.f32.mrf.mxu0
        %v3832 = vadd.f32 %v3743, %v3831
        %3833 = vmatmul.bf16.gmra.mxu0 %v2444
        %v3834 = vpop.f32.mrf.mxu0
        %v3835 = vadd.f32 %v3746, %v3834
        %v3836 = vpop.f32.mrf.mxu0
        %v3837 = vadd.f32 %v3748, %v3836
        %3838 = vmatmul.bf16.gmra.mxu0 %v2446
        %v3839 = vpop.f32.mrf.mxu0
        %v3840 = vadd.f32 %v3751, %v3839
        %v3841 = vpop.f32.mrf.mxu0
        %v3842 = vadd.f32 %v3753, %v3841
        %3843 = vdwg.mxu0
        %3844 = vst [vmem:[%s187] sm:$0xff] %v3765
        %3845 = vst [vmem:[%s187 + $0x8] sm:$0xff] %v3767
        %3846 = vst [vmem:[%s187 + $0x10] sm:$0xff] %v3770
        %3847 = vst [vmem:[%s187 + $0x18] sm:$0xff] %v3772
        %3848 = vst [vmem:[%s187 + $0x20] sm:$0xff] %v3775
        %3849 = vst [vmem:[%s187 + $0x28] sm:$0xff] %v3777
        %3850 = vst [vmem:[%s187 + $0x30] sm:$0xff] %v3780
        %3851 = vst [vmem:[%s187 + $0x38] sm:$0xff] %v3782
        %3852 = vst [vmem:[%s187 + $0x40] sm:$0xff] %v3785
        %3853 = vst [vmem:[%s187 + $0x48] sm:$0xff] %v3787
        %3854 = vst [vmem:[%s187 + $0x50] sm:$0xff] %v3790
        %3855 = vst [vmem:[%s187 + $0x58] sm:$0xff] %v3792
        %3856 = vst [vmem:[%s187 + $0x60] sm:$0xff] %v3795
        %3857 = vst [vmem:[%s187 + $0x68] sm:$0xff] %v3797
        %3858 = vst [vmem:[%s187 + $0x70] sm:$0xff] %v3800
        %3859 = vst [vmem:[%s187 + $0x78] sm:$0xff] %v3802
        %3860 = vst [vmem:[%s187 + $0x80] sm:$0xff] %v3805
        %3861 = vst [vmem:[%s187 + $0x88] sm:$0xff] %v3807
        %3862 = vst [vmem:[%s187 + $0x90] sm:$0xff] %v3810
        %3863 = vst [vmem:[%s187 + $0x98] sm:$0xff] %v3812
        %3864 = vst [vmem:[%s187 + $0xa0] sm:$0xff] %v3815
        %3865 = vst [vmem:[%s187 + $0xa8] sm:$0xff] %v3817
        %3866 = vst [vmem:[%s187 + $0xb0] sm:$0xff] %v3820
        %3867 = vst [vmem:[%s187 + $0xb8] sm:$0xff] %v3822
        %3868 = vst [vmem:[%s187 + $0xc0] sm:$0xff] %v3825
        %3869 = vst [vmem:[%s187 + $0xc8] sm:$0xff] %v3827
        %3870 = vst [vmem:[%s187 + $0xd0] sm:$0xff] %v3830
        %3871 = vst [vmem:[%s187 + $0xd8] sm:$0xff] %v3832
        %3872 = vst [vmem:[%s187 + $0xe0] sm:$0xff] %v3835
        %3873 = vst [vmem:[%s187 + $0xe8] sm:$0xff] %v3837
        %3874 = vst [vmem:[%s187 + $0xf0] sm:$0xff] %v3840
        %3875 = vst [vmem:[%s187 + $0xf8] sm:$0xff] %v3842
        %s3876 = sand.u32 %s109, 1
        %s3877 = scalar_lea.sflag [#allocation3], %s3876
        %s3878 = sand.u32 %s109, 1
        %s3879 = smul.addr %s3878, 256
        %s3880 = scalar_lea.vmem [#allocation2], %s3879
        // Predicated region
        $region33: #{conv3x3_plain.1} parent=31 // pred_check
          %p3881 = pneg %p119
        $region34: #{conv3x3_plain.1} parent=31 // pred_check_branch
          %3883 = sbr.rel (%p3881) target = $region36
        $region35: #{conv3x3_plain.1} parent=31 // pred_region
          %s3884 = smul.u32 32, %s22
          %3886 = vsyncadd %s3877, 0
          %s3887 = smul.addr %s21, 32
          %s3888 = sadd.s32 %s3884, %s3887
          %s3889 = smul.addr %s3888, 8
          %s3890 = scalar_lea.hbm %s3, %s3889
          %s3891 = sshll.u32 %s3880, 4
          %s3892 = int_to_ptr.vmem [resolvable:$true] %s3891
          %s3893 = sshll.u32 %s3890, 4
          %s3894 = int_to_ptr.hbm [resolvable:$true] %s3893
          %3899 = dma.vmem_to_hbm [thread:$0]  %s3892, 4096, %s3894, %s3877, 128, 128, 8
        $region36: #{conv3x3_plain.1} parent=31 // pred_fallthru
          _
      $region32: #{conv3x3_plain.1} parent=5 // pred_fallthru
        _
      %p3900 = scmp.le.s32.totalorder 2, %s12
      // Predicated region
      $region37: #{conv3x3_plain.1} parent=5 // pred_check
        %p3901 = pneg %p3900
      $region38: #{conv3x3_plain.1} parent=5 // pred_check_branch
        %3903 = sbr.rel (%p3901) target = $region40
      $region39: #{conv3x3_plain.1} parent=5 // pred_region
        %s3904 = ssub.s32 %s12, 2
        // Predicated region
        $region41: #{conv3x3_plain.1} parent=39 // pred_check
          %p3905 = pneg %p125
        $region42: #{conv3x3_plain.1} parent=39 // pred_check_branch
          %3907 = sbr.rel (%p3905) target = $region44
        $region43: #{conv3x3_plain.1} parent=39 // pred_region
          %s3908 = sand.u32 %s110, 1
          %s3909 = scalar_lea.sflag [#allocation3], %s3908
          %s3910 = sand.u32 %s110, 1
          %s3911 = smul.addr %s3910, 256
          %s3912 = scalar_lea.vmem [#allocation2], %s3911
          %3914 = dma.done %s3909, 4096
        $region44: #{conv3x3_plain.1} parent=39 // pred_fallthru
          _
      $region40: #{conv3x3_plain.1} parent=5 // pred_fallthru
        _
    $region6: #{conv3x3_plain.1} parent=1 // loop_footer
      %s16 = sadd.s32 1, %s12
    $region7: #{conv3x3_plain.1} parent=1 // loop_footer_branch
      %11 = sbr.rel target = $region3
    $region8: #{conv3x3_plain.1} parent=1 // loop_exit
      _
    %3915 = vsyncpa [#allocation3], 1
    %s3916 = scalar_lea.sflag [#allocation3], 1
    %3917 = vsyncpa %s3916, 1

</llo_original>
